<compile_context>
chip_gen: v7x
topology: tpu7x:2x2x1
jax: 0.10.0
libtpu: 0.0.40
codegen_flags: <defaults>
</compile_context>

<pallas_src>
import math
import functools

import jax
import jax.numpy as jnp
from jax.experimental import pallas as pl
from jax.experimental.pallas import tpu as pltpu

D_MODEL = 9
SEG = 16  # sublane-aligned segment size for q/k/v rows (multiple of 8, >= D_MODEL)


def _attn_kernel(x_ref, w_ref, b_ref, o_ref):
    # x_ref: (S, D, TB)       batch on lanes
    # w_ref: (3*SEG, D)       rows [0:D]=W_Q/sqrt(D), [SEG:SEG+D]=W_K, [2SEG:2SEG+D]=W_V, rest 0
    # b_ref: (3*SEG, 1)       matching packed biases (pad rows are 0)
    # o_ref: (S, D, TB)       lane-dense output block
    S, _, _ = x_ref.shape
    D = o_ref.shape[1]
    seg = w_ref.shape[0] // 3

    w = w_ref[...].astype(jnp.float32)          # (3*SEG, D)
    b = b_ref[...].astype(jnp.float32)          # (3*SEG, 1) -> lane-broadcast

    # Fused projection per sequence position: (3*SEG, D) @ (D, TB) on the MXU.
    # Features land on sublanes, batch stays on lanes; segments are 16-row
    # aligned so the q/k/v splits are plain sublane-tile slices.
    q, k, v = [], [], []
    for s in range(S):
        x_s = x_ref[s].astype(jnp.float32)      # (D, TB)
        qkv_s = jnp.dot(w, x_s, preferred_element_type=jnp.float32) + b
        q.append(qkv_s[0 * seg:1 * seg])        # (SEG, TB), rows D..SEG-1 are exactly 0
        k.append(qkv_s[1 * seg:2 * seg])
        v.append(qkv_s[2 * seg:3 * seg])

    # Attention: scores/softmax/PV as broadcast-multiply + sublane reductions.
    for sq in range(S):
        # score rows: (1, TB) per key position (scale already folded into W_Q).
        srow = [jnp.sum(q[sq] * k[sk], axis=0, keepdims=True) for sk in range(S)]

        m = srow[0]
        for sk in range(1, S):
            m = jnp.maximum(m, srow[sk])
        ex = [jnp.exp(r - m) for r in srow]
        den = ex[0]
        for sk in range(1, S):
            den = den + ex[sk]
        inv = pl.reciprocal(den, approx=True)   # EUP
        inv = inv * (2.0 - den * inv)           # one Newton step -> ~f32 accuracy

        # probs @ V: broadcast each (1, TB) prob over the feature sublanes of V.
        acc = (ex[0] * inv) * v[0]
        for sk in range(1, S):
            acc = acc + (ex[sk] * inv) * v[sk]  # (SEG, TB)

        o_ref[sq] = acc[0:D].astype(o_ref.dtype)   # drop zero-pad feature rows


@functools.partial(jax.jit, static_argnames=("block_b",))
def magic_forward(x, wq, bq, wk, bk, wv, bv, *, block_b=512):
    """x: (B, S, 9) float32; weights in torch layout (out, in) = (9, 9); biases (9,)."""
    B, S, D = x.shape
    assert D == D_MODEL
    scale = 1.0 / math.sqrt(D)

    # Host-side packing (tiny, done once): fuse Q/K/V weights into sublane-
    # aligned 16-row segments, fold the 1/sqrt(D) score scale into W_Q/b_Q.
    w_pack = jnp.zeros((3 * SEG, D), jnp.float32)
    w_pack = w_pack.at[0:D, :].set(wq.astype(jnp.float32) * scale)
    w_pack = w_pack.at[SEG:SEG + D, :].set(wk.astype(jnp.float32))
    w_pack = w_pack.at[2 * SEG:2 * SEG + D, :].set(wv.astype(jnp.float32))
    b_pack = jnp.zeros((3 * SEG, 1), jnp.float32)
    b_pack = b_pack.at[0:D, 0].set(bq.astype(jnp.float32) * scale)
    b_pack = b_pack.at[SEG:SEG + D, 0].set(bk.astype(jnp.float32))
    b_pack = b_pack.at[2 * SEG:2 * SEG + D, 0].set(bv.astype(jnp.float32))

    # Batch-on-lanes layout for the kernel (layout plumbing, not compute).
    x_t = jnp.transpose(x, (1, 2, 0))           # (S, D, B)

    TB = min(B, block_b)
    nb = -(-B // TB)                            # cdiv
    Bp = nb * TB
    if Bp != B:
        x_t = jnp.pad(x_t, ((0, 0), (0, 0), (0, Bp - B)))

    out_t = pl.pallas_call(
        _attn_kernel,
        out_shape=jax.ShapeDtypeStruct((S, D, Bp), x.dtype),
        grid_spec=pltpu.PrefetchScalarGridSpec(
            num_scalar_prefetch=0,
            grid=(nb,),
            in_specs=[
                pl.BlockSpec((S, D, TB), lambda i: (0, 0, i)),      # x (batch on lanes)
                pl.BlockSpec((3 * SEG, D), lambda i: (0, 0)),       # fused padded weights
                pl.BlockSpec((3 * SEG, 1), lambda i: (0, 0)),       # fused padded biases
            ],
            out_specs=pl.BlockSpec((S, D, TB), lambda i: (0, 0, i)),
        ),
        compiler_params=pltpu.CompilerParams(
            dimension_semantics=("parallel",),
            vmem_limit_bytes=32 * 1024 * 1024,
        ),
    )(x_t, w_pack, b_pack)

    return jnp.transpose(out_t[:, :, :B], (2, 0, 1))   # back to (B, S, D)


def _init_linear_params(key, out_features, in_features):
    # Deterministic init mimicking torch.nn.Linear default (uniform +/- 1/sqrt(fan_in)).
    kw, kb = jax.random.split(key)
    bound = 1.0 / math.sqrt(in_features)
    w = jax.random.uniform(kw, (out_features, in_features), jnp.float32,
                           minval=-bound, maxval=bound)
    b = jax.random.uniform(kb, (out_features,), jnp.float32,
                           minval=-bound, maxval=bound)
    return w, b


def _reference_forward(x, wq, bq, wk, bk, wv, bv):
    # Pure-JAX reference matching the PyTorch module exactly.
    q = jnp.einsum("bsd,ed->bse", x, wq) + bq
    k = jnp.einsum("bsd,ed->bse", x, wk) + bk
    v = jnp.einsum("bsd,ed->bse", x, wv) + bv
    scores = jnp.einsum("bqd,bkd->bqk", q, k) / math.sqrt(D_MODEL)
    probs = jax.nn.softmax(scores, axis=-1)
    return jnp.einsum("bqk,bkd->bqd", probs, v)


if __name__ == "__main__":
    key = jax.random.PRNGKey(0)
    kx, kx2, kq, kk, kv = jax.random.split(key, 5)

    B, S, D = 2, 8, D_MODEL
    x = jax.random.normal(kx, (B, S, D), dtype=jnp.float32)

    wq, bq = _init_linear_params(kq, D, D)
    wk, bk = _init_linear_params(kk, D, D)
    wv, bv = _init_linear_params(kv, D, D)

    # Small-shape check (module demo size).
    out = jax.block_until_ready(magic_forward(x, wq, bq, wk, bk, wv, bv))
    ref = _reference_forward(x, wq, bq, wk, bk, wv, bv)
    assert out.shape == (B, S, D)
    max_err = float(jnp.max(jnp.abs(out - ref)))
    assert max_err < 1e-3, f"mismatch vs reference, max abs err = {max_err}"

    # Lane-dense / multi-block / padded-batch path (TB=128, 2 grid blocks).
    B2 = 200
    x2 = jax.random.normal(kx2, (B2, S, D), dtype=jnp.float32)
    out2 = jax.block_until_ready(
        magic_forward(x2, wq, bq, wk, bk, wv, bv, block_b=128))
    ref2 = _reference_forward(x2, wq, bq, wk, bk, wv, bv)
    max_err2 = float(jnp.max(jnp.abs(out2 - ref2)))
    assert max_err2 < 1e-3, f"mismatch vs reference (B=200), max abs err = {max_err2}"

    print("KERNEL_OK")
</pallas_src>

<mosaic_0001>
module attributes {stable_mosaic.version = 11 : i64} {
  func.func @_attn_kernel(%arg0: i32, %arg1: memref<8x9x2xf32, #tpu.memory_space<vmem>>, %arg2: memref<48x9xf32, #tpu.memory_space<vmem>>, %arg3: memref<48x1xf32, #tpu.memory_space<vmem>>, %arg4: memref<8x9x2xf32, #tpu.memory_space<vmem>>) attributes {dimension_semantics = [#tpu.dimension_semantics<parallel>], iteration_bounds = array<i64: 1>, scalar_prefetch = 0 : i64, scratch_operands = 0 : i64, tpu.core_type = #tpu.core_type<tc>, window_params = [{transform_indices = @transform_0, window_bounds = array<i64: 8, 9, 2>}, {pipeline_mode = #tpu.pipeline_mode<synchronous>, transform_indices = @transform_1, window_bounds = array<i64: 48, 9>}, {pipeline_mode = #tpu.pipeline_mode<synchronous>, transform_indices = @transform_2, window_bounds = array<i64: 48, 1>}, {transform_indices = @transform_3, window_bounds = array<i64: 8, 9, 2>}]} {
    %c0 = arith.constant 0 : index
    %c0_0 = arith.constant 0 : index
    %0 = vector.load %arg2[%c0, %c0_0] : memref<48x9xf32, #tpu.memory_space<vmem>>, vector<48x9xf32>
    %c0_1 = arith.constant 0 : index
    %c0_2 = arith.constant 0 : index
    %1 = vector.load %arg3[%c0_1, %c0_2] : memref<48x1xf32, #tpu.memory_space<vmem>>, vector<48x1xf32>
    %c0_3 = arith.constant 0 : index
    %c0_4 = arith.constant 0 : index
    %c0_5 = arith.constant 0 : index
    %2 = vector.load %arg1[%c0_3, %c0_4, %c0_5] : memref<8x9x2xf32, #tpu.memory_space<vmem>>, vector<1x9x2xf32>
    %3 = vector.shape_cast %2 : vector<1x9x2xf32> to vector<9x2xf32>
    %cst = arith.constant dense<0.000000e+00> : vector<48x2xf32>
    %4 = tpu.matmul %0, %3, %cst {dimension_numbers = #tpu.dot_dimension_numbers<[1], [0], [0], [1], [0, 0, 1, 1], [], []>} : vector<48x9xf32>, vector<9x2xf32>, vector<48x2xf32> -> vector<48x2xf32>
    %5 = vector.broadcast %1 : vector<48x1xf32> to vector<48x2xf32>
    %6 = arith.addf %4, %5 : vector<48x2xf32>
    %7 = vector.extract_strided_slice %6 {offsets = [0, 0], sizes = [16, 2], strides = [1, 1]} : vector<48x2xf32> to vector<16x2xf32>
    %8 = vector.extract_strided_slice %6 {offsets = [16, 0], sizes = [16, 2], strides = [1, 1]} : vector<48x2xf32> to vector<16x2xf32>
    %9 = vector.extract_strided_slice %6 {offsets = [32, 0], sizes = [16, 2], strides = [1, 1]} : vector<48x2xf32> to vector<16x2xf32>
    %c1 = arith.constant 1 : index
    %c0_6 = arith.constant 0 : index
    %c0_7 = arith.constant 0 : index
    %10 = vector.load %arg1[%c1, %c0_6, %c0_7] : memref<8x9x2xf32, #tpu.memory_space<vmem>>, vector<1x9x2xf32>
    %11 = vector.shape_cast %10 : vector<1x9x2xf32> to vector<9x2xf32>
    %cst_8 = arith.constant dense<0.000000e+00> : vector<48x2xf32>
    %12 = tpu.matmul %0, %11, %cst_8 {dimension_numbers = #tpu.dot_dimension_numbers<[1], [0], [0], [1], [0, 0, 1, 1], [], []>} : vector<48x9xf32>, vector<9x2xf32>, vector<48x2xf32> -> vector<48x2xf32>
    %13 = vector.broadcast %1 : vector<48x1xf32> to vector<48x2xf32>
    %14 = arith.addf %12, %13 : vector<48x2xf32>
    %15 = vector.extract_strided_slice %14 {offsets = [0, 0], sizes = [16, 2], strides = [1, 1]} : vector<48x2xf32> to vector<16x2xf32>
    %16 = vector.extract_strided_slice %14 {offsets = [16, 0], sizes = [16, 2], strides = [1, 1]} : vector<48x2xf32> to vector<16x2xf32>
    %17 = vector.extract_strided_slice %14 {offsets = [32, 0], sizes = [16, 2], strides = [1, 1]} : vector<48x2xf32> to vector<16x2xf32>
    %c2 = arith.constant 2 : index
    %c0_9 = arith.constant 0 : index
    %c0_10 = arith.constant 0 : index
    %18 = vector.load %arg1[%c2, %c0_9, %c0_10] : memref<8x9x2xf32, #tpu.memory_space<vmem>>, vector<1x9x2xf32>
    %19 = vector.shape_cast %18 : vector<1x9x2xf32> to vector<9x2xf32>
    %cst_11 = arith.constant dense<0.000000e+00> : vector<48x2xf32>
    %20 = tpu.matmul %0, %19, %cst_11 {dimension_numbers = #tpu.dot_dimension_numbers<[1], [0], [0], [1], [0, 0, 1, 1], [], []>} : vector<48x9xf32>, vector<9x2xf32>, vector<48x2xf32> -> vector<48x2xf32>
    %21 = vector.broadcast %1 : vector<48x1xf32> to vector<48x2xf32>
    %22 = arith.addf %20, %21 : vector<48x2xf32>
    %23 = vector.extract_strided_slice %22 {offsets = [0, 0], sizes = [16, 2], strides = [1, 1]} : vector<48x2xf32> to vector<16x2xf32>
    %24 = vector.extract_strided_slice %22 {offsets = [16, 0], sizes = [16, 2], strides = [1, 1]} : vector<48x2xf32> to vector<16x2xf32>
    %25 = vector.extract_strided_slice %22 {offsets = [32, 0], sizes = [16, 2], strides = [1, 1]} : vector<48x2xf32> to vector<16x2xf32>
    %c3 = arith.constant 3 : index
    %c0_12 = arith.constant 0 : index
    %c0_13 = arith.constant 0 : index
    %26 = vector.load %arg1[%c3, %c0_12, %c0_13] : memref<8x9x2xf32, #tpu.memory_space<vmem>>, vector<1x9x2xf32>
    %27 = vector.shape_cast %26 : vector<1x9x2xf32> to vector<9x2xf32>
    %cst_14 = arith.constant dense<0.000000e+00> : vector<48x2xf32>
    %28 = tpu.matmul %0, %27, %cst_14 {dimension_numbers = #tpu.dot_dimension_numbers<[1], [0], [0], [1], [0, 0, 1, 1], [], []>} : vector<48x9xf32>, vector<9x2xf32>, vector<48x2xf32> -> vector<48x2xf32>
    %29 = vector.broadcast %1 : vector<48x1xf32> to vector<48x2xf32>
    %30 = arith.addf %28, %29 : vector<48x2xf32>
    %31 = vector.extract_strided_slice %30 {offsets = [0, 0], sizes = [16, 2], strides = [1, 1]} : vector<48x2xf32> to vector<16x2xf32>
    %32 = vector.extract_strided_slice %30 {offsets = [16, 0], sizes = [16, 2], strides = [1, 1]} : vector<48x2xf32> to vector<16x2xf32>
    %33 = vector.extract_strided_slice %30 {offsets = [32, 0], sizes = [16, 2], strides = [1, 1]} : vector<48x2xf32> to vector<16x2xf32>
    %c4 = arith.constant 4 : index
    %c0_15 = arith.constant 0 : index
    %c0_16 = arith.constant 0 : index
    %34 = vector.load %arg1[%c4, %c0_15, %c0_16] : memref<8x9x2xf32, #tpu.memory_space<vmem>>, vector<1x9x2xf32>
    %35 = vector.shape_cast %34 : vector<1x9x2xf32> to vector<9x2xf32>
    %cst_17 = arith.constant dense<0.000000e+00> : vector<48x2xf32>
    %36 = tpu.matmul %0, %35, %cst_17 {dimension_numbers = #tpu.dot_dimension_numbers<[1], [0], [0], [1], [0, 0, 1, 1], [], []>} : vector<48x9xf32>, vector<9x2xf32>, vector<48x2xf32> -> vector<48x2xf32>
    %37 = vector.broadcast %1 : vector<48x1xf32> to vector<48x2xf32>
    %38 = arith.addf %36, %37 : vector<48x2xf32>
    %39 = vector.extract_strided_slice %38 {offsets = [0, 0], sizes = [16, 2], strides = [1, 1]} : vector<48x2xf32> to vector<16x2xf32>
    %40 = vector.extract_strided_slice %38 {offsets = [16, 0], sizes = [16, 2], strides = [1, 1]} : vector<48x2xf32> to vector<16x2xf32>
    %41 = vector.extract_strided_slice %38 {offsets = [32, 0], sizes = [16, 2], strides = [1, 1]} : vector<48x2xf32> to vector<16x2xf32>
    %c5 = arith.constant 5 : index
    %c0_18 = arith.constant 0 : index
    %c0_19 = arith.constant 0 : index
    %42 = vector.load %arg1[%c5, %c0_18, %c0_19] : memref<8x9x2xf32, #tpu.memory_space<vmem>>, vector<1x9x2xf32>
    %43 = vector.shape_cast %42 : vector<1x9x2xf32> to vector<9x2xf32>
    %cst_20 = arith.constant dense<0.000000e+00> : vector<48x2xf32>
    %44 = tpu.matmul %0, %43, %cst_20 {dimension_numbers = #tpu.dot_dimension_numbers<[1], [0], [0], [1], [0, 0, 1, 1], [], []>} : vector<48x9xf32>, vector<9x2xf32>, vector<48x2xf32> -> vector<48x2xf32>
    %45 = vector.broadcast %1 : vector<48x1xf32> to vector<48x2xf32>
    %46 = arith.addf %44, %45 : vector<48x2xf32>
    %47 = vector.extract_strided_slice %46 {offsets = [0, 0], sizes = [16, 2], strides = [1, 1]} : vector<48x2xf32> to vector<16x2xf32>
    %48 = vector.extract_strided_slice %46 {offsets = [16, 0], sizes = [16, 2], strides = [1, 1]} : vector<48x2xf32> to vector<16x2xf32>
    %49 = vector.extract_strided_slice %46 {offsets = [32, 0], sizes = [16, 2], strides = [1, 1]} : vector<48x2xf32> to vector<16x2xf32>
    %c6 = arith.constant 6 : index
    %c0_21 = arith.constant 0 : index
    %c0_22 = arith.constant 0 : index
    %50 = vector.load %arg1[%c6, %c0_21, %c0_22] : memref<8x9x2xf32, #tpu.memory_space<vmem>>, vector<1x9x2xf32>
    %51 = vector.shape_cast %50 : vector<1x9x2xf32> to vector<9x2xf32>
    %cst_23 = arith.constant dense<0.000000e+00> : vector<48x2xf32>
    %52 = tpu.matmul %0, %51, %cst_23 {dimension_numbers = #tpu.dot_dimension_numbers<[1], [0], [0], [1], [0, 0, 1, 1], [], []>} : vector<48x9xf32>, vector<9x2xf32>, vector<48x2xf32> -> vector<48x2xf32>
    %53 = vector.broadcast %1 : vector<48x1xf32> to vector<48x2xf32>
    %54 = arith.addf %52, %53 : vector<48x2xf32>
    %55 = vector.extract_strided_slice %54 {offsets = [0, 0], sizes = [16, 2], strides = [1, 1]} : vector<48x2xf32> to vector<16x2xf32>
    %56 = vector.extract_strided_slice %54 {offsets = [16, 0], sizes = [16, 2], strides = [1, 1]} : vector<48x2xf32> to vector<16x2xf32>
    %57 = vector.extract_strided_slice %54 {offsets = [32, 0], sizes = [16, 2], strides = [1, 1]} : vector<48x2xf32> to vector<16x2xf32>
    %c7 = arith.constant 7 : index
    %c0_24 = arith.constant 0 : index
    %c0_25 = arith.constant 0 : index
    %58 = vector.load %arg1[%c7, %c0_24, %c0_25] : memref<8x9x2xf32, #tpu.memory_space<vmem>>, vector<1x9x2xf32>
    %59 = vector.shape_cast %58 : vector<1x9x2xf32> to vector<9x2xf32>
    %cst_26 = arith.constant dense<0.000000e+00> : vector<48x2xf32>
    %60 = tpu.matmul %0, %59, %cst_26 {dimension_numbers = #tpu.dot_dimension_numbers<[1], [0], [0], [1], [0, 0, 1, 1], [], []>} : vector<48x9xf32>, vector<9x2xf32>, vector<48x2xf32> -> vector<48x2xf32>
    %61 = vector.broadcast %1 : vector<48x1xf32> to vector<48x2xf32>
    %62 = arith.addf %60, %61 : vector<48x2xf32>
    %63 = vector.extract_strided_slice %62 {offsets = [0, 0], sizes = [16, 2], strides = [1, 1]} : vector<48x2xf32> to vector<16x2xf32>
    %64 = vector.extract_strided_slice %62 {offsets = [16, 0], sizes = [16, 2], strides = [1, 1]} : vector<48x2xf32> to vector<16x2xf32>
    %65 = vector.extract_strided_slice %62 {offsets = [32, 0], sizes = [16, 2], strides = [1, 1]} : vector<48x2xf32> to vector<16x2xf32>
    %66 = arith.mulf %7, %8 : vector<16x2xf32>
    %cst_27 = arith.constant dense<0.000000e+00> : vector<2xf32>
    %67 = vector.multi_reduction <add>, %66, %cst_27 [0] : vector<16x2xf32> to vector<2xf32>
    %68 = vector.shape_cast %67 : vector<2xf32> to vector<1x2xf32>
    %69 = arith.mulf %7, %16 : vector<16x2xf32>
    %cst_28 = arith.constant dense<0.000000e+00> : vector<2xf32>
    %70 = vector.multi_reduction <add>, %69, %cst_28 [0] : vector<16x2xf32> to vector<2xf32>
    %71 = vector.shape_cast %70 : vector<2xf32> to vector<1x2xf32>
    %72 = arith.mulf %7, %24 : vector<16x2xf32>
    %cst_29 = arith.constant dense<0.000000e+00> : vector<2xf32>
    %73 = vector.multi_reduction <add>, %72, %cst_29 [0] : vector<16x2xf32> to vector<2xf32>
    %74 = vector.shape_cast %73 : vector<2xf32> to vector<1x2xf32>
    %75 = arith.mulf %7, %32 : vector<16x2xf32>
    %cst_30 = arith.constant dense<0.000000e+00> : vector<2xf32>
    %76 = vector.multi_reduction <add>, %75, %cst_30 [0] : vector<16x2xf32> to vector<2xf32>
    %77 = vector.shape_cast %76 : vector<2xf32> to vector<1x2xf32>
    %78 = arith.mulf %7, %40 : vector<16x2xf32>
    %cst_31 = arith.constant dense<0.000000e+00> : vector<2xf32>
    %79 = vector.multi_reduction <add>, %78, %cst_31 [0] : vector<16x2xf32> to vector<2xf32>
    %80 = vector.shape_cast %79 : vector<2xf32> to vector<1x2xf32>
    %81 = arith.mulf %7, %48 : vector<16x2xf32>
    %cst_32 = arith.constant dense<0.000000e+00> : vector<2xf32>
    %82 = vector.multi_reduction <add>, %81, %cst_32 [0] : vector<16x2xf32> to vector<2xf32>
    %83 = vector.shape_cast %82 : vector<2xf32> to vector<1x2xf32>
    %84 = arith.mulf %7, %56 : vector<16x2xf32>
    %cst_33 = arith.constant dense<0.000000e+00> : vector<2xf32>
    %85 = vector.multi_reduction <add>, %84, %cst_33 [0] : vector<16x2xf32> to vector<2xf32>
    %86 = vector.shape_cast %85 : vector<2xf32> to vector<1x2xf32>
    %87 = arith.mulf %7, %64 : vector<16x2xf32>
    %cst_34 = arith.constant dense<0.000000e+00> : vector<2xf32>
    %88 = vector.multi_reduction <add>, %87, %cst_34 [0] : vector<16x2xf32> to vector<2xf32>
    %89 = vector.shape_cast %88 : vector<2xf32> to vector<1x2xf32>
    %90 = arith.maximumf %68, %71 : vector<1x2xf32>
    %91 = arith.maximumf %90, %74 : vector<1x2xf32>
    %92 = arith.maximumf %91, %77 : vector<1x2xf32>
    %93 = arith.maximumf %92, %80 : vector<1x2xf32>
    %94 = arith.maximumf %93, %83 : vector<1x2xf32>
    %95 = arith.maximumf %94, %86 : vector<1x2xf32>
    %96 = arith.maximumf %95, %89 : vector<1x2xf32>
    %97 = arith.subf %68, %96 : vector<1x2xf32>
    %98 = math.exp %97 : vector<1x2xf32>
    %99 = arith.subf %71, %96 : vector<1x2xf32>
    %100 = math.exp %99 : vector<1x2xf32>
    %101 = arith.subf %74, %96 : vector<1x2xf32>
    %102 = math.exp %101 : vector<1x2xf32>
    %103 = arith.subf %77, %96 : vector<1x2xf32>
    %104 = math.exp %103 : vector<1x2xf32>
    %105 = arith.subf %80, %96 : vector<1x2xf32>
    %106 = math.exp %105 : vector<1x2xf32>
    %107 = arith.subf %83, %96 : vector<1x2xf32>
    %108 = math.exp %107 : vector<1x2xf32>
    %109 = arith.subf %86, %96 : vector<1x2xf32>
    %110 = math.exp %109 : vector<1x2xf32>
    %111 = arith.subf %89, %96 : vector<1x2xf32>
    %112 = math.exp %111 : vector<1x2xf32>
    %113 = arith.addf %98, %100 : vector<1x2xf32>
    %114 = arith.addf %113, %102 : vector<1x2xf32>
    %115 = arith.addf %114, %104 : vector<1x2xf32>
    %116 = arith.addf %115, %106 : vector<1x2xf32>
    %117 = arith.addf %116, %108 : vector<1x2xf32>
    %118 = arith.addf %117, %110 : vector<1x2xf32>
    %119 = arith.addf %118, %112 : vector<1x2xf32>
    %120 = tpu.reciprocal %119 {approx = true} : vector<1x2xf32> -> vector<1x2xf32>
    %121 = arith.mulf %119, %120 : vector<1x2xf32>
    %cst_35 = arith.constant 2.000000e+00 : f32
    %122 = vector.broadcast %cst_35 : f32 to vector<1x2xf32>
    %123 = arith.subf %122, %121 : vector<1x2xf32>
    %124 = arith.mulf %120, %123 : vector<1x2xf32>
    %125 = arith.mulf %98, %124 : vector<1x2xf32>
    %126 = vector.broadcast %125 : vector<1x2xf32> to vector<16x2xf32>
    %127 = arith.mulf %126, %9 : vector<16x2xf32>
    %128 = arith.mulf %100, %124 : vector<1x2xf32>
    %129 = vector.broadcast %128 : vector<1x2xf32> to vector<16x2xf32>
    %130 = arith.mulf %129, %17 : vector<16x2xf32>
    %131 = arith.addf %127, %130 : vector<16x2xf32>
    %132 = arith.mulf %102, %124 : vector<1x2xf32>
    %133 = vector.broadcast %132 : vector<1x2xf32> to vector<16x2xf32>
    %134 = arith.mulf %133, %25 : vector<16x2xf32>
    %135 = arith.addf %131, %134 : vector<16x2xf32>
    %136 = arith.mulf %104, %124 : vector<1x2xf32>
    %137 = vector.broadcast %136 : vector<1x2xf32> to vector<16x2xf32>
    %138 = arith.mulf %137, %33 : vector<16x2xf32>
    %139 = arith.addf %135, %138 : vector<16x2xf32>
    %140 = arith.mulf %106, %124 : vector<1x2xf32>
    %141 = vector.broadcast %140 : vector<1x2xf32> to vector<16x2xf32>
    %142 = arith.mulf %141, %41 : vector<16x2xf32>
    %143 = arith.addf %139, %142 : vector<16x2xf32>
    %144 = arith.mulf %108, %124 : vector<1x2xf32>
    %145 = vector.broadcast %144 : vector<1x2xf32> to vector<16x2xf32>
    %146 = arith.mulf %145, %49 : vector<16x2xf32>
    %147 = arith.addf %143, %146 : vector<16x2xf32>
    %148 = arith.mulf %110, %124 : vector<1x2xf32>
    %149 = vector.broadcast %148 : vector<1x2xf32> to vector<16x2xf32>
    %150 = arith.mulf %149, %57 : vector<16x2xf32>
    %151 = arith.addf %147, %150 : vector<16x2xf32>
    %152 = arith.mulf %112, %124 : vector<1x2xf32>
    %153 = vector.broadcast %152 : vector<1x2xf32> to vector<16x2xf32>
    %154 = arith.mulf %153, %65 : vector<16x2xf32>
    %155 = arith.addf %151, %154 : vector<16x2xf32>
    %156 = vector.extract_strided_slice %155 {offsets = [0, 0], sizes = [9, 2], strides = [1, 1]} : vector<16x2xf32> to vector<9x2xf32>
    %c0_36 = arith.constant 0 : index
    %c0_37 = arith.constant 0 : index
    %c0_38 = arith.constant 0 : index
    %157 = vector.load %arg4[%c0_36, %c0_37, %c0_38] : memref<8x9x2xf32, #tpu.memory_space<vmem>>, vector<1x9x2xf32>
    %158 = vector.shape_cast %157 : vector<1x9x2xf32> to vector<9x2xf32>
    %159 = vector.shape_cast %156 : vector<9x2xf32> to vector<1x9x2xf32>
    tpu.vector_store %arg4[%c0_36, %c0_37, %c0_38], %159 {strides = array<i32>} : memref<8x9x2xf32, #tpu.memory_space<vmem>>, vector<1x9x2xf32>,
    %160 = arith.mulf %15, %8 : vector<16x2xf32>
    %cst_39 = arith.constant dense<0.000000e+00> : vector<2xf32>
    %161 = vector.multi_reduction <add>, %160, %cst_39 [0] : vector<16x2xf32> to vector<2xf32>
    %162 = vector.shape_cast %161 : vector<2xf32> to vector<1x2xf32>
    %163 = arith.mulf %15, %16 : vector<16x2xf32>
    %cst_40 = arith.constant dense<0.000000e+00> : vector<2xf32>
    %164 = vector.multi_reduction <add>, %163, %cst_40 [0] : vector<16x2xf32> to vector<2xf32>
    %165 = vector.shape_cast %164 : vector<2xf32> to vector<1x2xf32>
    %166 = arith.mulf %15, %24 : vector<16x2xf32>
    %cst_41 = arith.constant dense<0.000000e+00> : vector<2xf32>
    %167 = vector.multi_reduction <add>, %166, %cst_41 [0] : vector<16x2xf32> to vector<2xf32>
    %168 = vector.shape_cast %167 : vector<2xf32> to vector<1x2xf32>
    %169 = arith.mulf %15, %32 : vector<16x2xf32>
    %cst_42 = arith.constant dense<0.000000e+00> : vector<2xf32>
    %170 = vector.multi_reduction <add>, %169, %cst_42 [0] : vector<16x2xf32> to vector<2xf32>
    %171 = vector.shape_cast %170 : vector<2xf32> to vector<1x2xf32>
    %172 = arith.mulf %15, %40 : vector<16x2xf32>
    %cst_43 = arith.constant dense<0.000000e+00> : vector<2xf32>
    %173 = vector.multi_reduction <add>, %172, %cst_43 [0] : vector<16x2xf32> to vector<2xf32>
    %174 = vector.shape_cast %173 : vector<2xf32> to vector<1x2xf32>
    %175 = arith.mulf %15, %48 : vector<16x2xf32>
    %cst_44 = arith.constant dense<0.000000e+00> : vector<2xf32>
    %176 = vector.multi_reduction <add>, %175, %cst_44 [0] : vector<16x2xf32> to vector<2xf32>
    %177 = vector.shape_cast %176 : vector<2xf32> to vector<1x2xf32>
    %178 = arith.mulf %15, %56 : vector<16x2xf32>
    %cst_45 = arith.constant dense<0.000000e+00> : vector<2xf32>
    %179 = vector.multi_reduction <add>, %178, %cst_45 [0] : vector<16x2xf32> to vector<2xf32>
    %180 = vector.shape_cast %179 : vector<2xf32> to vector<1x2xf32>
    %181 = arith.mulf %15, %64 : vector<16x2xf32>
    %cst_46 = arith.constant dense<0.000000e+00> : vector<2xf32>
    %182 = vector.multi_reduction <add>, %181, %cst_46 [0] : vector<16x2xf32> to vector<2xf32>
    %183 = vector.shape_cast %182 : vector<2xf32> to vector<1x2xf32>
    %184 = arith.maximumf %162, %165 : vector<1x2xf32>
    %185 = arith.maximumf %184, %168 : vector<1x2xf32>
    %186 = arith.maximumf %185, %171 : vector<1x2xf32>
    %187 = arith.maximumf %186, %174 : vector<1x2xf32>
    %188 = arith.maximumf %187, %177 : vector<1x2xf32>
    %189 = arith.maximumf %188, %180 : vector<1x2xf32>
    %190 = arith.maximumf %189, %183 : vector<1x2xf32>
    %191 = arith.subf %162, %190 : vector<1x2xf32>
    %192 = math.exp %191 : vector<1x2xf32>
    %193 = arith.subf %165, %190 : vector<1x2xf32>
    %194 = math.exp %193 : vector<1x2xf32>
    %195 = arith.subf %168, %190 : vector<1x2xf32>
    %196 = math.exp %195 : vector<1x2xf32>
    %197 = arith.subf %171, %190 : vector<1x2xf32>
    %198 = math.exp %197 : vector<1x2xf32>
    %199 = arith.subf %174, %190 : vector<1x2xf32>
    %200 = math.exp %199 : vector<1x2xf32>
    %201 = arith.subf %177, %190 : vector<1x2xf32>
    %202 = math.exp %201 : vector<1x2xf32>
    %203 = arith.subf %180, %190 : vector<1x2xf32>
    %204 = math.exp %203 : vector<1x2xf32>
    %205 = arith.subf %183, %190 : vector<1x2xf32>
    %206 = math.exp %205 : vector<1x2xf32>
    %207 = arith.addf %192, %194 : vector<1x2xf32>
    %208 = arith.addf %207, %196 : vector<1x2xf32>
    %209 = arith.addf %208, %198 : vector<1x2xf32>
    %210 = arith.addf %209, %200 : vector<1x2xf32>
    %211 = arith.addf %210, %202 : vector<1x2xf32>
    %212 = arith.addf %211, %204 : vector<1x2xf32>
    %213 = arith.addf %212, %206 : vector<1x2xf32>
    %214 = tpu.reciprocal %213 {approx = true} : vector<1x2xf32> -> vector<1x2xf32>
    %215 = arith.mulf %213, %214 : vector<1x2xf32>
    %cst_47 = arith.constant 2.000000e+00 : f32
    %216 = vector.broadcast %cst_47 : f32 to vector<1x2xf32>
    %217 = arith.subf %216, %215 : vector<1x2xf32>
    %218 = arith.mulf %214, %217 : vector<1x2xf32>
    %219 = arith.mulf %192, %218 : vector<1x2xf32>
    %220 = vector.broadcast %219 : vector<1x2xf32> to vector<16x2xf32>
    %221 = arith.mulf %220, %9 : vector<16x2xf32>
    %222 = arith.mulf %194, %218 : vector<1x2xf32>
    %223 = vector.broadcast %222 : vector<1x2xf32> to vector<16x2xf32>
    %224 = arith.mulf %223, %17 : vector<16x2xf32>
    %225 = arith.addf %221, %224 : vector<16x2xf32>
    %226 = arith.mulf %196, %218 : vector<1x2xf32>
    %227 = vector.broadcast %226 : vector<1x2xf32> to vector<16x2xf32>
    %228 = arith.mulf %227, %25 : vector<16x2xf32>
    %229 = arith.addf %225, %228 : vector<16x2xf32>
    %230 = arith.mulf %198, %218 : vector<1x2xf32>
    %231 = vector.broadcast %230 : vector<1x2xf32> to vector<16x2xf32>
    %232 = arith.mulf %231, %33 : vector<16x2xf32>
    %233 = arith.addf %229, %232 : vector<16x2xf32>
    %234 = arith.mulf %200, %218 : vector<1x2xf32>
    %235 = vector.broadcast %234 : vector<1x2xf32> to vector<16x2xf32>
    %236 = arith.mulf %235, %41 : vector<16x2xf32>
    %237 = arith.addf %233, %236 : vector<16x2xf32>
    %238 = arith.mulf %202, %218 : vector<1x2xf32>
    %239 = vector.broadcast %238 : vector<1x2xf32> to vector<16x2xf32>
    %240 = arith.mulf %239, %49 : vector<16x2xf32>
    %241 = arith.addf %237, %240 : vector<16x2xf32>
    %242 = arith.mulf %204, %218 : vector<1x2xf32>
    %243 = vector.broadcast %242 : vector<1x2xf32> to vector<16x2xf32>
    %244 = arith.mulf %243, %57 : vector<16x2xf32>
    %245 = arith.addf %241, %244 : vector<16x2xf32>
    %246 = arith.mulf %206, %218 : vector<1x2xf32>
    %247 = vector.broadcast %246 : vector<1x2xf32> to vector<16x2xf32>
    %248 = arith.mulf %247, %65 : vector<16x2xf32>
    %249 = arith.addf %245, %248 : vector<16x2xf32>
    %250 = vector.extract_strided_slice %249 {offsets = [0, 0], sizes = [9, 2], strides = [1, 1]} : vector<16x2xf32> to vector<9x2xf32>
    %c1_48 = arith.constant 1 : index
    %c0_49 = arith.constant 0 : index
    %c0_50 = arith.constant 0 : index
    %251 = vector.load %arg4[%c1_48, %c0_49, %c0_50] : memref<8x9x2xf32, #tpu.memory_space<vmem>>, vector<1x9x2xf32>
    %252 = vector.shape_cast %251 : vector<1x9x2xf32> to vector<9x2xf32>
    %253 = vector.shape_cast %250 : vector<9x2xf32> to vector<1x9x2xf32>
    tpu.vector_store %arg4[%c1_48, %c0_49, %c0_50], %253 {strides = array<i32>} : memref<8x9x2xf32, #tpu.memory_space<vmem>>, vector<1x9x2xf32>,
    %254 = arith.mulf %23, %8 : vector<16x2xf32>
    %cst_51 = arith.constant dense<0.000000e+00> : vector<2xf32>
    %255 = vector.multi_reduction <add>, %254, %cst_51 [0] : vector<16x2xf32> to vector<2xf32>
    %256 = vector.shape_cast %255 : vector<2xf32> to vector<1x2xf32>
    %257 = arith.mulf %23, %16 : vector<16x2xf32>
    %cst_52 = arith.constant dense<0.000000e+00> : vector<2xf32>
    %258 = vector.multi_reduction <add>, %257, %cst_52 [0] : vector<16x2xf32> to vector<2xf32>
    %259 = vector.shape_cast %258 : vector<2xf32> to vector<1x2xf32>
    %260 = arith.mulf %23, %24 : vector<16x2xf32>
    %cst_53 = arith.constant dense<0.000000e+00> : vector<2xf32>
    %261 = vector.multi_reduction <add>, %260, %cst_53 [0] : vector<16x2xf32> to vector<2xf32>
    %262 = vector.shape_cast %261 : vector<2xf32> to vector<1x2xf32>
    %263 = arith.mulf %23, %32 : vector<16x2xf32>
    %cst_54 = arith.constant dense<0.000000e+00> : vector<2xf32>
    %264 = vector.multi_reduction <add>, %263, %cst_54 [0] : vector<16x2xf32> to vector<2xf32>
    %265 = vector.shape_cast %264 : vector<2xf32> to vector<1x2xf32>
    %266 = arith.mulf %23, %40 : vector<16x2xf32>
    %cst_55 = arith.constant dense<0.000000e+00> : vector<2xf32>
    %267 = vector.multi_reduction <add>, %266, %cst_55 [0] : vector<16x2xf32> to vector<2xf32>
    %268 = vector.shape_cast %267 : vector<2xf32> to vector<1x2xf32>
    %269 = arith.mulf %23, %48 : vector<16x2xf32>
    %cst_56 = arith.constant dense<0.000000e+00> : vector<2xf32>
    %270 = vector.multi_reduction <add>, %269, %cst_56 [0] : vector<16x2xf32> to vector<2xf32>
    %271 = vector.shape_cast %270 : vector<2xf32> to vector<1x2xf32>
    %272 = arith.mulf %23, %56 : vector<16x2xf32>
    %cst_57 = arith.constant dense<0.000000e+00> : vector<2xf32>
    %273 = vector.multi_reduction <add>, %272, %cst_57 [0] : vector<16x2xf32> to vector<2xf32>
    %274 = vector.shape_cast %273 : vector<2xf32> to vector<1x2xf32>
    %275 = arith.mulf %23, %64 : vector<16x2xf32>
    %cst_58 = arith.constant dense<0.000000e+00> : vector<2xf32>
    %276 = vector.multi_reduction <add>, %275, %cst_58 [0] : vector<16x2xf32> to vector<2xf32>
    %277 = vector.shape_cast %276 : vector<2xf32> to vector<1x2xf32>
    %278 = arith.maximumf %256, %259 : vector<1x2xf32>
    %279 = arith.maximumf %278, %262 : vector<1x2xf32>
    %280 = arith.maximumf %279, %265 : vector<1x2xf32>
    %281 = arith.maximumf %280, %268 : vector<1x2xf32>
    %282 = arith.maximumf %281, %271 : vector<1x2xf32>
    %283 = arith.maximumf %282, %274 : vector<1x2xf32>
    %284 = arith.maximumf %283, %277 : vector<1x2xf32>
    %285 = arith.subf %256, %284 : vector<1x2xf32>
    %286 = math.exp %285 : vector<1x2xf32>
    %287 = arith.subf %259, %284 : vector<1x2xf32>
    %288 = math.exp %287 : vector<1x2xf32>
    %289 = arith.subf %262, %284 : vector<1x2xf32>
    %290 = math.exp %289 : vector<1x2xf32>
    %291 = arith.subf %265, %284 : vector<1x2xf32>
    %292 = math.exp %291 : vector<1x2xf32>
    %293 = arith.subf %268, %284 : vector<1x2xf32>
    %294 = math.exp %293 : vector<1x2xf32>
    %295 = arith.subf %271, %284 : vector<1x2xf32>
    %296 = math.exp %295 : vector<1x2xf32>
    %297 = arith.subf %274, %284 : vector<1x2xf32>
    %298 = math.exp %297 : vector<1x2xf32>
    %299 = arith.subf %277, %284 : vector<1x2xf32>
    %300 = math.exp %299 : vector<1x2xf32>
    %301 = arith.addf %286, %288 : vector<1x2xf32>
    %302 = arith.addf %301, %290 : vector<1x2xf32>
    %303 = arith.addf %302, %292 : vector<1x2xf32>
    %304 = arith.addf %303, %294 : vector<1x2xf32>
    %305 = arith.addf %304, %296 : vector<1x2xf32>
    %306 = arith.addf %305, %298 : vector<1x2xf32>
    %307 = arith.addf %306, %300 : vector<1x2xf32>
    %308 = tpu.reciprocal %307 {approx = true} : vector<1x2xf32> -> vector<1x2xf32>
    %309 = arith.mulf %307, %308 : vector<1x2xf32>
    %cst_59 = arith.constant 2.000000e+00 : f32
    %310 = vector.broadcast %cst_59 : f32 to vector<1x2xf32>
    %311 = arith.subf %310, %309 : vector<1x2xf32>
    %312 = arith.mulf %308, %311 : vector<1x2xf32>
    %313 = arith.mulf %286, %312 : vector<1x2xf32>
    %314 = vector.broadcast %313 : vector<1x2xf32> to vector<16x2xf32>
    %315 = arith.mulf %314, %9 : vector<16x2xf32>
    %316 = arith.mulf %288, %312 : vector<1x2xf32>
    %317 = vector.broadcast %316 : vector<1x2xf32> to vector<16x2xf32>
    %318 = arith.mulf %317, %17 : vector<16x2xf32>
    %319 = arith.addf %315, %318 : vector<16x2xf32>
    %320 = arith.mulf %290, %312 : vector<1x2xf32>
    %321 = vector.broadcast %320 : vector<1x2xf32> to vector<16x2xf32>
    %322 = arith.mulf %321, %25 : vector<16x2xf32>
    %323 = arith.addf %319, %322 : vector<16x2xf32>
    %324 = arith.mulf %292, %312 : vector<1x2xf32>
    %325 = vector.broadcast %324 : vector<1x2xf32> to vector<16x2xf32>
    %326 = arith.mulf %325, %33 : vector<16x2xf32>
    %327 = arith.addf %323, %326 : vector<16x2xf32>
    %328 = arith.mulf %294, %312 : vector<1x2xf32>
    %329 = vector.broadcast %328 : vector<1x2xf32> to vector<16x2xf32>
    %330 = arith.mulf %329, %41 : vector<16x2xf32>
    %331 = arith.addf %327, %330 : vector<16x2xf32>
    %332 = arith.mulf %296, %312 : vector<1x2xf32>
    %333 = vector.broadcast %332 : vector<1x2xf32> to vector<16x2xf32>
    %334 = arith.mulf %333, %49 : vector<16x2xf32>
    %335 = arith.addf %331, %334 : vector<16x2xf32>
    %336 = arith.mulf %298, %312 : vector<1x2xf32>
    %337 = vector.broadcast %336 : vector<1x2xf32> to vector<16x2xf32>
    %338 = arith.mulf %337, %57 : vector<16x2xf32>
    %339 = arith.addf %335, %338 : vector<16x2xf32>
    %340 = arith.mulf %300, %312 : vector<1x2xf32>
    %341 = vector.broadcast %340 : vector<1x2xf32> to vector<16x2xf32>
    %342 = arith.mulf %341, %65 : vector<16x2xf32>
    %343 = arith.addf %339, %342 : vector<16x2xf32>
    %344 = vector.extract_strided_slice %343 {offsets = [0, 0], sizes = [9, 2], strides = [1, 1]} : vector<16x2xf32> to vector<9x2xf32>
    %c2_60 = arith.constant 2 : index
    %c0_61 = arith.constant 0 : index
    %c0_62 = arith.constant 0 : index
    %345 = vector.load %arg4[%c2_60, %c0_61, %c0_62] : memref<8x9x2xf32, #tpu.memory_space<vmem>>, vector<1x9x2xf32>
    %346 = vector.shape_cast %345 : vector<1x9x2xf32> to vector<9x2xf32>
    %347 = vector.shape_cast %344 : vector<9x2xf32> to vector<1x9x2xf32>
    tpu.vector_store %arg4[%c2_60, %c0_61, %c0_62], %347 {strides = array<i32>} : memref<8x9x2xf32, #tpu.memory_space<vmem>>, vector<1x9x2xf32>,
    %348 = arith.mulf %31, %8 : vector<16x2xf32>
    %cst_63 = arith.constant dense<0.000000e+00> : vector<2xf32>
    %349 = vector.multi_reduction <add>, %348, %cst_63 [0] : vector<16x2xf32> to vector<2xf32>
    %350 = vector.shape_cast %349 : vector<2xf32> to vector<1x2xf32>
    %351 = arith.mulf %31, %16 : vector<16x2xf32>
    %cst_64 = arith.constant dense<0.000000e+00> : vector<2xf32>
    %352 = vector.multi_reduction <add>, %351, %cst_64 [0] : vector<16x2xf32> to vector<2xf32>
    %353 = vector.shape_cast %352 : vector<2xf32> to vector<1x2xf32>
    %354 = arith.mulf %31, %24 : vector<16x2xf32>
    %cst_65 = arith.constant dense<0.000000e+00> : vector<2xf32>
    %355 = vector.multi_reduction <add>, %354, %cst_65 [0] : vector<16x2xf32> to vector<2xf32>
    %356 = vector.shape_cast %355 : vector<2xf32> to vector<1x2xf32>
    %357 = arith.mulf %31, %32 : vector<16x2xf32>
    %cst_66 = arith.constant dense<0.000000e+00> : vector<2xf32>
    %358 = vector.multi_reduction <add>, %357, %cst_66 [0] : vector<16x2xf32> to vector<2xf32>
    %359 = vector.shape_cast %358 : vector<2xf32> to vector<1x2xf32>
    %360 = arith.mulf %31, %40 : vector<16x2xf32>
    %cst_67 = arith.constant dense<0.000000e+00> : vector<2xf32>
    %361 = vector.multi_reduction <add>, %360, %cst_67 [0] : vector<16x2xf32> to vector<2xf32>
    %362 = vector.shape_cast %361 : vector<2xf32> to vector<1x2xf32>
    %363 = arith.mulf %31, %48 : vector<16x2xf32>
    %cst_68 = arith.constant dense<0.000000e+00> : vector<2xf32>
    %364 = vector.multi_reduction <add>, %363, %cst_68 [0] : vector<16x2xf32> to vector<2xf32>
    %365 = vector.shape_cast %364 : vector<2xf32> to vector<1x2xf32>
    %366 = arith.mulf %31, %56 : vector<16x2xf32>
    %cst_69 = arith.constant dense<0.000000e+00> : vector<2xf32>
    %367 = vector.multi_reduction <add>, %366, %cst_69 [0] : vector<16x2xf32> to vector<2xf32>
    %368 = vector.shape_cast %367 : vector<2xf32> to vector<1x2xf32>
    %369 = arith.mulf %31, %64 : vector<16x2xf32>
    %cst_70 = arith.constant dense<0.000000e+00> : vector<2xf32>
    %370 = vector.multi_reduction <add>, %369, %cst_70 [0] : vector<16x2xf32> to vector<2xf32>
    %371 = vector.shape_cast %370 : vector<2xf32> to vector<1x2xf32>
    %372 = arith.maximumf %350, %353 : vector<1x2xf32>
    %373 = arith.maximumf %372, %356 : vector<1x2xf32>
    %374 = arith.maximumf %373, %359 : vector<1x2xf32>
    %375 = arith.maximumf %374, %362 : vector<1x2xf32>
    %376 = arith.maximumf %375, %365 : vector<1x2xf32>
    %377 = arith.maximumf %376, %368 : vector<1x2xf32>
    %378 = arith.maximumf %377, %371 : vector<1x2xf32>
    %379 = arith.subf %350, %378 : vector<1x2xf32>
    %380 = math.exp %379 : vector<1x2xf32>
    %381 = arith.subf %353, %378 : vector<1x2xf32>
    %382 = math.exp %381 : vector<1x2xf32>
    %383 = arith.subf %356, %378 : vector<1x2xf32>
    %384 = math.exp %383 : vector<1x2xf32>
    %385 = arith.subf %359, %378 : vector<1x2xf32>
    %386 = math.exp %385 : vector<1x2xf32>
    %387 = arith.subf %362, %378 : vector<1x2xf32>
    %388 = math.exp %387 : vector<1x2xf32>
    %389 = arith.subf %365, %378 : vector<1x2xf32>
    %390 = math.exp %389 : vector<1x2xf32>
    %391 = arith.subf %368, %378 : vector<1x2xf32>
    %392 = math.exp %391 : vector<1x2xf32>
    %393 = arith.subf %371, %378 : vector<1x2xf32>
    %394 = math.exp %393 : vector<1x2xf32>
    %395 = arith.addf %380, %382 : vector<1x2xf32>
    %396 = arith.addf %395, %384 : vector<1x2xf32>
    %397 = arith.addf %396, %386 : vector<1x2xf32>
    %398 = arith.addf %397, %388 : vector<1x2xf32>
    %399 = arith.addf %398, %390 : vector<1x2xf32>
    %400 = arith.addf %399, %392 : vector<1x2xf32>
    %401 = arith.addf %400, %394 : vector<1x2xf32>
    %402 = tpu.reciprocal %401 {approx = true} : vector<1x2xf32> -> vector<1x2xf32>
    %403 = arith.mulf %401, %402 : vector<1x2xf32>
    %cst_71 = arith.constant 2.000000e+00 : f32
    %404 = vector.broadcast %cst_71 : f32 to vector<1x2xf32>
    %405 = arith.subf %404, %403 : vector<1x2xf32>
    %406 = arith.mulf %402, %405 : vector<1x2xf32>
    %407 = arith.mulf %380, %406 : vector<1x2xf32>
    %408 = vector.broadcast %407 : vector<1x2xf32> to vector<16x2xf32>
    %409 = arith.mulf %408, %9 : vector<16x2xf32>
    %410 = arith.mulf %382, %406 : vector<1x2xf32>
    %411 = vector.broadcast %410 : vector<1x2xf32> to vector<16x2xf32>
    %412 = arith.mulf %411, %17 : vector<16x2xf32>
    %413 = arith.addf %409, %412 : vector<16x2xf32>
    %414 = arith.mulf %384, %406 : vector<1x2xf32>
    %415 = vector.broadcast %414 : vector<1x2xf32> to vector<16x2xf32>
    %416 = arith.mulf %415, %25 : vector<16x2xf32>
    %417 = arith.addf %413, %416 : vector<16x2xf32>
    %418 = arith.mulf %386, %406 : vector<1x2xf32>
    %419 = vector.broadcast %418 : vector<1x2xf32> to vector<16x2xf32>
    %420 = arith.mulf %419, %33 : vector<16x2xf32>
    %421 = arith.addf %417, %420 : vector<16x2xf32>
    %422 = arith.mulf %388, %406 : vector<1x2xf32>
    %423 = vector.broadcast %422 : vector<1x2xf32> to vector<16x2xf32>
    %424 = arith.mulf %423, %41 : vector<16x2xf32>
    %425 = arith.addf %421, %424 : vector<16x2xf32>
    %426 = arith.mulf %390, %406 : vector<1x2xf32>
    %427 = vector.broadcast %426 : vector<1x2xf32> to vector<16x2xf32>
    %428 = arith.mulf %427, %49 : vector<16x2xf32>
    %429 = arith.addf %425, %428 : vector<16x2xf32>
    %430 = arith.mulf %392, %406 : vector<1x2xf32>
    %431 = vector.broadcast %430 : vector<1x2xf32> to vector<16x2xf32>
    %432 = arith.mulf %431, %57 : vector<16x2xf32>
    %433 = arith.addf %429, %432 : vector<16x2xf32>
    %434 = arith.mulf %394, %406 : vector<1x2xf32>
    %435 = vector.broadcast %434 : vector<1x2xf32> to vector<16x2xf32>
    %436 = arith.mulf %435, %65 : vector<16x2xf32>
    %437 = arith.addf %433, %436 : vector<16x2xf32>
    %438 = vector.extract_strided_slice %437 {offsets = [0, 0], sizes = [9, 2], strides = [1, 1]} : vector<16x2xf32> to vector<9x2xf32>
    %c3_72 = arith.constant 3 : index
    %c0_73 = arith.constant 0 : index
    %c0_74 = arith.constant 0 : index
    %439 = vector.load %arg4[%c3_72, %c0_73, %c0_74] : memref<8x9x2xf32, #tpu.memory_space<vmem>>, vector<1x9x2xf32>
    %440 = vector.shape_cast %439 : vector<1x9x2xf32> to vector<9x2xf32>
    %441 = vector.shape_cast %438 : vector<9x2xf32> to vector<1x9x2xf32>
    tpu.vector_store %arg4[%c3_72, %c0_73, %c0_74], %441 {strides = array<i32>} : memref<8x9x2xf32, #tpu.memory_space<vmem>>, vector<1x9x2xf32>,
    %442 = arith.mulf %39, %8 : vector<16x2xf32>
    %cst_75 = arith.constant dense<0.000000e+00> : vector<2xf32>
    %443 = vector.multi_reduction <add>, %442, %cst_75 [0] : vector<16x2xf32> to vector<2xf32>
    %444 = vector.shape_cast %443 : vector<2xf32> to vector<1x2xf32>
    %445 = arith.mulf %39, %16 : vector<16x2xf32>
    %cst_76 = arith.constant dense<0.000000e+00> : vector<2xf32>
    %446 = vector.multi_reduction <add>, %445, %cst_76 [0] : vector<16x2xf32> to vector<2xf32>
    %447 = vector.shape_cast %446 : vector<2xf32> to vector<1x2xf32>
    %448 = arith.mulf %39, %24 : vector<16x2xf32>
    %cst_77 = arith.constant dense<0.000000e+00> : vector<2xf32>
    %449 = vector.multi_reduction <add>, %448, %cst_77 [0] : vector<16x2xf32> to vector<2xf32>
    %450 = vector.shape_cast %449 : vector<2xf32> to vector<1x2xf32>
    %451 = arith.mulf %39, %32 : vector<16x2xf32>
    %cst_78 = arith.constant dense<0.000000e+00> : vector<2xf32>
    %452 = vector.multi_reduction <add>, %451, %cst_78 [0] : vector<16x2xf32> to vector<2xf32>
    %453 = vector.shape_cast %452 : vector<2xf32> to vector<1x2xf32>
    %454 = arith.mulf %39, %40 : vector<16x2xf32>
    %cst_79 = arith.constant dense<0.000000e+00> : vector<2xf32>
    %455 = vector.multi_reduction <add>, %454, %cst_79 [0] : vector<16x2xf32> to vector<2xf32>
    %456 = vector.shape_cast %455 : vector<2xf32> to vector<1x2xf32>
    %457 = arith.mulf %39, %48 : vector<16x2xf32>
    %cst_80 = arith.constant dense<0.000000e+00> : vector<2xf32>
    %458 = vector.multi_reduction <add>, %457, %cst_80 [0] : vector<16x2xf32> to vector<2xf32>
    %459 = vector.shape_cast %458 : vector<2xf32> to vector<1x2xf32>
    %460 = arith.mulf %39, %56 : vector<16x2xf32>
    %cst_81 = arith.constant dense<0.000000e+00> : vector<2xf32>
    %461 = vector.multi_reduction <add>, %460, %cst_81 [0] : vector<16x2xf32> to vector<2xf32>
    %462 = vector.shape_cast %461 : vector<2xf32> to vector<1x2xf32>
    %463 = arith.mulf %39, %64 : vector<16x2xf32>
    %cst_82 = arith.constant dense<0.000000e+00> : vector<2xf32>
    %464 = vector.multi_reduction <add>, %463, %cst_82 [0] : vector<16x2xf32> to vector<2xf32>
    %465 = vector.shape_cast %464 : vector<2xf32> to vector<1x2xf32>
    %466 = arith.maximumf %444, %447 : vector<1x2xf32>
    %467 = arith.maximumf %466, %450 : vector<1x2xf32>
    %468 = arith.maximumf %467, %453 : vector<1x2xf32>
    %469 = arith.maximumf %468, %456 : vector<1x2xf32>
    %470 = arith.maximumf %469, %459 : vector<1x2xf32>
    %471 = arith.maximumf %470, %462 : vector<1x2xf32>
    %472 = arith.maximumf %471, %465 : vector<1x2xf32>
    %473 = arith.subf %444, %472 : vector<1x2xf32>
    %474 = math.exp %473 : vector<1x2xf32>
    %475 = arith.subf %447, %472 : vector<1x2xf32>
    %476 = math.exp %475 : vector<1x2xf32>
    %477 = arith.subf %450, %472 : vector<1x2xf32>
    %478 = math.exp %477 : vector<1x2xf32>
    %479 = arith.subf %453, %472 : vector<1x2xf32>
    %480 = math.exp %479 : vector<1x2xf32>
    %481 = arith.subf %456, %472 : vector<1x2xf32>
    %482 = math.exp %481 : vector<1x2xf32>
    %483 = arith.subf %459, %472 : vector<1x2xf32>
    %484 = math.exp %483 : vector<1x2xf32>
    %485 = arith.subf %462, %472 : vector<1x2xf32>
    %486 = math.exp %485 : vector<1x2xf32>
    %487 = arith.subf %465, %472 : vector<1x2xf32>
    %488 = math.exp %487 : vector<1x2xf32>
    %489 = arith.addf %474, %476 : vector<1x2xf32>
    %490 = arith.addf %489, %478 : vector<1x2xf32>
    %491 = arith.addf %490, %480 : vector<1x2xf32>
    %492 = arith.addf %491, %482 : vector<1x2xf32>
    %493 = arith.addf %492, %484 : vector<1x2xf32>
    %494 = arith.addf %493, %486 : vector<1x2xf32>
    %495 = arith.addf %494, %488 : vector<1x2xf32>
    %496 = tpu.reciprocal %495 {approx = true} : vector<1x2xf32> -> vector<1x2xf32>
    %497 = arith.mulf %495, %496 : vector<1x2xf32>
    %cst_83 = arith.constant 2.000000e+00 : f32
    %498 = vector.broadcast %cst_83 : f32 to vector<1x2xf32>
    %499 = arith.subf %498, %497 : vector<1x2xf32>
    %500 = arith.mulf %496, %499 : vector<1x2xf32>
    %501 = arith.mulf %474, %500 : vector<1x2xf32>
    %502 = vector.broadcast %501 : vector<1x2xf32> to vector<16x2xf32>
    %503 = arith.mulf %502, %9 : vector<16x2xf32>
    %504 = arith.mulf %476, %500 : vector<1x2xf32>
    %505 = vector.broadcast %504 : vector<1x2xf32> to vector<16x2xf32>
    %506 = arith.mulf %505, %17 : vector<16x2xf32>
    %507 = arith.addf %503, %506 : vector<16x2xf32>
    %508 = arith.mulf %478, %500 : vector<1x2xf32>
    %509 = vector.broadcast %508 : vector<1x2xf32> to vector<16x2xf32>
    %510 = arith.mulf %509, %25 : vector<16x2xf32>
    %511 = arith.addf %507, %510 : vector<16x2xf32>
    %512 = arith.mulf %480, %500 : vector<1x2xf32>
    %513 = vector.broadcast %512 : vector<1x2xf32> to vector<16x2xf32>
    %514 = arith.mulf %513, %33 : vector<16x2xf32>
    %515 = arith.addf %511, %514 : vector<16x2xf32>
    %516 = arith.mulf %482, %500 : vector<1x2xf32>
    %517 = vector.broadcast %516 : vector<1x2xf32> to vector<16x2xf32>
    %518 = arith.mulf %517, %41 : vector<16x2xf32>
    %519 = arith.addf %515, %518 : vector<16x2xf32>
    %520 = arith.mulf %484, %500 : vector<1x2xf32>
    %521 = vector.broadcast %520 : vector<1x2xf32> to vector<16x2xf32>
    %522 = arith.mulf %521, %49 : vector<16x2xf32>
    %523 = arith.addf %519, %522 : vector<16x2xf32>
    %524 = arith.mulf %486, %500 : vector<1x2xf32>
    %525 = vector.broadcast %524 : vector<1x2xf32> to vector<16x2xf32>
    %526 = arith.mulf %525, %57 : vector<16x2xf32>
    %527 = arith.addf %523, %526 : vector<16x2xf32>
    %528 = arith.mulf %488, %500 : vector<1x2xf32>
    %529 = vector.broadcast %528 : vector<1x2xf32> to vector<16x2xf32>
    %530 = arith.mulf %529, %65 : vector<16x2xf32>
    %531 = arith.addf %527, %530 : vector<16x2xf32>
    %532 = vector.extract_strided_slice %531 {offsets = [0, 0], sizes = [9, 2], strides = [1, 1]} : vector<16x2xf32> to vector<9x2xf32>
    %c4_84 = arith.constant 4 : index
    %c0_85 = arith.constant 0 : index
    %c0_86 = arith.constant 0 : index
    %533 = vector.load %arg4[%c4_84, %c0_85, %c0_86] : memref<8x9x2xf32, #tpu.memory_space<vmem>>, vector<1x9x2xf32>
    %534 = vector.shape_cast %533 : vector<1x9x2xf32> to vector<9x2xf32>
    %535 = vector.shape_cast %532 : vector<9x2xf32> to vector<1x9x2xf32>
    tpu.vector_store %arg4[%c4_84, %c0_85, %c0_86], %535 {strides = array<i32>} : memref<8x9x2xf32, #tpu.memory_space<vmem>>, vector<1x9x2xf32>,
    %536 = arith.mulf %47, %8 : vector<16x2xf32>
    %cst_87 = arith.constant dense<0.000000e+00> : vector<2xf32>
    %537 = vector.multi_reduction <add>, %536, %cst_87 [0] : vector<16x2xf32> to vector<2xf32>
    %538 = vector.shape_cast %537 : vector<2xf32> to vector<1x2xf32>
    %539 = arith.mulf %47, %16 : vector<16x2xf32>
    %cst_88 = arith.constant dense<0.000000e+00> : vector<2xf32>
    %540 = vector.multi_reduction <add>, %539, %cst_88 [0] : vector<16x2xf32> to vector<2xf32>
    %541 = vector.shape_cast %540 : vector<2xf32> to vector<1x2xf32>
    %542 = arith.mulf %47, %24 : vector<16x2xf32>
    %cst_89 = arith.constant dense<0.000000e+00> : vector<2xf32>
    %543 = vector.multi_reduction <add>, %542, %cst_89 [0] : vector<16x2xf32> to vector<2xf32>
    %544 = vector.shape_cast %543 : vector<2xf32> to vector<1x2xf32>
    %545 = arith.mulf %47, %32 : vector<16x2xf32>
    %cst_90 = arith.constant dense<0.000000e+00> : vector<2xf32>
    %546 = vector.multi_reduction <add>, %545, %cst_90 [0] : vector<16x2xf32> to vector<2xf32>
    %547 = vector.shape_cast %546 : vector<2xf32> to vector<1x2xf32>
    %548 = arith.mulf %47, %40 : vector<16x2xf32>
    %cst_91 = arith.constant dense<0.000000e+00> : vector<2xf32>
    %549 = vector.multi_reduction <add>, %548, %cst_91 [0] : vector<16x2xf32> to vector<2xf32>
    %550 = vector.shape_cast %549 : vector<2xf32> to vector<1x2xf32>
    %551 = arith.mulf %47, %48 : vector<16x2xf32>
    %cst_92 = arith.constant dense<0.000000e+00> : vector<2xf32>
    %552 = vector.multi_reduction <add>, %551, %cst_92 [0] : vector<16x2xf32> to vector<2xf32>
    %553 = vector.shape_cast %552 : vector<2xf32> to vector<1x2xf32>
    %554 = arith.mulf %47, %56 : vector<16x2xf32>
    %cst_93 = arith.constant dense<0.000000e+00> : vector<2xf32>
    %555 = vector.multi_reduction <add>, %554, %cst_93 [0] : vector<16x2xf32> to vector<2xf32>
    %556 = vector.shape_cast %555 : vector<2xf32> to vector<1x2xf32>
    %557 = arith.mulf %47, %64 : vector<16x2xf32>
    %cst_94 = arith.constant dense<0.000000e+00> : vector<2xf32>
    %558 = vector.multi_reduction <add>, %557, %cst_94 [0] : vector<16x2xf32> to vector<2xf32>
    %559 = vector.shape_cast %558 : vector<2xf32> to vector<1x2xf32>
    %560 = arith.maximumf %538, %541 : vector<1x2xf32>
    %561 = arith.maximumf %560, %544 : vector<1x2xf32>
    %562 = arith.maximumf %561, %547 : vector<1x2xf32>
    %563 = arith.maximumf %562, %550 : vector<1x2xf32>
    %564 = arith.maximumf %563, %553 : vector<1x2xf32>
    %565 = arith.maximumf %564, %556 : vector<1x2xf32>
    %566 = arith.maximumf %565, %559 : vector<1x2xf32>
    %567 = arith.subf %538, %566 : vector<1x2xf32>
    %568 = math.exp %567 : vector<1x2xf32>
    %569 = arith.subf %541, %566 : vector<1x2xf32>
    %570 = math.exp %569 : vector<1x2xf32>
    %571 = arith.subf %544, %566 : vector<1x2xf32>
    %572 = math.exp %571 : vector<1x2xf32>
    %573 = arith.subf %547, %566 : vector<1x2xf32>
    %574 = math.exp %573 : vector<1x2xf32>
    %575 = arith.subf %550, %566 : vector<1x2xf32>
    %576 = math.exp %575 : vector<1x2xf32>
    %577 = arith.subf %553, %566 : vector<1x2xf32>
    %578 = math.exp %577 : vector<1x2xf32>
    %579 = arith.subf %556, %566 : vector<1x2xf32>
    %580 = math.exp %579 : vector<1x2xf32>
    %581 = arith.subf %559, %566 : vector<1x2xf32>
    %582 = math.exp %581 : vector<1x2xf32>
    %583 = arith.addf %568, %570 : vector<1x2xf32>
    %584 = arith.addf %583, %572 : vector<1x2xf32>
    %585 = arith.addf %584, %574 : vector<1x2xf32>
    %586 = arith.addf %585, %576 : vector<1x2xf32>
    %587 = arith.addf %586, %578 : vector<1x2xf32>
    %588 = arith.addf %587, %580 : vector<1x2xf32>
    %589 = arith.addf %588, %582 : vector<1x2xf32>
    %590 = tpu.reciprocal %589 {approx = true} : vector<1x2xf32> -> vector<1x2xf32>
    %591 = arith.mulf %589, %590 : vector<1x2xf32>
    %cst_95 = arith.constant 2.000000e+00 : f32
    %592 = vector.broadcast %cst_95 : f32 to vector<1x2xf32>
    %593 = arith.subf %592, %591 : vector<1x2xf32>
    %594 = arith.mulf %590, %593 : vector<1x2xf32>
    %595 = arith.mulf %568, %594 : vector<1x2xf32>
    %596 = vector.broadcast %595 : vector<1x2xf32> to vector<16x2xf32>
    %597 = arith.mulf %596, %9 : vector<16x2xf32>
    %598 = arith.mulf %570, %594 : vector<1x2xf32>
    %599 = vector.broadcast %598 : vector<1x2xf32> to vector<16x2xf32>
    %600 = arith.mulf %599, %17 : vector<16x2xf32>
    %601 = arith.addf %597, %600 : vector<16x2xf32>
    %602 = arith.mulf %572, %594 : vector<1x2xf32>
    %603 = vector.broadcast %602 : vector<1x2xf32> to vector<16x2xf32>
    %604 = arith.mulf %603, %25 : vector<16x2xf32>
    %605 = arith.addf %601, %604 : vector<16x2xf32>
    %606 = arith.mulf %574, %594 : vector<1x2xf32>
    %607 = vector.broadcast %606 : vector<1x2xf32> to vector<16x2xf32>
    %608 = arith.mulf %607, %33 : vector<16x2xf32>
    %609 = arith.addf %605, %608 : vector<16x2xf32>
    %610 = arith.mulf %576, %594 : vector<1x2xf32>
    %611 = vector.broadcast %610 : vector<1x2xf32> to vector<16x2xf32>
    %612 = arith.mulf %611, %41 : vector<16x2xf32>
    %613 = arith.addf %609, %612 : vector<16x2xf32>
    %614 = arith.mulf %578, %594 : vector<1x2xf32>
    %615 = vector.broadcast %614 : vector<1x2xf32> to vector<16x2xf32>
    %616 = arith.mulf %615, %49 : vector<16x2xf32>
    %617 = arith.addf %613, %616 : vector<16x2xf32>
    %618 = arith.mulf %580, %594 : vector<1x2xf32>
    %619 = vector.broadcast %618 : vector<1x2xf32> to vector<16x2xf32>
    %620 = arith.mulf %619, %57 : vector<16x2xf32>
    %621 = arith.addf %617, %620 : vector<16x2xf32>
    %622 = arith.mulf %582, %594 : vector<1x2xf32>
    %623 = vector.broadcast %622 : vector<1x2xf32> to vector<16x2xf32>
    %624 = arith.mulf %623, %65 : vector<16x2xf32>
    %625 = arith.addf %621, %624 : vector<16x2xf32>
    %626 = vector.extract_strided_slice %625 {offsets = [0, 0], sizes = [9, 2], strides = [1, 1]} : vector<16x2xf32> to vector<9x2xf32>
    %c5_96 = arith.constant 5 : index
    %c0_97 = arith.constant 0 : index
    %c0_98 = arith.constant 0 : index
    %627 = vector.load %arg4[%c5_96, %c0_97, %c0_98] : memref<8x9x2xf32, #tpu.memory_space<vmem>>, vector<1x9x2xf32>
    %628 = vector.shape_cast %627 : vector<1x9x2xf32> to vector<9x2xf32>
    %629 = vector.shape_cast %626 : vector<9x2xf32> to vector<1x9x2xf32>
    tpu.vector_store %arg4[%c5_96, %c0_97, %c0_98], %629 {strides = array<i32>} : memref<8x9x2xf32, #tpu.memory_space<vmem>>, vector<1x9x2xf32>,
    %630 = arith.mulf %55, %8 : vector<16x2xf32>
    %cst_99 = arith.constant dense<0.000000e+00> : vector<2xf32>
    %631 = vector.multi_reduction <add>, %630, %cst_99 [0] : vector<16x2xf32> to vector<2xf32>
    %632 = vector.shape_cast %631 : vector<2xf32> to vector<1x2xf32>
    %633 = arith.mulf %55, %16 : vector<16x2xf32>
    %cst_100 = arith.constant dense<0.000000e+00> : vector<2xf32>
    %634 = vector.multi_reduction <add>, %633, %cst_100 [0] : vector<16x2xf32> to vector<2xf32>
    %635 = vector.shape_cast %634 : vector<2xf32> to vector<1x2xf32>
    %636 = arith.mulf %55, %24 : vector<16x2xf32>
    %cst_101 = arith.constant dense<0.000000e+00> : vector<2xf32>
    %637 = vector.multi_reduction <add>, %636, %cst_101 [0] : vector<16x2xf32> to vector<2xf32>
    %638 = vector.shape_cast %637 : vector<2xf32> to vector<1x2xf32>
    %639 = arith.mulf %55, %32 : vector<16x2xf32>
    %cst_102 = arith.constant dense<0.000000e+00> : vector<2xf32>
    %640 = vector.multi_reduction <add>, %639, %cst_102 [0] : vector<16x2xf32> to vector<2xf32>
    %641 = vector.shape_cast %640 : vector<2xf32> to vector<1x2xf32>
    %642 = arith.mulf %55, %40 : vector<16x2xf32>
    %cst_103 = arith.constant dense<0.000000e+00> : vector<2xf32>
    %643 = vector.multi_reduction <add>, %642, %cst_103 [0] : vector<16x2xf32> to vector<2xf32>
    %644 = vector.shape_cast %643 : vector<2xf32> to vector<1x2xf32>
    %645 = arith.mulf %55, %48 : vector<16x2xf32>
    %cst_104 = arith.constant dense<0.000000e+00> : vector<2xf32>
    %646 = vector.multi_reduction <add>, %645, %cst_104 [0] : vector<16x2xf32> to vector<2xf32>
    %647 = vector.shape_cast %646 : vector<2xf32> to vector<1x2xf32>
    %648 = arith.mulf %55, %56 : vector<16x2xf32>
    %cst_105 = arith.constant dense<0.000000e+00> : vector<2xf32>
    %649 = vector.multi_reduction <add>, %648, %cst_105 [0] : vector<16x2xf32> to vector<2xf32>
    %650 = vector.shape_cast %649 : vector<2xf32> to vector<1x2xf32>
    %651 = arith.mulf %55, %64 : vector<16x2xf32>
    %cst_106 = arith.constant dense<0.000000e+00> : vector<2xf32>
    %652 = vector.multi_reduction <add>, %651, %cst_106 [0] : vector<16x2xf32> to vector<2xf32>
    %653 = vector.shape_cast %652 : vector<2xf32> to vector<1x2xf32>
    %654 = arith.maximumf %632, %635 : vector<1x2xf32>
    %655 = arith.maximumf %654, %638 : vector<1x2xf32>
    %656 = arith.maximumf %655, %641 : vector<1x2xf32>
    %657 = arith.maximumf %656, %644 : vector<1x2xf32>
    %658 = arith.maximumf %657, %647 : vector<1x2xf32>
    %659 = arith.maximumf %658, %650 : vector<1x2xf32>
    %660 = arith.maximumf %659, %653 : vector<1x2xf32>
    %661 = arith.subf %632, %660 : vector<1x2xf32>
    %662 = math.exp %661 : vector<1x2xf32>
    %663 = arith.subf %635, %660 : vector<1x2xf32>
    %664 = math.exp %663 : vector<1x2xf32>
    %665 = arith.subf %638, %660 : vector<1x2xf32>
    %666 = math.exp %665 : vector<1x2xf32>
    %667 = arith.subf %641, %660 : vector<1x2xf32>
    %668 = math.exp %667 : vector<1x2xf32>
    %669 = arith.subf %644, %660 : vector<1x2xf32>
    %670 = math.exp %669 : vector<1x2xf32>
    %671 = arith.subf %647, %660 : vector<1x2xf32>
    %672 = math.exp %671 : vector<1x2xf32>
    %673 = arith.subf %650, %660 : vector<1x2xf32>
    %674 = math.exp %673 : vector<1x2xf32>
    %675 = arith.subf %653, %660 : vector<1x2xf32>
    %676 = math.exp %675 : vector<1x2xf32>
    %677 = arith.addf %662, %664 : vector<1x2xf32>
    %678 = arith.addf %677, %666 : vector<1x2xf32>
    %679 = arith.addf %678, %668 : vector<1x2xf32>
    %680 = arith.addf %679, %670 : vector<1x2xf32>
    %681 = arith.addf %680, %672 : vector<1x2xf32>
    %682 = arith.addf %681, %674 : vector<1x2xf32>
    %683 = arith.addf %682, %676 : vector<1x2xf32>
    %684 = tpu.reciprocal %683 {approx = true} : vector<1x2xf32> -> vector<1x2xf32>
    %685 = arith.mulf %683, %684 : vector<1x2xf32>
    %cst_107 = arith.constant 2.000000e+00 : f32
    %686 = vector.broadcast %cst_107 : f32 to vector<1x2xf32>
    %687 = arith.subf %686, %685 : vector<1x2xf32>
    %688 = arith.mulf %684, %687 : vector<1x2xf32>
    %689 = arith.mulf %662, %688 : vector<1x2xf32>
    %690 = vector.broadcast %689 : vector<1x2xf32> to vector<16x2xf32>
    %691 = arith.mulf %690, %9 : vector<16x2xf32>
    %692 = arith.mulf %664, %688 : vector<1x2xf32>
    %693 = vector.broadcast %692 : vector<1x2xf32> to vector<16x2xf32>
    %694 = arith.mulf %693, %17 : vector<16x2xf32>
    %695 = arith.addf %691, %694 : vector<16x2xf32>
    %696 = arith.mulf %666, %688 : vector<1x2xf32>
    %697 = vector.broadcast %696 : vector<1x2xf32> to vector<16x2xf32>
    %698 = arith.mulf %697, %25 : vector<16x2xf32>
    %699 = arith.addf %695, %698 : vector<16x2xf32>
    %700 = arith.mulf %668, %688 : vector<1x2xf32>
    %701 = vector.broadcast %700 : vector<1x2xf32> to vector<16x2xf32>
    %702 = arith.mulf %701, %33 : vector<16x2xf32>
    %703 = arith.addf %699, %702 : vector<16x2xf32>
    %704 = arith.mulf %670, %688 : vector<1x2xf32>
    %705 = vector.broadcast %704 : vector<1x2xf32> to vector<16x2xf32>
    %706 = arith.mulf %705, %41 : vector<16x2xf32>
    %707 = arith.addf %703, %706 : vector<16x2xf32>
    %708 = arith.mulf %672, %688 : vector<1x2xf32>
    %709 = vector.broadcast %708 : vector<1x2xf32> to vector<16x2xf32>
    %710 = arith.mulf %709, %49 : vector<16x2xf32>
    %711 = arith.addf %707, %710 : vector<16x2xf32>
    %712 = arith.mulf %674, %688 : vector<1x2xf32>
    %713 = vector.broadcast %712 : vector<1x2xf32> to vector<16x2xf32>
    %714 = arith.mulf %713, %57 : vector<16x2xf32>
    %715 = arith.addf %711, %714 : vector<16x2xf32>
    %716 = arith.mulf %676, %688 : vector<1x2xf32>
    %717 = vector.broadcast %716 : vector<1x2xf32> to vector<16x2xf32>
    %718 = arith.mulf %717, %65 : vector<16x2xf32>
    %719 = arith.addf %715, %718 : vector<16x2xf32>
    %720 = vector.extract_strided_slice %719 {offsets = [0, 0], sizes = [9, 2], strides = [1, 1]} : vector<16x2xf32> to vector<9x2xf32>
    %c6_108 = arith.constant 6 : index
    %c0_109 = arith.constant 0 : index
    %c0_110 = arith.constant 0 : index
    %721 = vector.load %arg4[%c6_108, %c0_109, %c0_110] : memref<8x9x2xf32, #tpu.memory_space<vmem>>, vector<1x9x2xf32>
    %722 = vector.shape_cast %721 : vector<1x9x2xf32> to vector<9x2xf32>
    %723 = vector.shape_cast %720 : vector<9x2xf32> to vector<1x9x2xf32>
    tpu.vector_store %arg4[%c6_108, %c0_109, %c0_110], %723 {strides = array<i32>} : memref<8x9x2xf32, #tpu.memory_space<vmem>>, vector<1x9x2xf32>,
    %724 = arith.mulf %63, %8 : vector<16x2xf32>
    %cst_111 = arith.constant dense<0.000000e+00> : vector<2xf32>
    %725 = vector.multi_reduction <add>, %724, %cst_111 [0] : vector<16x2xf32> to vector<2xf32>
    %726 = vector.shape_cast %725 : vector<2xf32> to vector<1x2xf32>
    %727 = arith.mulf %63, %16 : vector<16x2xf32>
    %cst_112 = arith.constant dense<0.000000e+00> : vector<2xf32>
    %728 = vector.multi_reduction <add>, %727, %cst_112 [0] : vector<16x2xf32> to vector<2xf32>
    %729 = vector.shape_cast %728 : vector<2xf32> to vector<1x2xf32>
    %730 = arith.mulf %63, %24 : vector<16x2xf32>
    %cst_113 = arith.constant dense<0.000000e+00> : vector<2xf32>
    %731 = vector.multi_reduction <add>, %730, %cst_113 [0] : vector<16x2xf32> to vector<2xf32>
    %732 = vector.shape_cast %731 : vector<2xf32> to vector<1x2xf32>
    %733 = arith.mulf %63, %32 : vector<16x2xf32>
    %cst_114 = arith.constant dense<0.000000e+00> : vector<2xf32>
    %734 = vector.multi_reduction <add>, %733, %cst_114 [0] : vector<16x2xf32> to vector<2xf32>
    %735 = vector.shape_cast %734 : vector<2xf32> to vector<1x2xf32>
    %736 = arith.mulf %63, %40 : vector<16x2xf32>
    %cst_115 = arith.constant dense<0.000000e+00> : vector<2xf32>
    %737 = vector.multi_reduction <add>, %736, %cst_115 [0] : vector<16x2xf32> to vector<2xf32>
    %738 = vector.shape_cast %737 : vector<2xf32> to vector<1x2xf32>
    %739 = arith.mulf %63, %48 : vector<16x2xf32>
    %cst_116 = arith.constant dense<0.000000e+00> : vector<2xf32>
    %740 = vector.multi_reduction <add>, %739, %cst_116 [0] : vector<16x2xf32> to vector<2xf32>
    %741 = vector.shape_cast %740 : vector<2xf32> to vector<1x2xf32>
    %742 = arith.mulf %63, %56 : vector<16x2xf32>
    %cst_117 = arith.constant dense<0.000000e+00> : vector<2xf32>
    %743 = vector.multi_reduction <add>, %742, %cst_117 [0] : vector<16x2xf32> to vector<2xf32>
    %744 = vector.shape_cast %743 : vector<2xf32> to vector<1x2xf32>
    %745 = arith.mulf %63, %64 : vector<16x2xf32>
    %cst_118 = arith.constant dense<0.000000e+00> : vector<2xf32>
    %746 = vector.multi_reduction <add>, %745, %cst_118 [0] : vector<16x2xf32> to vector<2xf32>
    %747 = vector.shape_cast %746 : vector<2xf32> to vector<1x2xf32>
    %748 = arith.maximumf %726, %729 : vector<1x2xf32>
    %749 = arith.maximumf %748, %732 : vector<1x2xf32>
    %750 = arith.maximumf %749, %735 : vector<1x2xf32>
    %751 = arith.maximumf %750, %738 : vector<1x2xf32>
    %752 = arith.maximumf %751, %741 : vector<1x2xf32>
    %753 = arith.maximumf %752, %744 : vector<1x2xf32>
    %754 = arith.maximumf %753, %747 : vector<1x2xf32>
    %755 = arith.subf %726, %754 : vector<1x2xf32>
    %756 = math.exp %755 : vector<1x2xf32>
    %757 = arith.subf %729, %754 : vector<1x2xf32>
    %758 = math.exp %757 : vector<1x2xf32>
    %759 = arith.subf %732, %754 : vector<1x2xf32>
    %760 = math.exp %759 : vector<1x2xf32>
    %761 = arith.subf %735, %754 : vector<1x2xf32>
    %762 = math.exp %761 : vector<1x2xf32>
    %763 = arith.subf %738, %754 : vector<1x2xf32>
    %764 = math.exp %763 : vector<1x2xf32>
    %765 = arith.subf %741, %754 : vector<1x2xf32>
    %766 = math.exp %765 : vector<1x2xf32>
    %767 = arith.subf %744, %754 : vector<1x2xf32>
    %768 = math.exp %767 : vector<1x2xf32>
    %769 = arith.subf %747, %754 : vector<1x2xf32>
    %770 = math.exp %769 : vector<1x2xf32>
    %771 = arith.addf %756, %758 : vector<1x2xf32>
    %772 = arith.addf %771, %760 : vector<1x2xf32>
    %773 = arith.addf %772, %762 : vector<1x2xf32>
    %774 = arith.addf %773, %764 : vector<1x2xf32>
    %775 = arith.addf %774, %766 : vector<1x2xf32>
    %776 = arith.addf %775, %768 : vector<1x2xf32>
    %777 = arith.addf %776, %770 : vector<1x2xf32>
    %778 = tpu.reciprocal %777 {approx = true} : vector<1x2xf32> -> vector<1x2xf32>
    %779 = arith.mulf %777, %778 : vector<1x2xf32>
    %cst_119 = arith.constant 2.000000e+00 : f32
    %780 = vector.broadcast %cst_119 : f32 to vector<1x2xf32>
    %781 = arith.subf %780, %779 : vector<1x2xf32>
    %782 = arith.mulf %778, %781 : vector<1x2xf32>
    %783 = arith.mulf %756, %782 : vector<1x2xf32>
    %784 = vector.broadcast %783 : vector<1x2xf32> to vector<16x2xf32>
    %785 = arith.mulf %784, %9 : vector<16x2xf32>
    %786 = arith.mulf %758, %782 : vector<1x2xf32>
    %787 = vector.broadcast %786 : vector<1x2xf32> to vector<16x2xf32>
    %788 = arith.mulf %787, %17 : vector<16x2xf32>
    %789 = arith.addf %785, %788 : vector<16x2xf32>
    %790 = arith.mulf %760, %782 : vector<1x2xf32>
    %791 = vector.broadcast %790 : vector<1x2xf32> to vector<16x2xf32>
    %792 = arith.mulf %791, %25 : vector<16x2xf32>
    %793 = arith.addf %789, %792 : vector<16x2xf32>
    %794 = arith.mulf %762, %782 : vector<1x2xf32>
    %795 = vector.broadcast %794 : vector<1x2xf32> to vector<16x2xf32>
    %796 = arith.mulf %795, %33 : vector<16x2xf32>
    %797 = arith.addf %793, %796 : vector<16x2xf32>
    %798 = arith.mulf %764, %782 : vector<1x2xf32>
    %799 = vector.broadcast %798 : vector<1x2xf32> to vector<16x2xf32>
    %800 = arith.mulf %799, %41 : vector<16x2xf32>
    %801 = arith.addf %797, %800 : vector<16x2xf32>
    %802 = arith.mulf %766, %782 : vector<1x2xf32>
    %803 = vector.broadcast %802 : vector<1x2xf32> to vector<16x2xf32>
    %804 = arith.mulf %803, %49 : vector<16x2xf32>
    %805 = arith.addf %801, %804 : vector<16x2xf32>
    %806 = arith.mulf %768, %782 : vector<1x2xf32>
    %807 = vector.broadcast %806 : vector<1x2xf32> to vector<16x2xf32>
    %808 = arith.mulf %807, %57 : vector<16x2xf32>
    %809 = arith.addf %805, %808 : vector<16x2xf32>
    %810 = arith.mulf %770, %782 : vector<1x2xf32>
    %811 = vector.broadcast %810 : vector<1x2xf32> to vector<16x2xf32>
    %812 = arith.mulf %811, %65 : vector<16x2xf32>
    %813 = arith.addf %809, %812 : vector<16x2xf32>
    %814 = vector.extract_strided_slice %813 {offsets = [0, 0], sizes = [9, 2], strides = [1, 1]} : vector<16x2xf32> to vector<9x2xf32>
    %c7_120 = arith.constant 7 : index
    %c0_121 = arith.constant 0 : index
    %c0_122 = arith.constant 0 : index
    %815 = vector.load %arg4[%c7_120, %c0_121, %c0_122] : memref<8x9x2xf32, #tpu.memory_space<vmem>>, vector<1x9x2xf32>
    %816 = vector.shape_cast %815 : vector<1x9x2xf32> to vector<9x2xf32>
    %817 = vector.shape_cast %814 : vector<9x2xf32> to vector<1x9x2xf32>
    tpu.vector_store %arg4[%c7_120, %c0_121, %c0_122], %817 {strides = array<i32>} : memref<8x9x2xf32, #tpu.memory_space<vmem>>, vector<1x9x2xf32>,
    return
  }
  func.func @transform_0(%arg0: i32) -> (i32, i32, i32) {
    %c0_i32 = arith.constant 0 : i32
    %c0_i32_0 = arith.constant 0 : i32
    %c0_i32_1 = arith.constant 0 : i32
    return %c0_i32, %c0_i32_0, %arg0 : i32, i32, i32
  }
  func.func @transform_1(%arg0: i32) -> (i32, i32) {
    %c0_i32 = arith.constant 0 : i32
    %c0_i32_0 = arith.constant 0 : i32
    %c0_i32_1 = arith.constant 0 : i32
    return %c0_i32, %c0_i32_0 : i32, i32
  }
  func.func @transform_2(%arg0: i32) -> (i32, i32) {
    %c0_i32 = arith.constant 0 : i32
    %c0_i32_0 = arith.constant 0 : i32
    %c0_i32_1 = arith.constant 0 : i32
    return %c0_i32, %c0_i32_0 : i32, i32
  }
  func.func @transform_3(%arg0: i32) -> (i32, i32, i32) {
    %c0_i32 = arith.constant 0 : i32
    %c0_i32_0 = arith.constant 0 : i32
    %c0_i32_1 = arith.constant 0 : i32
    return %c0_i32, %c0_i32_0, %arg0 : i32, i32, i32
  }
}

</mosaic_0001>

<llo_original>
// kernel: magic_forward.1
$region0: #{magic_forward.1}
  #allocation0 [shape = 'u32[]', space=smem, size = 0x4, offset = 0x4, fixed_abs, tag = 'smem constant byte address 0x4 - core index']
  #allocation1 [shape = 'u32[144,128]{1,0:T(1,128)}', space=vmem, size = 0x12000, scoped, tag = 'internal scratch']
  %s0 = inlined_call_operand.vmem [shape: f32[8,9,2], index: 0, kind: input, shape index: {}]
  %s1 = inlined_call_operand.vmem [shape: f32[48,9], index: 1, kind: input, shape index: {}]
  %s2 = inlined_call_operand.vmem [shape: f32[48,1], index: 2, kind: input, shape index: {}]
  %s3 = inlined_call_operand.vmem [shape: f32[8,9,2], index: 3, kind: output, shape index: {}]
  %s4 = sld [smem:[#allocation0]]
  $region22: #{magic_forward.1} parent=0
    _
  %s6 = ssub.s32 1, %s4
  %s7 = scalar_select 0, %s6, %s4
  // Predicated region
  $region2: #{magic_forward.1} parent=0 // pred_check
    _
  $region3: #{magic_forward.1} parent=0 // pred_check_branch
    %9 = sbr.rel (0) target = $region5
  $region4: #{magic_forward.1} parent=0 // pred_region
    _
  $region5: #{magic_forward.1} parent=0 // pred_fallthru
    _
  // Predicated region
  $region6: #{magic_forward.1} parent=0 // pred_check
    _
  $region7: #{magic_forward.1} parent=0 // pred_check_branch
    %11 = sbr.rel (0) target = $region9
  $region8: #{magic_forward.1} parent=0 // pred_region
    _
  $region9: #{magic_forward.1} parent=0 // pred_fallthru
    _
  // Predicated region
  $region10: #{magic_forward.1} parent=0 // pred_check
    _
  $region11: #{magic_forward.1} parent=0 // pred_check_branch
    %13 = sbr.rel (0) target = $region13
  $region12: #{magic_forward.1} parent=0 // pred_region
    _
  $region13: #{magic_forward.1} parent=0 // pred_fallthru
    _
  %v14 = vld [vmem:[%s1] sm:$0xff]
  %v15 = vld [vmem:[%s1 + $0x8] sm:$0xff]
  %v16 = vld [vmem:[%s1 + $0x10] sm:$0xff]
  %v17 = vld [vmem:[%s1 + $0x18] sm:$0xff]
  %v18 = vld [vmem:[%s1 + $0x20] sm:$0xff]
  %v19 = vld [vmem:[%s1 + $0x28] sm:$0xff]
  %v20 = vld [vmem:[%s2] sm:$0xff]
  %v21 = vld [vmem:[%s2 + $0x8] sm:$0xff]
  %v22 = vld [vmem:[%s2 + $0x10] sm:$0xff]
  %v23 = vld [vmem:[%s2 + $0x18] sm:$0xff]
  %v24 = vld [vmem:[%s2 + $0x20] sm:$0xff]
  %v25 = vld [vmem:[%s2 + $0x28] sm:$0xff]
  %v26 = vld [vmem:[%s0] sm:$0xff]
  %v27 = vld [vmem:[%s0 + $0x8] sm:$0x1]
  %29 = vset.pattern.permute.xlu0 0
  %30 = vperm.xlu0 %29, %v20
  %v31 = vpop.permute.xlu0 %30
  %34 = vset.pattern.permute.xlu0 0
  %35 = vperm.xlu0 %34, %v21
  %v36 = vpop.permute.xlu0 %35
  %39 = vset.pattern.permute.xlu0 0
  %40 = vperm.xlu0 %39, %v22
  %v41 = vpop.permute.xlu0 %40
  %44 = vset.pattern.permute.xlu0 0
  %45 = vperm.xlu0 %44, %v23
  %v46 = vpop.permute.xlu0 %45
  %49 = vset.pattern.permute.xlu0 0
  %50 = vperm.xlu0 %49, %v24
  %v51 = vpop.permute.xlu0 %50
  %54 = vset.pattern.permute.xlu0 0
  %55 = vperm.xlu0 %54, %v25
  %v56 = vpop.permute.xlu0 %55
  %vm58 = vcmask 72704
  %v60 = vsel %vm58, %v14, 0
  %v63 = vsel %vm58, %v15, 0
  %v66 = vsel %vm58, %v16, 0
  %v69 = vsel %vm58, %v17, 0
  %v72 = vsel %vm58, %v18, 0
  %v75 = vsel %vm58, %v19, 0
  %vm77 = vcmask 1040384
  %v79 = vsel %vm77, %v27, 0
  %81 = vmatprep.subr.mxu0 0.0
  %82 = vmatpush1.msra.mxu0 %v26
  %83 = vmatprep.subr.mxu0 0.0
  %84 = vmatpush1.msra.mxu0 %v79
  %85 = vmatprep.subr.mxu0 0.0
  %86 = vmatpush1.msra.mxu0 0.0
  %87 = vmatprep.subr.mxu0 0.0
  %88 = vmatpush1.msra.mxu0 0.0
  %89 = vmatprep.subr.mxu0 0.0
  %90 = vmatpush1.msra.mxu0 0.0
  %91 = vmatprep.subr.mxu0 0.0
  %92 = vmatpush1.msra.mxu0 0.0
  %93 = vmatprep.subr.mxu0 0.0
  %94 = vmatpush1.msra.mxu0 0.0
  %95 = vmatprep.subr.mxu0 0.0
  %96 = vmatpush1.msra.mxu0 0.0
  %97 = vmatprep.subr.mxu0 0.0
  %98 = vmatpush1.msra.mxu0 0.0
  %99 = vmatprep.subr.mxu0 0.0
  %100 = vmatpush1.msra.mxu0 0.0
  %101 = vmatprep.subr.mxu0 0.0
  %102 = vmatpush1.msra.mxu0 0.0
  %103 = vmatprep.subr.mxu0 0.0
  %104 = vmatpush1.msra.mxu0 0.0
  %105 = vmatprep.subr.mxu0 0.0
  %106 = vmatpush1.msra.mxu0 0.0
  %107 = vmatprep.subr.mxu0 0.0
  %108 = vmatpush1.msra.mxu0 0.0
  %109 = vmatprep.subr.mxu0 0.0
  %110 = vmatpush1.msra.mxu0 0.0
  %111 = vmatprep.subr.mxu0 0.0
  %112 = vmatpush1.msra.mxu0 0.0
  %113 = vmatprep.subr.mxu0 0.0
  %114 = vmatpush1.msra.mxu0 0.0
  %115 = vmatprep.subr.mxu0 0.0
  %116 = vmatpush1.msra.mxu0 0.0
  %117 = vmatprep.subr.mxu0 0.0
  %118 = vmatpush1.msra.mxu0 0.0
  %119 = vmatprep.subr.mxu0 0.0
  %120 = vmatpush1.msra.mxu0 0.0
  %121 = vmatprep.subr.mxu0 0.0
  %122 = vmatpush1.msra.mxu0 0.0
  %123 = vmatprep.subr.mxu0 0.0
  %124 = vmatpush1.msra.mxu0 0.0
  %125 = vmatprep.subr.mxu0 0.0
  %126 = vmatpush1.msra.mxu0 0.0
  %127 = vmatprep.subr.mxu0 0.0
  %128 = vmatpush1.msra.mxu0 0.0
  %129 = vmatprep.subr.mxu0 0.0
  %130 = vmatpush1.msra.mxu0 0.0
  %131 = vmatprep.subr.mxu0 0.0
  %132 = vmatpush1.msra.mxu0 0.0
  %133 = vmatprep.subr.mxu0 0.0
  %134 = vmatpush1.msra.mxu0 0.0
  %135 = vmatprep.subr.mxu0 0.0
  %136 = vmatpush1.msra.mxu0 0.0
  %137 = vmatprep.subr.mxu0 0.0
  %138 = vmatpush1.msra.mxu0 0.0
  %139 = vmatprep.subr.mxu0 0.0
  %140 = vmatpush1.msra.mxu0 0.0
  %141 = vmatprep.subr.mxu0 0.0
  %142 = vmatpush1.msra.mxu0 0.0
  %143 = vmatprep.subr.mxu0 0.0
  %144 = vmatpush1.msra.mxu0 0.0
  %145 = vmatprep.mubr.f32.mxu0 0.0
  %146 = vmatmul.mubr.f32.gmra.mrb[0].mxu0 %v60
  %v147 = vpop.f32.mrb[0].mxu0
  %v148 = vadd.f32 %v31, %v147
  %v149 = vpop.f32.mrb[0].mxu0
  %150 = vmatprep.mubr.f32.mxu0 0.0
  %151 = vmatmul.mubr.f32.gmra.mrb[0].mxu0 %v63
  %v152 = vpop.f32.mrb[0].mxu0
  %v153 = vadd.f32 %v36, %v152
  %v154 = vpop.f32.mrb[0].mxu0
  %155 = vmatprep.mubr.f32.mxu0 0.0
  %156 = vmatmul.mubr.f32.gmra.mrb[0].mxu0 %v66
  %v157 = vpop.f32.mrb[0].mxu0
  %v158 = vadd.f32 %v41, %v157
  %v159 = vpop.f32.mrb[0].mxu0
  %160 = vmatprep.mubr.f32.mxu0 0.0
  %161 = vmatmul.mubr.f32.gmra.mrb[0].mxu0 %v69
  %v162 = vpop.f32.mrb[0].mxu0
  %v163 = vadd.f32 %v46, %v162
  %v164 = vpop.f32.mrb[0].mxu0
  %165 = vmatprep.mubr.f32.mxu0 0.0
  %166 = vmatmul.mubr.f32.gmra.mrb[0].mxu0 %v72
  %v167 = vpop.f32.mrb[0].mxu0
  %v168 = vadd.f32 %v51, %v167
  %v169 = vpop.f32.mrb[0].mxu0
  %170 = vmatprep.mubr.f32.mxu0 0.0
  %171 = vmatmul.mubr.f32.gmra.mrb[0].mxu0 %v75
  %v172 = vpop.f32.mrb[0].mxu0
  %v173 = vadd.f32 %v56, %v172
  %v174 = vpop.f32.mrb[0].mxu0
  %175 = vdwg.mxu0
  %s176 = scalar_lea.vmem %s0, 16
  %v177 = vld [vmem:[%s176] sm:$0xff]
  %v178 = vld [vmem:[%s176 + $0x8] sm:$0x1]
  %v180 = vsel %vm77, %v178, 0
  %182 = vmatprep.subr.mxu0 0.0
  %183 = vmatpush1.msra.mxu0 %v177
  %184 = vmatprep.subr.mxu0 0.0
  %185 = vmatpush1.msra.mxu0 %v180
  %186 = vmatprep.subr.mxu0 0.0
  %187 = vmatpush1.msra.mxu0 0.0
  %188 = vmatprep.subr.mxu0 0.0
  %189 = vmatpush1.msra.mxu0 0.0
  %190 = vmatprep.subr.mxu0 0.0
  %191 = vmatpush1.msra.mxu0 0.0
  %192 = vmatprep.subr.mxu0 0.0
  %193 = vmatpush1.msra.mxu0 0.0
  %194 = vmatprep.subr.mxu0 0.0
  %195 = vmatpush1.msra.mxu0 0.0
  %196 = vmatprep.subr.mxu0 0.0
  %197 = vmatpush1.msra.mxu0 0.0
  %198 = vmatprep.subr.mxu0 0.0
  %199 = vmatpush1.msra.mxu0 0.0
  %200 = vmatprep.subr.mxu0 0.0
  %201 = vmatpush1.msra.mxu0 0.0
  %202 = vmatprep.subr.mxu0 0.0
  %203 = vmatpush1.msra.mxu0 0.0
  %204 = vmatprep.subr.mxu0 0.0
  %205 = vmatpush1.msra.mxu0 0.0
  %206 = vmatprep.subr.mxu0 0.0
  %207 = vmatpush1.msra.mxu0 0.0
  %208 = vmatprep.subr.mxu0 0.0
  %209 = vmatpush1.msra.mxu0 0.0
  %210 = vmatprep.subr.mxu0 0.0
  %211 = vmatpush1.msra.mxu0 0.0
  %212 = vmatprep.subr.mxu0 0.0
  %213 = vmatpush1.msra.mxu0 0.0
  %214 = vmatprep.subr.mxu0 0.0
  %215 = vmatpush1.msra.mxu0 0.0
  %216 = vmatprep.subr.mxu0 0.0
  %217 = vmatpush1.msra.mxu0 0.0
  %218 = vmatprep.subr.mxu0 0.0
  %219 = vmatpush1.msra.mxu0 0.0
  %220 = vmatprep.subr.mxu0 0.0
  %221 = vmatpush1.msra.mxu0 0.0
  %222 = vmatprep.subr.mxu0 0.0
  %223 = vmatpush1.msra.mxu0 0.0
  %224 = vmatprep.subr.mxu0 0.0
  %225 = vmatpush1.msra.mxu0 0.0
  %226 = vmatprep.subr.mxu0 0.0
  %227 = vmatpush1.msra.mxu0 0.0
  %228 = vmatprep.subr.mxu0 0.0
  %229 = vmatpush1.msra.mxu0 0.0
  %230 = vmatprep.subr.mxu0 0.0
  %231 = vmatpush1.msra.mxu0 0.0
  %232 = vmatprep.subr.mxu0 0.0
  %233 = vmatpush1.msra.mxu0 0.0
  %234 = vmatprep.subr.mxu0 0.0
  %235 = vmatpush1.msra.mxu0 0.0
  %236 = vmatprep.subr.mxu0 0.0
  %237 = vmatpush1.msra.mxu0 0.0
  %238 = vmatprep.subr.mxu0 0.0
  %239 = vmatpush1.msra.mxu0 0.0
  %240 = vmatprep.subr.mxu0 0.0
  %241 = vmatpush1.msra.mxu0 0.0
  %242 = vmatprep.subr.mxu0 0.0
  %243 = vmatpush1.msra.mxu0 0.0
  %244 = vmatprep.subr.mxu0 0.0
  %245 = vmatpush1.msra.mxu0 0.0
  %246 = vmatprep.mubr.f32.mxu0 0.0
  %247 = vmatmul.mubr.f32.gmra.mrb[0].mxu0 %v60
  %v248 = vpop.f32.mrb[0].mxu0
  %v249 = vadd.f32 %v31, %v248
  %v250 = vpop.f32.mrb[0].mxu0
  %251 = vmatprep.mubr.f32.mxu0 0.0
  %252 = vmatmul.mubr.f32.gmra.mrb[0].mxu0 %v63
  %v253 = vpop.f32.mrb[0].mxu0
  %v254 = vadd.f32 %v36, %v253
  %v255 = vpop.f32.mrb[0].mxu0
  %256 = vmatprep.mubr.f32.mxu0 0.0
  %257 = vmatmul.mubr.f32.gmra.mrb[0].mxu0 %v66
  %v258 = vpop.f32.mrb[0].mxu0
  %v259 = vadd.f32 %v41, %v258
  %v260 = vpop.f32.mrb[0].mxu0
  %261 = vmatprep.mubr.f32.mxu0 0.0
  %262 = vmatmul.mubr.f32.gmra.mrb[0].mxu0 %v69
  %v263 = vpop.f32.mrb[0].mxu0
  %v264 = vadd.f32 %v46, %v263
  %v265 = vpop.f32.mrb[0].mxu0
  %266 = vmatprep.mubr.f32.mxu0 0.0
  %267 = vmatmul.mubr.f32.gmra.mrb[0].mxu0 %v72
  %v268 = vpop.f32.mrb[0].mxu0
  %v269 = vadd.f32 %v51, %v268
  %v270 = vpop.f32.mrb[0].mxu0
  %271 = vmatprep.mubr.f32.mxu0 0.0
  %272 = vmatmul.mubr.f32.gmra.mrb[0].mxu0 %v75
  %v273 = vpop.f32.mrb[0].mxu0
  %v274 = vadd.f32 %v56, %v273
  %v275 = vpop.f32.mrb[0].mxu0
  %276 = vdwg.mxu0
  %s277 = scalar_lea.vmem %s0, 32
  %v278 = vld [vmem:[%s277] sm:$0xff]
  %v279 = vld [vmem:[%s277 + $0x8] sm:$0x1]
  %v281 = vsel %vm77, %v279, 0
  %283 = vmatprep.subr.mxu0 0.0
  %284 = vmatpush1.msra.mxu0 %v278
  %285 = vmatprep.subr.mxu0 0.0
  %286 = vmatpush1.msra.mxu0 %v281
  %287 = vmatprep.subr.mxu0 0.0
  %288 = vmatpush1.msra.mxu0 0.0
  %289 = vmatprep.subr.mxu0 0.0
  %290 = vmatpush1.msra.mxu0 0.0
  %291 = vmatprep.subr.mxu0 0.0
  %292 = vmatpush1.msra.mxu0 0.0
  %293 = vmatprep.subr.mxu0 0.0
  %294 = vmatpush1.msra.mxu0 0.0
  %295 = vmatprep.subr.mxu0 0.0
  %296 = vmatpush1.msra.mxu0 0.0
  %297 = vmatprep.subr.mxu0 0.0
  %298 = vmatpush1.msra.mxu0 0.0
  %299 = vmatprep.subr.mxu0 0.0
  %300 = vmatpush1.msra.mxu0 0.0
  %301 = vmatprep.subr.mxu0 0.0
  %302 = vmatpush1.msra.mxu0 0.0
  %303 = vmatprep.subr.mxu0 0.0
  %304 = vmatpush1.msra.mxu0 0.0
  %305 = vmatprep.subr.mxu0 0.0
  %306 = vmatpush1.msra.mxu0 0.0
  %307 = vmatprep.subr.mxu0 0.0
  %308 = vmatpush1.msra.mxu0 0.0
  %309 = vmatprep.subr.mxu0 0.0
  %310 = vmatpush1.msra.mxu0 0.0
  %311 = vmatprep.subr.mxu0 0.0
  %312 = vmatpush1.msra.mxu0 0.0
  %313 = vmatprep.subr.mxu0 0.0
  %314 = vmatpush1.msra.mxu0 0.0
  %315 = vmatprep.subr.mxu0 0.0
  %316 = vmatpush1.msra.mxu0 0.0
  %317 = vmatprep.subr.mxu0 0.0
  %318 = vmatpush1.msra.mxu0 0.0
  %319 = vmatprep.subr.mxu0 0.0
  %320 = vmatpush1.msra.mxu0 0.0
  %321 = vmatprep.subr.mxu0 0.0
  %322 = vmatpush1.msra.mxu0 0.0
  %323 = vmatprep.subr.mxu0 0.0
  %324 = vmatpush1.msra.mxu0 0.0
  %325 = vmatprep.subr.mxu0 0.0
  %326 = vmatpush1.msra.mxu0 0.0
  %327 = vmatprep.subr.mxu0 0.0
  %328 = vmatpush1.msra.mxu0 0.0
  %329 = vmatprep.subr.mxu0 0.0
  %330 = vmatpush1.msra.mxu0 0.0
  %331 = vmatprep.subr.mxu0 0.0
  %332 = vmatpush1.msra.mxu0 0.0
  %333 = vmatprep.subr.mxu0 0.0
  %334 = vmatpush1.msra.mxu0 0.0
  %335 = vmatprep.subr.mxu0 0.0
  %336 = vmatpush1.msra.mxu0 0.0
  %337 = vmatprep.subr.mxu0 0.0
  %338 = vmatpush1.msra.mxu0 0.0
  %339 = vmatprep.subr.mxu0 0.0
  %340 = vmatpush1.msra.mxu0 0.0
  %341 = vmatprep.subr.mxu0 0.0
  %342 = vmatpush1.msra.mxu0 0.0
  %343 = vmatprep.subr.mxu0 0.0
  %344 = vmatpush1.msra.mxu0 0.0
  %345 = vmatprep.subr.mxu0 0.0
  %346 = vmatpush1.msra.mxu0 0.0
  %347 = vmatprep.mubr.f32.mxu0 0.0
  %348 = vmatmul.mubr.f32.gmra.mrb[0].mxu0 %v60
  %v349 = vpop.f32.mrb[0].mxu0
  %v350 = vadd.f32 %v31, %v349
  %v351 = vpop.f32.mrb[0].mxu0
  %352 = vmatprep.mubr.f32.mxu0 0.0
  %353 = vmatmul.mubr.f32.gmra.mrb[0].mxu0 %v63
  %v354 = vpop.f32.mrb[0].mxu0
  %v355 = vadd.f32 %v36, %v354
  %v356 = vpop.f32.mrb[0].mxu0
  %357 = vmatprep.mubr.f32.mxu0 0.0
  %358 = vmatmul.mubr.f32.gmra.mrb[0].mxu0 %v66
  %v359 = vpop.f32.mrb[0].mxu0
  %v360 = vadd.f32 %v41, %v359
  %v361 = vpop.f32.mrb[0].mxu0
  %362 = vmatprep.mubr.f32.mxu0 0.0
  %363 = vmatmul.mubr.f32.gmra.mrb[0].mxu0 %v69
  %v364 = vpop.f32.mrb[0].mxu0
  %v365 = vadd.f32 %v46, %v364
  %v366 = vpop.f32.mrb[0].mxu0
  %367 = vmatprep.mubr.f32.mxu0 0.0
  %368 = vmatmul.mubr.f32.gmra.mrb[0].mxu0 %v72
  %v369 = vpop.f32.mrb[0].mxu0
  %v370 = vadd.f32 %v51, %v369
  %v371 = vpop.f32.mrb[0].mxu0
  %372 = vmatprep.mubr.f32.mxu0 0.0
  %373 = vmatmul.mubr.f32.gmra.mrb[0].mxu0 %v75
  %v374 = vpop.f32.mrb[0].mxu0
  %v375 = vadd.f32 %v56, %v374
  %v376 = vpop.f32.mrb[0].mxu0
  %377 = vdwg.mxu0
  %s378 = scalar_lea.vmem %s0, 48
  %v379 = vld [vmem:[%s378] sm:$0xff]
  %v380 = vld [vmem:[%s378 + $0x8] sm:$0x1]
  %v382 = vsel %vm77, %v380, 0
  %384 = vmatprep.subr.mxu0 0.0
  %385 = vmatpush1.msra.mxu0 %v379
  %386 = vmatprep.subr.mxu0 0.0
  %387 = vmatpush1.msra.mxu0 %v382
  %388 = vmatprep.subr.mxu0 0.0
  %389 = vmatpush1.msra.mxu0 0.0
  %390 = vmatprep.subr.mxu0 0.0
  %391 = vmatpush1.msra.mxu0 0.0
  %392 = vmatprep.subr.mxu0 0.0
  %393 = vmatpush1.msra.mxu0 0.0
  %394 = vmatprep.subr.mxu0 0.0
  %395 = vmatpush1.msra.mxu0 0.0
  %396 = vmatprep.subr.mxu0 0.0
  %397 = vmatpush1.msra.mxu0 0.0
  %398 = vmatprep.subr.mxu0 0.0
  %399 = vmatpush1.msra.mxu0 0.0
  %400 = vmatprep.subr.mxu0 0.0
  %401 = vmatpush1.msra.mxu0 0.0
  %402 = vmatprep.subr.mxu0 0.0
  %403 = vmatpush1.msra.mxu0 0.0
  %404 = vmatprep.subr.mxu0 0.0
  %405 = vmatpush1.msra.mxu0 0.0
  %406 = vmatprep.subr.mxu0 0.0
  %407 = vmatpush1.msra.mxu0 0.0
  %408 = vmatprep.subr.mxu0 0.0
  %409 = vmatpush1.msra.mxu0 0.0
  %410 = vmatprep.subr.mxu0 0.0
  %411 = vmatpush1.msra.mxu0 0.0
  %412 = vmatprep.subr.mxu0 0.0
  %413 = vmatpush1.msra.mxu0 0.0
  %414 = vmatprep.subr.mxu0 0.0
  %415 = vmatpush1.msra.mxu0 0.0
  %416 = vmatprep.subr.mxu0 0.0
  %417 = vmatpush1.msra.mxu0 0.0
  %418 = vmatprep.subr.mxu0 0.0
  %419 = vmatpush1.msra.mxu0 0.0
  %420 = vmatprep.subr.mxu0 0.0
  %421 = vmatpush1.msra.mxu0 0.0
  %422 = vmatprep.subr.mxu0 0.0
  %423 = vmatpush1.msra.mxu0 0.0
  %424 = vmatprep.subr.mxu0 0.0
  %425 = vmatpush1.msra.mxu0 0.0
  %426 = vmatprep.subr.mxu0 0.0
  %427 = vmatpush1.msra.mxu0 0.0
  %428 = vmatprep.subr.mxu0 0.0
  %429 = vmatpush1.msra.mxu0 0.0
  %430 = vmatprep.subr.mxu0 0.0
  %431 = vmatpush1.msra.mxu0 0.0
  %432 = vmatprep.subr.mxu0 0.0
  %433 = vmatpush1.msra.mxu0 0.0
  %434 = vmatprep.subr.mxu0 0.0
  %435 = vmatpush1.msra.mxu0 0.0
  %436 = vmatprep.subr.mxu0 0.0
  %437 = vmatpush1.msra.mxu0 0.0
  %438 = vmatprep.subr.mxu0 0.0
  %439 = vmatpush1.msra.mxu0 0.0
  %440 = vmatprep.subr.mxu0 0.0
  %441 = vmatpush1.msra.mxu0 0.0
  %442 = vmatprep.subr.mxu0 0.0
  %443 = vmatpush1.msra.mxu0 0.0
  %444 = vmatprep.subr.mxu0 0.0
  %445 = vmatpush1.msra.mxu0 0.0
  %446 = vmatprep.subr.mxu0 0.0
  %447 = vmatpush1.msra.mxu0 0.0
  %448 = vmatprep.mubr.f32.mxu0 0.0
  %449 = vmatmul.mubr.f32.gmra.mrb[0].mxu0 %v60
  %v450 = vpop.f32.mrb[0].mxu0
  %v451 = vadd.f32 %v31, %v450
  %v452 = vpop.f32.mrb[0].mxu0
  %453 = vmatprep.mubr.f32.mxu0 0.0
  %454 = vmatmul.mubr.f32.gmra.mrb[0].mxu0 %v63
  %v455 = vpop.f32.mrb[0].mxu0
  %v456 = vadd.f32 %v36, %v455
  %v457 = vpop.f32.mrb[0].mxu0
  %458 = vmatprep.mubr.f32.mxu0 0.0
  %459 = vmatmul.mubr.f32.gmra.mrb[0].mxu0 %v66
  %v460 = vpop.f32.mrb[0].mxu0
  %v461 = vadd.f32 %v41, %v460
  %v462 = vpop.f32.mrb[0].mxu0
  %463 = vmatprep.mubr.f32.mxu0 0.0
  %464 = vmatmul.mubr.f32.gmra.mrb[0].mxu0 %v69
  %v465 = vpop.f32.mrb[0].mxu0
  %v466 = vadd.f32 %v46, %v465
  %v467 = vpop.f32.mrb[0].mxu0
  %468 = vmatprep.mubr.f32.mxu0 0.0
  %469 = vmatmul.mubr.f32.gmra.mrb[0].mxu0 %v72
  %v470 = vpop.f32.mrb[0].mxu0
  %v471 = vadd.f32 %v51, %v470
  %v472 = vpop.f32.mrb[0].mxu0
  %473 = vmatprep.mubr.f32.mxu0 0.0
  %474 = vmatmul.mubr.f32.gmra.mrb[0].mxu0 %v75
  %v475 = vpop.f32.mrb[0].mxu0
  %v476 = vadd.f32 %v56, %v475
  %v477 = vpop.f32.mrb[0].mxu0
  %478 = vdwg.mxu0
  %s479 = scalar_lea.vmem %s0, 64
  %v480 = vld [vmem:[%s479] sm:$0xff]
  %v481 = vld [vmem:[%s479 + $0x8] sm:$0x1]
  %v483 = vsel %vm77, %v481, 0
  %485 = vmatprep.subr.mxu0 0.0
  %486 = vmatpush1.msra.mxu0 %v480
  %487 = vmatprep.subr.mxu0 0.0
  %488 = vmatpush1.msra.mxu0 %v483
  %489 = vmatprep.subr.mxu0 0.0
  %490 = vmatpush1.msra.mxu0 0.0
  %491 = vmatprep.subr.mxu0 0.0
  %492 = vmatpush1.msra.mxu0 0.0
  %493 = vmatprep.subr.mxu0 0.0
  %494 = vmatpush1.msra.mxu0 0.0
  %495 = vmatprep.subr.mxu0 0.0
  %496 = vmatpush1.msra.mxu0 0.0
  %497 = vmatprep.subr.mxu0 0.0
  %498 = vmatpush1.msra.mxu0 0.0
  %499 = vmatprep.subr.mxu0 0.0
  %500 = vmatpush1.msra.mxu0 0.0
  %501 = vmatprep.subr.mxu0 0.0
  %502 = vmatpush1.msra.mxu0 0.0
  %503 = vmatprep.subr.mxu0 0.0
  %504 = vmatpush1.msra.mxu0 0.0
  %505 = vmatprep.subr.mxu0 0.0
  %506 = vmatpush1.msra.mxu0 0.0
  %507 = vmatprep.subr.mxu0 0.0
  %508 = vmatpush1.msra.mxu0 0.0
  %509 = vmatprep.subr.mxu0 0.0
  %510 = vmatpush1.msra.mxu0 0.0
  %511 = vmatprep.subr.mxu0 0.0
  %512 = vmatpush1.msra.mxu0 0.0
  %513 = vmatprep.subr.mxu0 0.0
  %514 = vmatpush1.msra.mxu0 0.0
  %515 = vmatprep.subr.mxu0 0.0
  %516 = vmatpush1.msra.mxu0 0.0
  %517 = vmatprep.subr.mxu0 0.0
  %518 = vmatpush1.msra.mxu0 0.0
  %519 = vmatprep.subr.mxu0 0.0
  %520 = vmatpush1.msra.mxu0 0.0
  %521 = vmatprep.subr.mxu0 0.0
  %522 = vmatpush1.msra.mxu0 0.0
  %523 = vmatprep.subr.mxu0 0.0
  %524 = vmatpush1.msra.mxu0 0.0
  %525 = vmatprep.subr.mxu0 0.0
  %526 = vmatpush1.msra.mxu0 0.0
  %527 = vmatprep.subr.mxu0 0.0
  %528 = vmatpush1.msra.mxu0 0.0
  %529 = vmatprep.subr.mxu0 0.0
  %530 = vmatpush1.msra.mxu0 0.0
  %531 = vmatprep.subr.mxu0 0.0
  %532 = vmatpush1.msra.mxu0 0.0
  %533 = vmatprep.subr.mxu0 0.0
  %534 = vmatpush1.msra.mxu0 0.0
  %535 = vmatprep.subr.mxu0 0.0
  %536 = vmatpush1.msra.mxu0 0.0
  %537 = vmatprep.subr.mxu0 0.0
  %538 = vmatpush1.msra.mxu0 0.0
  %539 = vmatprep.subr.mxu0 0.0
  %540 = vmatpush1.msra.mxu0 0.0
  %541 = vmatprep.subr.mxu0 0.0
  %542 = vmatpush1.msra.mxu0 0.0
  %543 = vmatprep.subr.mxu0 0.0
  %544 = vmatpush1.msra.mxu0 0.0
  %545 = vmatprep.subr.mxu0 0.0
  %546 = vmatpush1.msra.mxu0 0.0
  %547 = vmatprep.subr.mxu0 0.0
  %548 = vmatpush1.msra.mxu0 0.0
  %549 = vmatprep.mubr.f32.mxu0 0.0
  %550 = vmatmul.mubr.f32.gmra.mrb[0].mxu0 %v60
  %v551 = vpop.f32.mrb[0].mxu0
  %v552 = vadd.f32 %v31, %v551
  %v553 = vpop.f32.mrb[0].mxu0
  %554 = vmatprep.mubr.f32.mxu0 0.0
  %555 = vmatmul.mubr.f32.gmra.mrb[0].mxu0 %v63
  %v556 = vpop.f32.mrb[0].mxu0
  %v557 = vadd.f32 %v36, %v556
  %v558 = vpop.f32.mrb[0].mxu0
  %559 = vmatprep.mubr.f32.mxu0 0.0
  %560 = vmatmul.mubr.f32.gmra.mrb[0].mxu0 %v66
  %v561 = vpop.f32.mrb[0].mxu0
  %v562 = vadd.f32 %v41, %v561
  %v563 = vpop.f32.mrb[0].mxu0
  %564 = vmatprep.mubr.f32.mxu0 0.0
  %565 = vmatmul.mubr.f32.gmra.mrb[0].mxu0 %v69
  %v566 = vpop.f32.mrb[0].mxu0
  %v567 = vadd.f32 %v46, %v566
  %v568 = vpop.f32.mrb[0].mxu0
  %569 = vmatprep.mubr.f32.mxu0 0.0
  %570 = vmatmul.mubr.f32.gmra.mrb[0].mxu0 %v72
  %v571 = vpop.f32.mrb[0].mxu0
  %v572 = vadd.f32 %v51, %v571
  %v573 = vpop.f32.mrb[0].mxu0
  %574 = vmatprep.mubr.f32.mxu0 0.0
  %575 = vmatmul.mubr.f32.gmra.mrb[0].mxu0 %v75
  %v576 = vpop.f32.mrb[0].mxu0
  %v577 = vadd.f32 %v56, %v576
  %v578 = vpop.f32.mrb[0].mxu0
  %579 = vdwg.mxu0
  %s580 = scalar_lea.vmem %s0, 80
  %v581 = vld [vmem:[%s580] sm:$0xff]
  %v582 = vld [vmem:[%s580 + $0x8] sm:$0x1]
  %v584 = vsel %vm77, %v582, 0
  %586 = vmatprep.subr.mxu0 0.0
  %587 = vmatpush1.msra.mxu0 %v581
  %588 = vmatprep.subr.mxu0 0.0
  %589 = vmatpush1.msra.mxu0 %v584
  %590 = vmatprep.subr.mxu0 0.0
  %591 = vmatpush1.msra.mxu0 0.0
  %592 = vmatprep.subr.mxu0 0.0
  %593 = vmatpush1.msra.mxu0 0.0
  %594 = vmatprep.subr.mxu0 0.0
  %595 = vmatpush1.msra.mxu0 0.0
  %596 = vmatprep.subr.mxu0 0.0
  %597 = vmatpush1.msra.mxu0 0.0
  %598 = vmatprep.subr.mxu0 0.0
  %599 = vmatpush1.msra.mxu0 0.0
  %600 = vmatprep.subr.mxu0 0.0
  %601 = vmatpush1.msra.mxu0 0.0
  %602 = vmatprep.subr.mxu0 0.0
  %603 = vmatpush1.msra.mxu0 0.0
  %604 = vmatprep.subr.mxu0 0.0
  %605 = vmatpush1.msra.mxu0 0.0
  %606 = vmatprep.subr.mxu0 0.0
  %607 = vmatpush1.msra.mxu0 0.0
  %608 = vmatprep.subr.mxu0 0.0
  %609 = vmatpush1.msra.mxu0 0.0
  %610 = vmatprep.subr.mxu0 0.0
  %611 = vmatpush1.msra.mxu0 0.0
  %612 = vmatprep.subr.mxu0 0.0
  %613 = vmatpush1.msra.mxu0 0.0
  %614 = vmatprep.subr.mxu0 0.0
  %615 = vmatpush1.msra.mxu0 0.0
  %616 = vmatprep.subr.mxu0 0.0
  %617 = vmatpush1.msra.mxu0 0.0
  %618 = vmatprep.subr.mxu0 0.0
  %619 = vmatpush1.msra.mxu0 0.0
  %620 = vmatprep.subr.mxu0 0.0
  %621 = vmatpush1.msra.mxu0 0.0
  %622 = vmatprep.subr.mxu0 0.0
  %623 = vmatpush1.msra.mxu0 0.0
  %624 = vmatprep.subr.mxu0 0.0
  %625 = vmatpush1.msra.mxu0 0.0
  %626 = vmatprep.subr.mxu0 0.0
  %627 = vmatpush1.msra.mxu0 0.0
  %628 = vmatprep.subr.mxu0 0.0
  %629 = vmatpush1.msra.mxu0 0.0
  %630 = vmatprep.subr.mxu0 0.0
  %631 = vmatpush1.msra.mxu0 0.0
  %632 = vmatprep.subr.mxu0 0.0
  %633 = vmatpush1.msra.mxu0 0.0
  %634 = vmatprep.subr.mxu0 0.0
  %635 = vmatpush1.msra.mxu0 0.0
  %636 = vmatprep.subr.mxu0 0.0
  %637 = vmatpush1.msra.mxu0 0.0
  %638 = vmatprep.subr.mxu0 0.0
  %639 = vmatpush1.msra.mxu0 0.0
  %640 = vmatprep.subr.mxu0 0.0
  %641 = vmatpush1.msra.mxu0 0.0
  %642 = vmatprep.subr.mxu0 0.0
  %643 = vmatpush1.msra.mxu0 0.0
  %644 = vmatprep.subr.mxu0 0.0
  %645 = vmatpush1.msra.mxu0 0.0
  %646 = vmatprep.subr.mxu0 0.0
  %647 = vmatpush1.msra.mxu0 0.0
  %648 = vmatprep.subr.mxu0 0.0
  %649 = vmatpush1.msra.mxu0 0.0
  %650 = vmatprep.mubr.f32.mxu0 0.0
  %651 = vmatmul.mubr.f32.gmra.mrb[0].mxu0 %v60
  %v652 = vpop.f32.mrb[0].mxu0
  %v653 = vadd.f32 %v31, %v652
  %v654 = vpop.f32.mrb[0].mxu0
  %655 = vmatprep.mubr.f32.mxu0 0.0
  %656 = vmatmul.mubr.f32.gmra.mrb[0].mxu0 %v63
  %v657 = vpop.f32.mrb[0].mxu0
  %v658 = vadd.f32 %v36, %v657
  %v659 = vpop.f32.mrb[0].mxu0
  %660 = vmatprep.mubr.f32.mxu0 0.0
  %661 = vmatmul.mubr.f32.gmra.mrb[0].mxu0 %v66
  %v662 = vpop.f32.mrb[0].mxu0
  %v663 = vadd.f32 %v41, %v662
  %v664 = vpop.f32.mrb[0].mxu0
  %665 = vmatprep.mubr.f32.mxu0 0.0
  %666 = vmatmul.mubr.f32.gmra.mrb[0].mxu0 %v69
  %v667 = vpop.f32.mrb[0].mxu0
  %v668 = vadd.f32 %v46, %v667
  %v669 = vpop.f32.mrb[0].mxu0
  %670 = vmatprep.mubr.f32.mxu0 0.0
  %671 = vmatmul.mubr.f32.gmra.mrb[0].mxu0 %v72
  %v672 = vpop.f32.mrb[0].mxu0
  %v673 = vadd.f32 %v51, %v672
  %v674 = vpop.f32.mrb[0].mxu0
  %675 = vmatprep.mubr.f32.mxu0 0.0
  %676 = vmatmul.mubr.f32.gmra.mrb[0].mxu0 %v75
  %v677 = vpop.f32.mrb[0].mxu0
  %v678 = vadd.f32 %v56, %v677
  %v679 = vpop.f32.mrb[0].mxu0
  %680 = vdwg.mxu0
  %s681 = scalar_lea.vmem %s0, 96
  %v682 = vld [vmem:[%s681] sm:$0xff]
  %v683 = vld [vmem:[%s681 + $0x8] sm:$0x1]
  %v685 = vsel %vm77, %v683, 0
  %687 = vmatprep.subr.mxu0 0.0
  %688 = vmatpush1.msra.mxu0 %v682
  %689 = vmatprep.subr.mxu0 0.0
  %690 = vmatpush1.msra.mxu0 %v685
  %691 = vmatprep.subr.mxu0 0.0
  %692 = vmatpush1.msra.mxu0 0.0
  %693 = vmatprep.subr.mxu0 0.0
  %694 = vmatpush1.msra.mxu0 0.0
  %695 = vmatprep.subr.mxu0 0.0
  %696 = vmatpush1.msra.mxu0 0.0
  %697 = vmatprep.subr.mxu0 0.0
  %698 = vmatpush1.msra.mxu0 0.0
  %699 = vmatprep.subr.mxu0 0.0
  %700 = vmatpush1.msra.mxu0 0.0
  %701 = vmatprep.subr.mxu0 0.0
  %702 = vmatpush1.msra.mxu0 0.0
  %703 = vmatprep.subr.mxu0 0.0
  %704 = vmatpush1.msra.mxu0 0.0
  %705 = vmatprep.subr.mxu0 0.0
  %706 = vmatpush1.msra.mxu0 0.0
  %707 = vmatprep.subr.mxu0 0.0
  %708 = vmatpush1.msra.mxu0 0.0
  %709 = vmatprep.subr.mxu0 0.0
  %710 = vmatpush1.msra.mxu0 0.0
  %711 = vmatprep.subr.mxu0 0.0
  %712 = vmatpush1.msra.mxu0 0.0
  %713 = vmatprep.subr.mxu0 0.0
  %714 = vmatpush1.msra.mxu0 0.0
  %715 = vmatprep.subr.mxu0 0.0
  %716 = vmatpush1.msra.mxu0 0.0
  %717 = vmatprep.subr.mxu0 0.0
  %718 = vmatpush1.msra.mxu0 0.0
  %719 = vmatprep.subr.mxu0 0.0
  %720 = vmatpush1.msra.mxu0 0.0
  %721 = vmatprep.subr.mxu0 0.0
  %722 = vmatpush1.msra.mxu0 0.0
  %723 = vmatprep.subr.mxu0 0.0
  %724 = vmatpush1.msra.mxu0 0.0
  %725 = vmatprep.subr.mxu0 0.0
  %726 = vmatpush1.msra.mxu0 0.0
  %727 = vmatprep.subr.mxu0 0.0
  %728 = vmatpush1.msra.mxu0 0.0
  %729 = vmatprep.subr.mxu0 0.0
  %730 = vmatpush1.msra.mxu0 0.0
  %731 = vmatprep.subr.mxu0 0.0
  %732 = vmatpush1.msra.mxu0 0.0
  %733 = vmatprep.subr.mxu0 0.0
  %734 = vmatpush1.msra.mxu0 0.0
  %735 = vmatprep.subr.mxu0 0.0
  %736 = vmatpush1.msra.mxu0 0.0
  %737 = vmatprep.subr.mxu0 0.0
  %738 = vmatpush1.msra.mxu0 0.0
  %739 = vmatprep.subr.mxu0 0.0
  %740 = vmatpush1.msra.mxu0 0.0
  %741 = vmatprep.subr.mxu0 0.0
  %742 = vmatpush1.msra.mxu0 0.0
  %743 = vmatprep.subr.mxu0 0.0
  %744 = vmatpush1.msra.mxu0 0.0
  %745 = vmatprep.subr.mxu0 0.0
  %746 = vmatpush1.msra.mxu0 0.0
  %747 = vmatprep.subr.mxu0 0.0
  %748 = vmatpush1.msra.mxu0 0.0
  %749 = vmatprep.subr.mxu0 0.0
  %750 = vmatpush1.msra.mxu0 0.0
  %751 = vmatprep.mubr.f32.mxu0 0.0
  %752 = vmatmul.mubr.f32.gmra.mrb[0].mxu0 %v60
  %v753 = vpop.f32.mrb[0].mxu0
  %v754 = vadd.f32 %v31, %v753
  %v755 = vpop.f32.mrb[0].mxu0
  %756 = vmatprep.mubr.f32.mxu0 0.0
  %757 = vmatmul.mubr.f32.gmra.mrb[0].mxu0 %v63
  %v758 = vpop.f32.mrb[0].mxu0
  %v759 = vadd.f32 %v36, %v758
  %v760 = vpop.f32.mrb[0].mxu0
  %761 = vmatprep.mubr.f32.mxu0 0.0
  %762 = vmatmul.mubr.f32.gmra.mrb[0].mxu0 %v66
  %v763 = vpop.f32.mrb[0].mxu0
  %v764 = vadd.f32 %v41, %v763
  %v765 = vpop.f32.mrb[0].mxu0
  %766 = vmatprep.mubr.f32.mxu0 0.0
  %767 = vmatmul.mubr.f32.gmra.mrb[0].mxu0 %v69
  %v768 = vpop.f32.mrb[0].mxu0
  %v769 = vadd.f32 %v46, %v768
  %v770 = vpop.f32.mrb[0].mxu0
  %771 = vmatprep.mubr.f32.mxu0 0.0
  %772 = vmatmul.mubr.f32.gmra.mrb[0].mxu0 %v72
  %v773 = vpop.f32.mrb[0].mxu0
  %v774 = vadd.f32 %v51, %v773
  %v775 = vpop.f32.mrb[0].mxu0
  %776 = vmatprep.mubr.f32.mxu0 0.0
  %777 = vmatmul.mubr.f32.gmra.mrb[0].mxu0 %v75
  %v778 = vpop.f32.mrb[0].mxu0
  %v779 = vadd.f32 %v56, %v778
  %v780 = vpop.f32.mrb[0].mxu0
  %781 = vdwg.mxu0
  %s782 = scalar_lea.vmem %s0, 112
  %v783 = vld [vmem:[%s782] sm:$0xff]
  %v784 = vld [vmem:[%s782 + $0x8] sm:$0x1]
  %v786 = vsel %vm77, %v784, 0
  %788 = vmatprep.subr.mxu0 0.0
  %789 = vmatpush1.msra.mxu0 %v783
  %790 = vmatprep.subr.mxu0 0.0
  %791 = vmatpush1.msra.mxu0 %v786
  %792 = vmatprep.subr.mxu0 0.0
  %793 = vmatpush1.msra.mxu0 0.0
  %794 = vmatprep.subr.mxu0 0.0
  %795 = vmatpush1.msra.mxu0 0.0
  %796 = vmatprep.subr.mxu0 0.0
  %797 = vmatpush1.msra.mxu0 0.0
  %798 = vmatprep.subr.mxu0 0.0
  %799 = vmatpush1.msra.mxu0 0.0
  %800 = vmatprep.subr.mxu0 0.0
  %801 = vmatpush1.msra.mxu0 0.0
  %802 = vmatprep.subr.mxu0 0.0
  %803 = vmatpush1.msra.mxu0 0.0
  %804 = vmatprep.subr.mxu0 0.0
  %805 = vmatpush1.msra.mxu0 0.0
  %806 = vmatprep.subr.mxu0 0.0
  %807 = vmatpush1.msra.mxu0 0.0
  %808 = vmatprep.subr.mxu0 0.0
  %809 = vmatpush1.msra.mxu0 0.0
  %810 = vmatprep.subr.mxu0 0.0
  %811 = vmatpush1.msra.mxu0 0.0
  %812 = vmatprep.subr.mxu0 0.0
  %813 = vmatpush1.msra.mxu0 0.0
  %814 = vmatprep.subr.mxu0 0.0
  %815 = vmatpush1.msra.mxu0 0.0
  %816 = vmatprep.subr.mxu0 0.0
  %817 = vmatpush1.msra.mxu0 0.0
  %818 = vmatprep.subr.mxu0 0.0
  %819 = vmatpush1.msra.mxu0 0.0
  %820 = vmatprep.subr.mxu0 0.0
  %821 = vmatpush1.msra.mxu0 0.0
  %822 = vmatprep.subr.mxu0 0.0
  %823 = vmatpush1.msra.mxu0 0.0
  %824 = vmatprep.subr.mxu0 0.0
  %825 = vmatpush1.msra.mxu0 0.0
  %826 = vmatprep.subr.mxu0 0.0
  %827 = vmatpush1.msra.mxu0 0.0
  %828 = vmatprep.subr.mxu0 0.0
  %829 = vmatpush1.msra.mxu0 0.0
  %830 = vmatprep.subr.mxu0 0.0
  %831 = vmatpush1.msra.mxu0 0.0
  %832 = vmatprep.subr.mxu0 0.0
  %833 = vmatpush1.msra.mxu0 0.0
  %834 = vmatprep.subr.mxu0 0.0
  %835 = vmatpush1.msra.mxu0 0.0
  %836 = vmatprep.subr.mxu0 0.0
  %837 = vmatpush1.msra.mxu0 0.0
  %838 = vmatprep.subr.mxu0 0.0
  %839 = vmatpush1.msra.mxu0 0.0
  %840 = vmatprep.subr.mxu0 0.0
  %841 = vmatpush1.msra.mxu0 0.0
  %842 = vmatprep.subr.mxu0 0.0
  %843 = vmatpush1.msra.mxu0 0.0
  %844 = vmatprep.subr.mxu0 0.0
  %845 = vmatpush1.msra.mxu0 0.0
  %846 = vmatprep.subr.mxu0 0.0
  %847 = vmatpush1.msra.mxu0 0.0
  %848 = vmatprep.subr.mxu0 0.0
  %849 = vmatpush1.msra.mxu0 0.0
  %850 = vmatprep.subr.mxu0 0.0
  %851 = vmatpush1.msra.mxu0 0.0
  %852 = vmatprep.mubr.f32.mxu0 0.0
  %853 = vmatmul.mubr.f32.gmra.mrb[0].mxu0 %v60
  %v854 = vpop.f32.mrb[0].mxu0
  %v855 = vadd.f32 %v31, %v854
  %v856 = vpop.f32.mrb[0].mxu0
  %857 = vmatprep.mubr.f32.mxu0 0.0
  %858 = vmatmul.mubr.f32.gmra.mrb[0].mxu0 %v63
  %v859 = vpop.f32.mrb[0].mxu0
  %v860 = vadd.f32 %v36, %v859
  %v861 = vpop.f32.mrb[0].mxu0
  %862 = vmatprep.mubr.f32.mxu0 0.0
  %863 = vmatmul.mubr.f32.gmra.mrb[0].mxu0 %v66
  %v864 = vpop.f32.mrb[0].mxu0
  %v865 = vadd.f32 %v41, %v864
  %v866 = vpop.f32.mrb[0].mxu0
  %867 = vmatprep.mubr.f32.mxu0 0.0
  %868 = vmatmul.mubr.f32.gmra.mrb[0].mxu0 %v69
  %v869 = vpop.f32.mrb[0].mxu0
  %v870 = vadd.f32 %v46, %v869
  %v871 = vpop.f32.mrb[0].mxu0
  %872 = vmatprep.mubr.f32.mxu0 0.0
  %873 = vmatmul.mubr.f32.gmra.mrb[0].mxu0 %v72
  %v874 = vpop.f32.mrb[0].mxu0
  %v875 = vadd.f32 %v51, %v874
  %v876 = vpop.f32.mrb[0].mxu0
  %877 = vmatprep.mubr.f32.mxu0 0.0
  %878 = vmatmul.mubr.f32.gmra.mrb[0].mxu0 %v75
  %v879 = vpop.f32.mrb[0].mxu0
  %v880 = vadd.f32 %v56, %v879
  %v881 = vpop.f32.mrb[0].mxu0
  %882 = vdwg.mxu0
  %v883 = vmul.f32 %v148, %v158
  %v884 = vmul.f32 %v153, %v163
  %vm885 = vcmask 15360
  %v886 = vsel %vm885, %v883, 0.0
  %v887 = vsel %vm885, %v884, 0.0
  %v888 = vadd.f32 %v886, %v887
  %v889 = vrot.slane %v888, 4
  %v890 = vadd.f32 %v888, %v889
  %v891 = vrot.slane %v890, 2
  %v892 = vadd.f32 %v890, %v891
  %v893 = vrot.slane %v892, 1
  %v894 = vadd.f32 %v892, %v893
  %v895 = vmul.f32 %v148, %v259
  %v896 = vmul.f32 %v153, %v264
  %v897 = vsel %vm885, %v895, 0.0
  %v898 = vsel %vm885, %v896, 0.0
  %v899 = vadd.f32 %v897, %v898
  %v900 = vrot.slane %v899, 4
  %v901 = vadd.f32 %v899, %v900
  %v902 = vrot.slane %v901, 2
  %v903 = vadd.f32 %v901, %v902
  %v904 = vrot.slane %v903, 1
  %v905 = vadd.f32 %v903, %v904
  %v906 = vmul.f32 %v148, %v360
  %v907 = vmul.f32 %v153, %v365
  %v908 = vsel %vm885, %v906, 0.0
  %v909 = vsel %vm885, %v907, 0.0
  %v910 = vadd.f32 %v908, %v909
  %v911 = vrot.slane %v910, 4
  %v912 = vadd.f32 %v910, %v911
  %v913 = vrot.slane %v912, 2
  %v914 = vadd.f32 %v912, %v913
  %v915 = vrot.slane %v914, 1
  %v916 = vadd.f32 %v914, %v915
  %v917 = vmul.f32 %v148, %v461
  %v918 = vmul.f32 %v153, %v466
  %v919 = vsel %vm885, %v917, 0.0
  %v920 = vsel %vm885, %v918, 0.0
  %v921 = vadd.f32 %v919, %v920
  %v922 = vrot.slane %v921, 4
  %v923 = vadd.f32 %v921, %v922
  %v924 = vrot.slane %v923, 2
  %v925 = vadd.f32 %v923, %v924
  %v926 = vrot.slane %v925, 1
  %v927 = vadd.f32 %v925, %v926
  %v928 = vmul.f32 %v148, %v562
  %v929 = vmul.f32 %v153, %v567
  %v930 = vsel %vm885, %v928, 0.0
  %v931 = vsel %vm885, %v929, 0.0
  %v932 = vadd.f32 %v930, %v931
  %v933 = vrot.slane %v932, 4
  %v934 = vadd.f32 %v932, %v933
  %v935 = vrot.slane %v934, 2
  %v936 = vadd.f32 %v934, %v935
  %v937 = vrot.slane %v936, 1
  %v938 = vadd.f32 %v936, %v937
  %v939 = vmul.f32 %v148, %v663
  %v940 = vmul.f32 %v153, %v668
  %v941 = vsel %vm885, %v939, 0.0
  %v942 = vsel %vm885, %v940, 0.0
  %v943 = vadd.f32 %v941, %v942
  %v944 = vrot.slane %v943, 4
  %v945 = vadd.f32 %v943, %v944
  %v946 = vrot.slane %v945, 2
  %v947 = vadd.f32 %v945, %v946
  %v948 = vrot.slane %v947, 1
  %v949 = vadd.f32 %v947, %v948
  %v950 = vmul.f32 %v148, %v764
  %v951 = vmul.f32 %v153, %v769
  %v952 = vsel %vm885, %v950, 0.0
  %v953 = vsel %vm885, %v951, 0.0
  %v954 = vadd.f32 %v952, %v953
  %v955 = vrot.slane %v954, 4
  %v956 = vadd.f32 %v954, %v955
  %v957 = vrot.slane %v956, 2
  %v958 = vadd.f32 %v956, %v957
  %v959 = vrot.slane %v958, 1
  %v960 = vadd.f32 %v958, %v959
  %v961 = vmul.f32 %v148, %v865
  %v962 = vmul.f32 %v153, %v870
  %v963 = vsel %vm885, %v961, 0.0
  %v964 = vsel %vm885, %v962, 0.0
  %v965 = vadd.f32 %v963, %v964
  %v966 = vrot.slane %v965, 4
  %v967 = vadd.f32 %v965, %v966
  %v968 = vrot.slane %v967, 2
  %v969 = vadd.f32 %v967, %v968
  %v970 = vrot.slane %v969, 1
  %v971 = vadd.f32 %v969, %v970
  %v972 = vmax.f32 %v894, %v905
  %v973 = vmax.f32 %v972, %v916
  %v974 = vmax.f32 %v973, %v927
  %v975 = vmax.f32 %v974, %v938
  %v976 = vmax.f32 %v975, %v949
  %v977 = vmax.f32 %v976, %v960
  %v978 = vmax.f32 %v977, %v971
  %v979 = vsub.f32 %v894, %v978
  %v980 = vmul.f32 %v979, 1.442695
  %v981 = vpow.pop %v980
  %v982 = vsub.f32 %v905, %v978
  %v983 = vmul.f32 %v982, 1.442695
  %v984 = vpow.pop %v983
  %v985 = vsub.f32 %v916, %v978
  %v986 = vmul.f32 %v985, 1.442695
  %v987 = vpow.pop %v986
  %v988 = vsub.f32 %v927, %v978
  %v989 = vmul.f32 %v988, 1.442695
  %v990 = vpow.pop %v989
  %v991 = vsub.f32 %v938, %v978
  %v992 = vmul.f32 %v991, 1.442695
  %v993 = vpow.pop %v992
  %v994 = vsub.f32 %v949, %v978
  %v995 = vmul.f32 %v994, 1.442695
  %v996 = vpow.pop %v995
  %v997 = vsub.f32 %v960, %v978
  %v998 = vmul.f32 %v997, 1.442695
  %v999 = vpow.pop %v998
  %v1000 = vsub.f32 %v971, %v978
  %v1001 = vmul.f32 %v1000, 1.442695
  %v1002 = vpow.pop %v1001
  %v1003 = vadd.f32 %v981, %v984
  %v1004 = vadd.f32 %v1003, %v987
  %v1005 = vadd.f32 %v1004, %v990
  %v1006 = vadd.f32 %v1005, %v993
  %v1007 = vadd.f32 %v1006, %v996
  %v1008 = vadd.f32 %v1007, %v999
  %v1009 = vadd.f32 %v1008, %v1002
  %v1010 = vrcp.pop %v1009
  %v1011 = vmul.f32 %v1009, %v1010
  %v1012 = vsub.f32 2.0, %v1011
  %v1013 = vmul.f32 %v1010, %v1012
  %v1014 = vmul.f32 %v981, %v1013
  %v1015 = vmul.f32 %v1014, %v168
  %v1016 = vmul.f32 %v1014, %v173
  %v1017 = vmul.f32 %v984, %v1013
  %v1018 = vmul.f32 %v1017, %v269
  %v1019 = vmul.f32 %v1017, %v274
  %v1020 = vadd.f32 %v1015, %v1018
  %v1021 = vadd.f32 %v1016, %v1019
  %v1022 = vmul.f32 %v987, %v1013
  %v1023 = vmul.f32 %v1022, %v370
  %v1024 = vmul.f32 %v1022, %v375
  %v1025 = vadd.f32 %v1020, %v1023
  %v1026 = vadd.f32 %v1021, %v1024
  %v1027 = vmul.f32 %v990, %v1013
  %v1028 = vmul.f32 %v1027, %v471
  %v1029 = vmul.f32 %v1027, %v476
  %v1030 = vadd.f32 %v1025, %v1028
  %v1031 = vadd.f32 %v1026, %v1029
  %v1032 = vmul.f32 %v993, %v1013
  %v1033 = vmul.f32 %v1032, %v572
  %v1034 = vmul.f32 %v1032, %v577
  %v1035 = vadd.f32 %v1030, %v1033
  %v1036 = vadd.f32 %v1031, %v1034
  %v1037 = vmul.f32 %v996, %v1013
  %v1038 = vmul.f32 %v1037, %v673
  %v1039 = vmul.f32 %v1037, %v678
  %v1040 = vadd.f32 %v1035, %v1038
  %v1041 = vadd.f32 %v1036, %v1039
  %v1042 = vmul.f32 %v999, %v1013
  %v1043 = vmul.f32 %v1042, %v774
  %v1044 = vmul.f32 %v1042, %v779
  %v1045 = vadd.f32 %v1040, %v1043
  %v1046 = vadd.f32 %v1041, %v1044
  %v1047 = vmul.f32 %v1002, %v1013
  %v1048 = vmul.f32 %v1047, %v875
  %v1049 = vmul.f32 %v1047, %v880
  %v1050 = vadd.f32 %v1045, %v1048
  %v1051 = vadd.f32 %v1046, %v1049
  %1052 = vst.msk [vmem:[%s3] sm:$0xff] %vm885, %v1050
  %vm1053 = vcmask 8192
  %1054 = vst.msk [vmem:[%s3 + $0x8] sm:$0x1] %vm1053, %v1051
  %v1055 = vmul.f32 %v249, %v158
  %v1056 = vmul.f32 %v254, %v163
  %v1057 = vsel %vm885, %v1055, 0.0
  %v1058 = vsel %vm885, %v1056, 0.0
  %v1059 = vadd.f32 %v1057, %v1058
  %v1060 = vrot.slane %v1059, 4
  %v1061 = vadd.f32 %v1059, %v1060
  %v1062 = vrot.slane %v1061, 2
  %v1063 = vadd.f32 %v1061, %v1062
  %v1064 = vrot.slane %v1063, 1
  %v1065 = vadd.f32 %v1063, %v1064
  %v1066 = vmul.f32 %v249, %v259
  %v1067 = vmul.f32 %v254, %v264
  %v1068 = vsel %vm885, %v1066, 0.0
  %v1069 = vsel %vm885, %v1067, 0.0
  %v1070 = vadd.f32 %v1068, %v1069
  %v1071 = vrot.slane %v1070, 4
  %v1072 = vadd.f32 %v1070, %v1071
  %v1073 = vrot.slane %v1072, 2
  %v1074 = vadd.f32 %v1072, %v1073
  %v1075 = vrot.slane %v1074, 1
  %v1076 = vadd.f32 %v1074, %v1075
  %v1077 = vmul.f32 %v249, %v360
  %v1078 = vmul.f32 %v254, %v365
  %v1079 = vsel %vm885, %v1077, 0.0
  %v1080 = vsel %vm885, %v1078, 0.0
  %v1081 = vadd.f32 %v1079, %v1080
  %v1082 = vrot.slane %v1081, 4
  %v1083 = vadd.f32 %v1081, %v1082
  %v1084 = vrot.slane %v1083, 2
  %v1085 = vadd.f32 %v1083, %v1084
  %v1086 = vrot.slane %v1085, 1
  %v1087 = vadd.f32 %v1085, %v1086
  %v1088 = vmul.f32 %v249, %v461
  %v1089 = vmul.f32 %v254, %v466
  %v1090 = vsel %vm885, %v1088, 0.0
  %v1091 = vsel %vm885, %v1089, 0.0
  %v1092 = vadd.f32 %v1090, %v1091
  %v1093 = vrot.slane %v1092, 4
  %v1094 = vadd.f32 %v1092, %v1093
  %v1095 = vrot.slane %v1094, 2
  %v1096 = vadd.f32 %v1094, %v1095
  %v1097 = vrot.slane %v1096, 1
  %v1098 = vadd.f32 %v1096, %v1097
  %v1099 = vmul.f32 %v249, %v562
  %v1100 = vmul.f32 %v254, %v567
  %v1101 = vsel %vm885, %v1099, 0.0
  %v1102 = vsel %vm885, %v1100, 0.0
  %v1103 = vadd.f32 %v1101, %v1102
  %v1104 = vrot.slane %v1103, 4
  %v1105 = vadd.f32 %v1103, %v1104
  %v1106 = vrot.slane %v1105, 2
  %v1107 = vadd.f32 %v1105, %v1106
  %v1108 = vrot.slane %v1107, 1
  %v1109 = vadd.f32 %v1107, %v1108
  %v1110 = vmul.f32 %v249, %v663
  %v1111 = vmul.f32 %v254, %v668
  %v1112 = vsel %vm885, %v1110, 0.0
  %v1113 = vsel %vm885, %v1111, 0.0
  %v1114 = vadd.f32 %v1112, %v1113
  %v1115 = vrot.slane %v1114, 4
  %v1116 = vadd.f32 %v1114, %v1115
  %v1117 = vrot.slane %v1116, 2
  %v1118 = vadd.f32 %v1116, %v1117
  %v1119 = vrot.slane %v1118, 1
  %v1120 = vadd.f32 %v1118, %v1119
  %v1121 = vmul.f32 %v249, %v764
  %v1122 = vmul.f32 %v254, %v769
  %v1123 = vsel %vm885, %v1121, 0.0
  %v1124 = vsel %vm885, %v1122, 0.0
  %v1125 = vadd.f32 %v1123, %v1124
  %v1126 = vrot.slane %v1125, 4
  %v1127 = vadd.f32 %v1125, %v1126
  %v1128 = vrot.slane %v1127, 2
  %v1129 = vadd.f32 %v1127, %v1128
  %v1130 = vrot.slane %v1129, 1
  %v1131 = vadd.f32 %v1129, %v1130
  %v1132 = vmul.f32 %v249, %v865
  %v1133 = vmul.f32 %v254, %v870
  %v1134 = vsel %vm885, %v1132, 0.0
  %v1135 = vsel %vm885, %v1133, 0.0
  %v1136 = vadd.f32 %v1134, %v1135
  %v1137 = vrot.slane %v1136, 4
  %v1138 = vadd.f32 %v1136, %v1137
  %v1139 = vrot.slane %v1138, 2
  %v1140 = vadd.f32 %v1138, %v1139
  %v1141 = vrot.slane %v1140, 1
  %v1142 = vadd.f32 %v1140, %v1141
  %v1143 = vmax.f32 %v1065, %v1076
  %v1144 = vmax.f32 %v1143, %v1087
  %v1145 = vmax.f32 %v1144, %v1098
  %v1146 = vmax.f32 %v1145, %v1109
  %v1147 = vmax.f32 %v1146, %v1120
  %v1148 = vmax.f32 %v1147, %v1131
  %v1149 = vmax.f32 %v1148, %v1142
  %v1150 = vsub.f32 %v1065, %v1149
  %v1151 = vmul.f32 %v1150, 1.442695
  %v1152 = vpow.pop %v1151
  %v1153 = vsub.f32 %v1076, %v1149
  %v1154 = vmul.f32 %v1153, 1.442695
  %v1155 = vpow.pop %v1154
  %v1156 = vsub.f32 %v1087, %v1149
  %v1157 = vmul.f32 %v1156, 1.442695
  %v1158 = vpow.pop %v1157
  %v1159 = vsub.f32 %v1098, %v1149
  %v1160 = vmul.f32 %v1159, 1.442695
  %v1161 = vpow.pop %v1160
  %v1162 = vsub.f32 %v1109, %v1149
  %v1163 = vmul.f32 %v1162, 1.442695
  %v1164 = vpow.pop %v1163
  %v1165 = vsub.f32 %v1120, %v1149
  %v1166 = vmul.f32 %v1165, 1.442695
  %v1167 = vpow.pop %v1166
  %v1168 = vsub.f32 %v1131, %v1149
  %v1169 = vmul.f32 %v1168, 1.442695
  %v1170 = vpow.pop %v1169
  %v1171 = vsub.f32 %v1142, %v1149
  %v1172 = vmul.f32 %v1171, 1.442695
  %v1173 = vpow.pop %v1172
  %v1174 = vadd.f32 %v1152, %v1155
  %v1175 = vadd.f32 %v1174, %v1158
  %v1176 = vadd.f32 %v1175, %v1161
  %v1177 = vadd.f32 %v1176, %v1164
  %v1178 = vadd.f32 %v1177, %v1167
  %v1179 = vadd.f32 %v1178, %v1170
  %v1180 = vadd.f32 %v1179, %v1173
  %v1181 = vrcp.pop %v1180
  %v1182 = vmul.f32 %v1180, %v1181
  %v1183 = vsub.f32 2.0, %v1182
  %v1184 = vmul.f32 %v1181, %v1183
  %v1185 = vmul.f32 %v1152, %v1184
  %v1186 = vmul.f32 %v1185, %v168
  %v1187 = vmul.f32 %v1185, %v173
  %v1188 = vmul.f32 %v1155, %v1184
  %v1189 = vmul.f32 %v1188, %v269
  %v1190 = vmul.f32 %v1188, %v274
  %v1191 = vadd.f32 %v1186, %v1189
  %v1192 = vadd.f32 %v1187, %v1190
  %v1193 = vmul.f32 %v1158, %v1184
  %v1194 = vmul.f32 %v1193, %v370
  %v1195 = vmul.f32 %v1193, %v375
  %v1196 = vadd.f32 %v1191, %v1194
  %v1197 = vadd.f32 %v1192, %v1195
  %v1198 = vmul.f32 %v1161, %v1184
  %v1199 = vmul.f32 %v1198, %v471
  %v1200 = vmul.f32 %v1198, %v476
  %v1201 = vadd.f32 %v1196, %v1199
  %v1202 = vadd.f32 %v1197, %v1200
  %v1203 = vmul.f32 %v1164, %v1184
  %v1204 = vmul.f32 %v1203, %v572
  %v1205 = vmul.f32 %v1203, %v577
  %v1206 = vadd.f32 %v1201, %v1204
  %v1207 = vadd.f32 %v1202, %v1205
  %v1208 = vmul.f32 %v1167, %v1184
  %v1209 = vmul.f32 %v1208, %v673
  %v1210 = vmul.f32 %v1208, %v678
  %v1211 = vadd.f32 %v1206, %v1209
  %v1212 = vadd.f32 %v1207, %v1210
  %v1213 = vmul.f32 %v1170, %v1184
  %v1214 = vmul.f32 %v1213, %v774
  %v1215 = vmul.f32 %v1213, %v779
  %v1216 = vadd.f32 %v1211, %v1214
  %v1217 = vadd.f32 %v1212, %v1215
  %v1218 = vmul.f32 %v1173, %v1184
  %v1219 = vmul.f32 %v1218, %v875
  %v1220 = vmul.f32 %v1218, %v880
  %v1221 = vadd.f32 %v1216, %v1219
  %v1222 = vadd.f32 %v1217, %v1220
  %s1223 = scalar_lea.vmem %s3, 16
  %1224 = vst.msk [vmem:[%s1223] sm:$0xff] %vm885, %v1221
  %1225 = vst.msk [vmem:[%s1223 + $0x8] sm:$0x1] %vm1053, %v1222
  %v1226 = vmul.f32 %v350, %v158
  %v1227 = vmul.f32 %v355, %v163
  %v1228 = vsel %vm885, %v1226, 0.0
  %v1229 = vsel %vm885, %v1227, 0.0
  %v1230 = vadd.f32 %v1228, %v1229
  %v1231 = vrot.slane %v1230, 4
  %v1232 = vadd.f32 %v1230, %v1231
  %v1233 = vrot.slane %v1232, 2
  %v1234 = vadd.f32 %v1232, %v1233
  %v1235 = vrot.slane %v1234, 1
  %v1236 = vadd.f32 %v1234, %v1235
  %v1237 = vmul.f32 %v350, %v259
  %v1238 = vmul.f32 %v355, %v264
  %v1239 = vsel %vm885, %v1237, 0.0
  %v1240 = vsel %vm885, %v1238, 0.0
  %v1241 = vadd.f32 %v1239, %v1240
  %v1242 = vrot.slane %v1241, 4
  %v1243 = vadd.f32 %v1241, %v1242
  %v1244 = vrot.slane %v1243, 2
  %v1245 = vadd.f32 %v1243, %v1244
  %v1246 = vrot.slane %v1245, 1
  %v1247 = vadd.f32 %v1245, %v1246
  %v1248 = vmul.f32 %v350, %v360
  %v1249 = vmul.f32 %v355, %v365
  %v1250 = vsel %vm885, %v1248, 0.0
  %v1251 = vsel %vm885, %v1249, 0.0
  %v1252 = vadd.f32 %v1250, %v1251
  %v1253 = vrot.slane %v1252, 4
  %v1254 = vadd.f32 %v1252, %v1253
  %v1255 = vrot.slane %v1254, 2
  %v1256 = vadd.f32 %v1254, %v1255
  %v1257 = vrot.slane %v1256, 1
  %v1258 = vadd.f32 %v1256, %v1257
  %v1259 = vmul.f32 %v350, %v461
  %v1260 = vmul.f32 %v355, %v466
  %v1261 = vsel %vm885, %v1259, 0.0
  %v1262 = vsel %vm885, %v1260, 0.0
  %v1263 = vadd.f32 %v1261, %v1262
  %v1264 = vrot.slane %v1263, 4
  %v1265 = vadd.f32 %v1263, %v1264
  %v1266 = vrot.slane %v1265, 2
  %v1267 = vadd.f32 %v1265, %v1266
  %v1268 = vrot.slane %v1267, 1
  %v1269 = vadd.f32 %v1267, %v1268
  %v1270 = vmul.f32 %v350, %v562
  %v1271 = vmul.f32 %v355, %v567
  %v1272 = vsel %vm885, %v1270, 0.0
  %v1273 = vsel %vm885, %v1271, 0.0
  %v1274 = vadd.f32 %v1272, %v1273
  %v1275 = vrot.slane %v1274, 4
  %v1276 = vadd.f32 %v1274, %v1275
  %v1277 = vrot.slane %v1276, 2
  %v1278 = vadd.f32 %v1276, %v1277
  %v1279 = vrot.slane %v1278, 1
  %v1280 = vadd.f32 %v1278, %v1279
  %v1281 = vmul.f32 %v350, %v663
  %v1282 = vmul.f32 %v355, %v668
  %v1283 = vsel %vm885, %v1281, 0.0
  %v1284 = vsel %vm885, %v1282, 0.0
  %v1285 = vadd.f32 %v1283, %v1284
  %v1286 = vrot.slane %v1285, 4
  %v1287 = vadd.f32 %v1285, %v1286
  %v1288 = vrot.slane %v1287, 2
  %v1289 = vadd.f32 %v1287, %v1288
  %v1290 = vrot.slane %v1289, 1
  %v1291 = vadd.f32 %v1289, %v1290
  %v1292 = vmul.f32 %v350, %v764
  %v1293 = vmul.f32 %v355, %v769
  %v1294 = vsel %vm885, %v1292, 0.0
  %v1295 = vsel %vm885, %v1293, 0.0
  %v1296 = vadd.f32 %v1294, %v1295
  %v1297 = vrot.slane %v1296, 4
  %v1298 = vadd.f32 %v1296, %v1297
  %v1299 = vrot.slane %v1298, 2
  %v1300 = vadd.f32 %v1298, %v1299
  %v1301 = vrot.slane %v1300, 1
  %v1302 = vadd.f32 %v1300, %v1301
  %v1303 = vmul.f32 %v350, %v865
  %v1304 = vmul.f32 %v355, %v870
  %v1305 = vsel %vm885, %v1303, 0.0
  %v1306 = vsel %vm885, %v1304, 0.0
  %v1307 = vadd.f32 %v1305, %v1306
  %v1308 = vrot.slane %v1307, 4
  %v1309 = vadd.f32 %v1307, %v1308
  %v1310 = vrot.slane %v1309, 2
  %v1311 = vadd.f32 %v1309, %v1310
  %v1312 = vrot.slane %v1311, 1
  %v1313 = vadd.f32 %v1311, %v1312
  %v1314 = vmax.f32 %v1236, %v1247
  %v1315 = vmax.f32 %v1314, %v1258
  %v1316 = vmax.f32 %v1315, %v1269
  %v1317 = vmax.f32 %v1316, %v1280
  %v1318 = vmax.f32 %v1317, %v1291
  %v1319 = vmax.f32 %v1318, %v1302
  %v1320 = vmax.f32 %v1319, %v1313
  %v1321 = vsub.f32 %v1236, %v1320
  %v1322 = vmul.f32 %v1321, 1.442695
  %v1323 = vpow.pop %v1322
  %v1324 = vsub.f32 %v1247, %v1320
  %v1325 = vmul.f32 %v1324, 1.442695
  %v1326 = vpow.pop %v1325
  %v1327 = vsub.f32 %v1258, %v1320
  %v1328 = vmul.f32 %v1327, 1.442695
  %v1329 = vpow.pop %v1328
  %v1330 = vsub.f32 %v1269, %v1320
  %v1331 = vmul.f32 %v1330, 1.442695
  %v1332 = vpow.pop %v1331
  %v1333 = vsub.f32 %v1280, %v1320
  %v1334 = vmul.f32 %v1333, 1.442695
  %v1335 = vpow.pop %v1334
  %v1336 = vsub.f32 %v1291, %v1320
  %v1337 = vmul.f32 %v1336, 1.442695
  %v1338 = vpow.pop %v1337
  %v1339 = vsub.f32 %v1302, %v1320
  %v1340 = vmul.f32 %v1339, 1.442695
  %v1341 = vpow.pop %v1340
  %v1342 = vsub.f32 %v1313, %v1320
  %v1343 = vmul.f32 %v1342, 1.442695
  %v1344 = vpow.pop %v1343
  %v1345 = vadd.f32 %v1323, %v1326
  %v1346 = vadd.f32 %v1345, %v1329
  %v1347 = vadd.f32 %v1346, %v1332
  %v1348 = vadd.f32 %v1347, %v1335
  %v1349 = vadd.f32 %v1348, %v1338
  %v1350 = vadd.f32 %v1349, %v1341
  %v1351 = vadd.f32 %v1350, %v1344
  %v1352 = vrcp.pop %v1351
  %v1353 = vmul.f32 %v1351, %v1352
  %v1354 = vsub.f32 2.0, %v1353
  %v1355 = vmul.f32 %v1352, %v1354
  %v1356 = vmul.f32 %v1323, %v1355
  %v1357 = vmul.f32 %v1356, %v168
  %v1358 = vmul.f32 %v1356, %v173
  %v1359 = vmul.f32 %v1326, %v1355
  %v1360 = vmul.f32 %v1359, %v269
  %v1361 = vmul.f32 %v1359, %v274
  %v1362 = vadd.f32 %v1357, %v1360
  %v1363 = vadd.f32 %v1358, %v1361
  %v1364 = vmul.f32 %v1329, %v1355
  %v1365 = vmul.f32 %v1364, %v370
  %v1366 = vmul.f32 %v1364, %v375
  %v1367 = vadd.f32 %v1362, %v1365
  %v1368 = vadd.f32 %v1363, %v1366
  %v1369 = vmul.f32 %v1332, %v1355
  %v1370 = vmul.f32 %v1369, %v471
  %v1371 = vmul.f32 %v1369, %v476
  %v1372 = vadd.f32 %v1367, %v1370
  %v1373 = vadd.f32 %v1368, %v1371
  %v1374 = vmul.f32 %v1335, %v1355
  %v1375 = vmul.f32 %v1374, %v572
  %v1376 = vmul.f32 %v1374, %v577
  %v1377 = vadd.f32 %v1372, %v1375
  %v1378 = vadd.f32 %v1373, %v1376
  %v1379 = vmul.f32 %v1338, %v1355
  %v1380 = vmul.f32 %v1379, %v673
  %v1381 = vmul.f32 %v1379, %v678
  %v1382 = vadd.f32 %v1377, %v1380
  %v1383 = vadd.f32 %v1378, %v1381
  %v1384 = vmul.f32 %v1341, %v1355
  %v1385 = vmul.f32 %v1384, %v774
  %v1386 = vmul.f32 %v1384, %v779
  %v1387 = vadd.f32 %v1382, %v1385
  %v1388 = vadd.f32 %v1383, %v1386
  %v1389 = vmul.f32 %v1344, %v1355
  %v1390 = vmul.f32 %v1389, %v875
  %v1391 = vmul.f32 %v1389, %v880
  %v1392 = vadd.f32 %v1387, %v1390
  %v1393 = vadd.f32 %v1388, %v1391
  %s1394 = scalar_lea.vmem %s3, 32
  %1395 = vst.msk [vmem:[%s1394] sm:$0xff] %vm885, %v1392
  %1396 = vst.msk [vmem:[%s1394 + $0x8] sm:$0x1] %vm1053, %v1393
  %v1397 = vmul.f32 %v451, %v158
  %v1398 = vmul.f32 %v456, %v163
  %v1399 = vsel %vm885, %v1397, 0.0
  %v1400 = vsel %vm885, %v1398, 0.0
  %v1401 = vadd.f32 %v1399, %v1400
  %v1402 = vrot.slane %v1401, 4
  %v1403 = vadd.f32 %v1401, %v1402
  %v1404 = vrot.slane %v1403, 2
  %v1405 = vadd.f32 %v1403, %v1404
  %v1406 = vrot.slane %v1405, 1
  %v1407 = vadd.f32 %v1405, %v1406
  %v1408 = vmul.f32 %v451, %v259
  %v1409 = vmul.f32 %v456, %v264
  %v1410 = vsel %vm885, %v1408, 0.0
  %v1411 = vsel %vm885, %v1409, 0.0
  %v1412 = vadd.f32 %v1410, %v1411
  %v1413 = vrot.slane %v1412, 4
  %v1414 = vadd.f32 %v1412, %v1413
  %v1415 = vrot.slane %v1414, 2
  %v1416 = vadd.f32 %v1414, %v1415
  %v1417 = vrot.slane %v1416, 1
  %v1418 = vadd.f32 %v1416, %v1417
  %v1419 = vmul.f32 %v451, %v360
  %v1420 = vmul.f32 %v456, %v365
  %v1421 = vsel %vm885, %v1419, 0.0
  %v1422 = vsel %vm885, %v1420, 0.0
  %v1423 = vadd.f32 %v1421, %v1422
  %v1424 = vrot.slane %v1423, 4
  %v1425 = vadd.f32 %v1423, %v1424
  %v1426 = vrot.slane %v1425, 2
  %v1427 = vadd.f32 %v1425, %v1426
  %v1428 = vrot.slane %v1427, 1
  %v1429 = vadd.f32 %v1427, %v1428
  %v1430 = vmul.f32 %v451, %v461
  %v1431 = vmul.f32 %v456, %v466
  %v1432 = vsel %vm885, %v1430, 0.0
  %v1433 = vsel %vm885, %v1431, 0.0
  %v1434 = vadd.f32 %v1432, %v1433
  %v1435 = vrot.slane %v1434, 4
  %v1436 = vadd.f32 %v1434, %v1435
  %v1437 = vrot.slane %v1436, 2
  %v1438 = vadd.f32 %v1436, %v1437
  %v1439 = vrot.slane %v1438, 1
  %v1440 = vadd.f32 %v1438, %v1439
  %v1441 = vmul.f32 %v451, %v562
  %v1442 = vmul.f32 %v456, %v567
  %v1443 = vsel %vm885, %v1441, 0.0
  %v1444 = vsel %vm885, %v1442, 0.0
  %v1445 = vadd.f32 %v1443, %v1444
  %v1446 = vrot.slane %v1445, 4
  %v1447 = vadd.f32 %v1445, %v1446
  %v1448 = vrot.slane %v1447, 2
  %v1449 = vadd.f32 %v1447, %v1448
  %v1450 = vrot.slane %v1449, 1
  %v1451 = vadd.f32 %v1449, %v1450
  %v1452 = vmul.f32 %v451, %v663
  %v1453 = vmul.f32 %v456, %v668
  %v1454 = vsel %vm885, %v1452, 0.0
  %v1455 = vsel %vm885, %v1453, 0.0
  %v1456 = vadd.f32 %v1454, %v1455
  %v1457 = vrot.slane %v1456, 4
  %v1458 = vadd.f32 %v1456, %v1457
  %v1459 = vrot.slane %v1458, 2
  %v1460 = vadd.f32 %v1458, %v1459
  %v1461 = vrot.slane %v1460, 1
  %v1462 = vadd.f32 %v1460, %v1461
  %v1463 = vmul.f32 %v451, %v764
  %v1464 = vmul.f32 %v456, %v769
  %v1465 = vsel %vm885, %v1463, 0.0
  %v1466 = vsel %vm885, %v1464, 0.0
  %v1467 = vadd.f32 %v1465, %v1466
  %v1468 = vrot.slane %v1467, 4
  %v1469 = vadd.f32 %v1467, %v1468
  %v1470 = vrot.slane %v1469, 2
  %v1471 = vadd.f32 %v1469, %v1470
  %v1472 = vrot.slane %v1471, 1
  %v1473 = vadd.f32 %v1471, %v1472
  %v1474 = vmul.f32 %v451, %v865
  %v1475 = vmul.f32 %v456, %v870
  %v1476 = vsel %vm885, %v1474, 0.0
  %v1477 = vsel %vm885, %v1475, 0.0
  %v1478 = vadd.f32 %v1476, %v1477
  %v1479 = vrot.slane %v1478, 4
  %v1480 = vadd.f32 %v1478, %v1479
  %v1481 = vrot.slane %v1480, 2
  %v1482 = vadd.f32 %v1480, %v1481
  %v1483 = vrot.slane %v1482, 1
  %v1484 = vadd.f32 %v1482, %v1483
  %v1485 = vmax.f32 %v1407, %v1418
  %v1486 = vmax.f32 %v1485, %v1429
  %v1487 = vmax.f32 %v1486, %v1440
  %v1488 = vmax.f32 %v1487, %v1451
  %v1489 = vmax.f32 %v1488, %v1462
  %v1490 = vmax.f32 %v1489, %v1473
  %v1491 = vmax.f32 %v1490, %v1484
  %v1492 = vsub.f32 %v1407, %v1491
  %v1493 = vmul.f32 %v1492, 1.442695
  %v1494 = vpow.pop %v1493
  %v1495 = vsub.f32 %v1418, %v1491
  %v1496 = vmul.f32 %v1495, 1.442695
  %v1497 = vpow.pop %v1496
  %v1498 = vsub.f32 %v1429, %v1491
  %v1499 = vmul.f32 %v1498, 1.442695
  %v1500 = vpow.pop %v1499
  %v1501 = vsub.f32 %v1440, %v1491
  %v1502 = vmul.f32 %v1501, 1.442695
  %v1503 = vpow.pop %v1502
  %v1504 = vsub.f32 %v1451, %v1491
  %v1505 = vmul.f32 %v1504, 1.442695
  %v1506 = vpow.pop %v1505
  %v1507 = vsub.f32 %v1462, %v1491
  %v1508 = vmul.f32 %v1507, 1.442695
  %v1509 = vpow.pop %v1508
  %v1510 = vsub.f32 %v1473, %v1491
  %v1511 = vmul.f32 %v1510, 1.442695
  %v1512 = vpow.pop %v1511
  %v1513 = vsub.f32 %v1484, %v1491
  %v1514 = vmul.f32 %v1513, 1.442695
  %v1515 = vpow.pop %v1514
  %v1516 = vadd.f32 %v1494, %v1497
  %v1517 = vadd.f32 %v1516, %v1500
  %v1518 = vadd.f32 %v1517, %v1503
  %v1519 = vadd.f32 %v1518, %v1506
  %v1520 = vadd.f32 %v1519, %v1509
  %v1521 = vadd.f32 %v1520, %v1512
  %v1522 = vadd.f32 %v1521, %v1515
  %v1523 = vrcp.pop %v1522
  %v1524 = vmul.f32 %v1522, %v1523
  %v1525 = vsub.f32 2.0, %v1524
  %v1526 = vmul.f32 %v1523, %v1525
  %v1527 = vmul.f32 %v1494, %v1526
  %v1528 = vmul.f32 %v1527, %v168
  %v1529 = vmul.f32 %v1527, %v173
  %v1530 = vmul.f32 %v1497, %v1526
  %v1531 = vmul.f32 %v1530, %v269
  %v1532 = vmul.f32 %v1530, %v274
  %v1533 = vadd.f32 %v1528, %v1531
  %v1534 = vadd.f32 %v1529, %v1532
  %v1535 = vmul.f32 %v1500, %v1526
  %v1536 = vmul.f32 %v1535, %v370
  %v1537 = vmul.f32 %v1535, %v375
  %v1538 = vadd.f32 %v1533, %v1536
  %v1539 = vadd.f32 %v1534, %v1537
  %v1540 = vmul.f32 %v1503, %v1526
  %v1541 = vmul.f32 %v1540, %v471
  %v1542 = vmul.f32 %v1540, %v476
  %v1543 = vadd.f32 %v1538, %v1541
  %v1544 = vadd.f32 %v1539, %v1542
  %v1545 = vmul.f32 %v1506, %v1526
  %v1546 = vmul.f32 %v1545, %v572
  %v1547 = vmul.f32 %v1545, %v577
  %v1548 = vadd.f32 %v1543, %v1546
  %v1549 = vadd.f32 %v1544, %v1547
  %v1550 = vmul.f32 %v1509, %v1526
  %v1551 = vmul.f32 %v1550, %v673
  %v1552 = vmul.f32 %v1550, %v678
  %v1553 = vadd.f32 %v1548, %v1551
  %v1554 = vadd.f32 %v1549, %v1552
  %v1555 = vmul.f32 %v1512, %v1526
  %v1556 = vmul.f32 %v1555, %v774
  %v1557 = vmul.f32 %v1555, %v779
  %v1558 = vadd.f32 %v1553, %v1556
  %v1559 = vadd.f32 %v1554, %v1557
  %v1560 = vmul.f32 %v1515, %v1526
  %v1561 = vmul.f32 %v1560, %v875
  %v1562 = vmul.f32 %v1560, %v880
  %v1563 = vadd.f32 %v1558, %v1561
  %v1564 = vadd.f32 %v1559, %v1562
  %s1565 = scalar_lea.vmem %s3, 48
  %1566 = vst.msk [vmem:[%s1565] sm:$0xff] %vm885, %v1563
  %1567 = vst.msk [vmem:[%s1565 + $0x8] sm:$0x1] %vm1053, %v1564
  %v1568 = vmul.f32 %v552, %v158
  %v1569 = vmul.f32 %v557, %v163
  %v1570 = vsel %vm885, %v1568, 0.0
  %v1571 = vsel %vm885, %v1569, 0.0
  %v1572 = vadd.f32 %v1570, %v1571
  %v1573 = vrot.slane %v1572, 4
  %v1574 = vadd.f32 %v1572, %v1573
  %v1575 = vrot.slane %v1574, 2
  %v1576 = vadd.f32 %v1574, %v1575
  %v1577 = vrot.slane %v1576, 1
  %v1578 = vadd.f32 %v1576, %v1577
  %v1579 = vmul.f32 %v552, %v259
  %v1580 = vmul.f32 %v557, %v264
  %v1581 = vsel %vm885, %v1579, 0.0
  %v1582 = vsel %vm885, %v1580, 0.0
  %v1583 = vadd.f32 %v1581, %v1582
  %v1584 = vrot.slane %v1583, 4
  %v1585 = vadd.f32 %v1583, %v1584
  %v1586 = vrot.slane %v1585, 2
  %v1587 = vadd.f32 %v1585, %v1586
  %v1588 = vrot.slane %v1587, 1
  %v1589 = vadd.f32 %v1587, %v1588
  %v1590 = vmul.f32 %v552, %v360
  %v1591 = vmul.f32 %v557, %v365
  %v1592 = vsel %vm885, %v1590, 0.0
  %v1593 = vsel %vm885, %v1591, 0.0
  %v1594 = vadd.f32 %v1592, %v1593
  %v1595 = vrot.slane %v1594, 4
  %v1596 = vadd.f32 %v1594, %v1595
  %v1597 = vrot.slane %v1596, 2
  %v1598 = vadd.f32 %v1596, %v1597
  %v1599 = vrot.slane %v1598, 1
  %v1600 = vadd.f32 %v1598, %v1599
  %v1601 = vmul.f32 %v552, %v461
  %v1602 = vmul.f32 %v557, %v466
  %v1603 = vsel %vm885, %v1601, 0.0
  %v1604 = vsel %vm885, %v1602, 0.0
  %v1605 = vadd.f32 %v1603, %v1604
  %v1606 = vrot.slane %v1605, 4
  %v1607 = vadd.f32 %v1605, %v1606
  %v1608 = vrot.slane %v1607, 2
  %v1609 = vadd.f32 %v1607, %v1608
  %v1610 = vrot.slane %v1609, 1
  %v1611 = vadd.f32 %v1609, %v1610
  %v1612 = vmul.f32 %v552, %v562
  %v1613 = vmul.f32 %v557, %v567
  %v1614 = vsel %vm885, %v1612, 0.0
  %v1615 = vsel %vm885, %v1613, 0.0
  %v1616 = vadd.f32 %v1614, %v1615
  %v1617 = vrot.slane %v1616, 4
  %v1618 = vadd.f32 %v1616, %v1617
  %v1619 = vrot.slane %v1618, 2
  %v1620 = vadd.f32 %v1618, %v1619
  %v1621 = vrot.slane %v1620, 1
  %v1622 = vadd.f32 %v1620, %v1621
  %v1623 = vmul.f32 %v552, %v663
  %v1624 = vmul.f32 %v557, %v668
  %v1625 = vsel %vm885, %v1623, 0.0
  %v1626 = vsel %vm885, %v1624, 0.0
  %v1627 = vadd.f32 %v1625, %v1626
  %v1628 = vrot.slane %v1627, 4
  %v1629 = vadd.f32 %v1627, %v1628
  %v1630 = vrot.slane %v1629, 2
  %v1631 = vadd.f32 %v1629, %v1630
  %v1632 = vrot.slane %v1631, 1
  %v1633 = vadd.f32 %v1631, %v1632
  %v1634 = vmul.f32 %v552, %v764
  %v1635 = vmul.f32 %v557, %v769
  %v1636 = vsel %vm885, %v1634, 0.0
  %v1637 = vsel %vm885, %v1635, 0.0
  %v1638 = vadd.f32 %v1636, %v1637
  %v1639 = vrot.slane %v1638, 4
  %v1640 = vadd.f32 %v1638, %v1639
  %v1641 = vrot.slane %v1640, 2
  %v1642 = vadd.f32 %v1640, %v1641
  %v1643 = vrot.slane %v1642, 1
  %v1644 = vadd.f32 %v1642, %v1643
  %v1645 = vmul.f32 %v552, %v865
  %v1646 = vmul.f32 %v557, %v870
  %v1647 = vsel %vm885, %v1645, 0.0
  %v1648 = vsel %vm885, %v1646, 0.0
  %v1649 = vadd.f32 %v1647, %v1648
  %v1650 = vrot.slane %v1649, 4
  %v1651 = vadd.f32 %v1649, %v1650
  %v1652 = vrot.slane %v1651, 2
  %v1653 = vadd.f32 %v1651, %v1652
  %v1654 = vrot.slane %v1653, 1
  %v1655 = vadd.f32 %v1653, %v1654
  %v1656 = vmax.f32 %v1578, %v1589
  %v1657 = vmax.f32 %v1656, %v1600
  %v1658 = vmax.f32 %v1657, %v1611
  %v1659 = vmax.f32 %v1658, %v1622
  %v1660 = vmax.f32 %v1659, %v1633
  %v1661 = vmax.f32 %v1660, %v1644
  %v1662 = vmax.f32 %v1661, %v1655
  %v1663 = vsub.f32 %v1578, %v1662
  %v1664 = vmul.f32 %v1663, 1.442695
  %v1665 = vpow.pop %v1664
  %v1666 = vsub.f32 %v1589, %v1662
  %v1667 = vmul.f32 %v1666, 1.442695
  %v1668 = vpow.pop %v1667
  %v1669 = vsub.f32 %v1600, %v1662
  %v1670 = vmul.f32 %v1669, 1.442695
  %v1671 = vpow.pop %v1670
  %v1672 = vsub.f32 %v1611, %v1662
  %v1673 = vmul.f32 %v1672, 1.442695
  %v1674 = vpow.pop %v1673
  %v1675 = vsub.f32 %v1622, %v1662
  %v1676 = vmul.f32 %v1675, 1.442695
  %v1677 = vpow.pop %v1676
  %v1678 = vsub.f32 %v1633, %v1662
  %v1679 = vmul.f32 %v1678, 1.442695
  %v1680 = vpow.pop %v1679
  %v1681 = vsub.f32 %v1644, %v1662
  %v1682 = vmul.f32 %v1681, 1.442695
  %v1683 = vpow.pop %v1682
  %v1684 = vsub.f32 %v1655, %v1662
  %v1685 = vmul.f32 %v1684, 1.442695
  %v1686 = vpow.pop %v1685
  %v1687 = vadd.f32 %v1665, %v1668
  %v1688 = vadd.f32 %v1687, %v1671
  %v1689 = vadd.f32 %v1688, %v1674
  %v1690 = vadd.f32 %v1689, %v1677
  %v1691 = vadd.f32 %v1690, %v1680
  %v1692 = vadd.f32 %v1691, %v1683
  %v1693 = vadd.f32 %v1692, %v1686
  %v1694 = vrcp.pop %v1693
  %v1695 = vmul.f32 %v1693, %v1694
  %v1696 = vsub.f32 2.0, %v1695
  %v1697 = vmul.f32 %v1694, %v1696
  %v1698 = vmul.f32 %v1665, %v1697
  %v1699 = vmul.f32 %v1698, %v168
  %v1700 = vmul.f32 %v1698, %v173
  %v1701 = vmul.f32 %v1668, %v1697
  %v1702 = vmul.f32 %v1701, %v269
  %v1703 = vmul.f32 %v1701, %v274
  %v1704 = vadd.f32 %v1699, %v1702
  %v1705 = vadd.f32 %v1700, %v1703
  %v1706 = vmul.f32 %v1671, %v1697
  %v1707 = vmul.f32 %v1706, %v370
  %v1708 = vmul.f32 %v1706, %v375
  %v1709 = vadd.f32 %v1704, %v1707
  %v1710 = vadd.f32 %v1705, %v1708
  %v1711 = vmul.f32 %v1674, %v1697
  %v1712 = vmul.f32 %v1711, %v471
  %v1713 = vmul.f32 %v1711, %v476
  %v1714 = vadd.f32 %v1709, %v1712
  %v1715 = vadd.f32 %v1710, %v1713
  %v1716 = vmul.f32 %v1677, %v1697
  %v1717 = vmul.f32 %v1716, %v572
  %v1718 = vmul.f32 %v1716, %v577
  %v1719 = vadd.f32 %v1714, %v1717
  %v1720 = vadd.f32 %v1715, %v1718
  %v1721 = vmul.f32 %v1680, %v1697
  %v1722 = vmul.f32 %v1721, %v673
  %v1723 = vmul.f32 %v1721, %v678
  %v1724 = vadd.f32 %v1719, %v1722
  %v1725 = vadd.f32 %v1720, %v1723
  %v1726 = vmul.f32 %v1683, %v1697
  %v1727 = vmul.f32 %v1726, %v774
  %v1728 = vmul.f32 %v1726, %v779
  %v1729 = vadd.f32 %v1724, %v1727
  %v1730 = vadd.f32 %v1725, %v1728
  %v1731 = vmul.f32 %v1686, %v1697
  %v1732 = vmul.f32 %v1731, %v875
  %v1733 = vmul.f32 %v1731, %v880
  %v1734 = vadd.f32 %v1729, %v1732
  %v1735 = vadd.f32 %v1730, %v1733
  %s1736 = scalar_lea.vmem %s3, 64
  %1737 = vst.msk [vmem:[%s1736] sm:$0xff] %vm885, %v1734
  %1738 = vst.msk [vmem:[%s1736 + $0x8] sm:$0x1] %vm1053, %v1735
  %v1739 = vmul.f32 %v653, %v158
  %v1740 = vmul.f32 %v658, %v163
  %v1741 = vsel %vm885, %v1739, 0.0
  %v1742 = vsel %vm885, %v1740, 0.0
  %v1743 = vadd.f32 %v1741, %v1742
  %v1744 = vrot.slane %v1743, 4
  %v1745 = vadd.f32 %v1743, %v1744
  %v1746 = vrot.slane %v1745, 2
  %v1747 = vadd.f32 %v1745, %v1746
  %v1748 = vrot.slane %v1747, 1
  %v1749 = vadd.f32 %v1747, %v1748
  %v1750 = vmul.f32 %v653, %v259
  %v1751 = vmul.f32 %v658, %v264
  %v1752 = vsel %vm885, %v1750, 0.0
  %v1753 = vsel %vm885, %v1751, 0.0
  %v1754 = vadd.f32 %v1752, %v1753
  %v1755 = vrot.slane %v1754, 4
  %v1756 = vadd.f32 %v1754, %v1755
  %v1757 = vrot.slane %v1756, 2
  %v1758 = vadd.f32 %v1756, %v1757
  %v1759 = vrot.slane %v1758, 1
  %v1760 = vadd.f32 %v1758, %v1759
  %v1761 = vmul.f32 %v653, %v360
  %v1762 = vmul.f32 %v658, %v365
  %v1763 = vsel %vm885, %v1761, 0.0
  %v1764 = vsel %vm885, %v1762, 0.0
  %v1765 = vadd.f32 %v1763, %v1764
  %v1766 = vrot.slane %v1765, 4
  %v1767 = vadd.f32 %v1765, %v1766
  %v1768 = vrot.slane %v1767, 2
  %v1769 = vadd.f32 %v1767, %v1768
  %v1770 = vrot.slane %v1769, 1
  %v1771 = vadd.f32 %v1769, %v1770
  %v1772 = vmul.f32 %v653, %v461
  %v1773 = vmul.f32 %v658, %v466
  %v1774 = vsel %vm885, %v1772, 0.0
  %v1775 = vsel %vm885, %v1773, 0.0
  %v1776 = vadd.f32 %v1774, %v1775
  %v1777 = vrot.slane %v1776, 4
  %v1778 = vadd.f32 %v1776, %v1777
  %v1779 = vrot.slane %v1778, 2
  %v1780 = vadd.f32 %v1778, %v1779
  %v1781 = vrot.slane %v1780, 1
  %v1782 = vadd.f32 %v1780, %v1781
  %v1783 = vmul.f32 %v653, %v562
  %v1784 = vmul.f32 %v658, %v567
  %v1785 = vsel %vm885, %v1783, 0.0
  %v1786 = vsel %vm885, %v1784, 0.0
  %v1787 = vadd.f32 %v1785, %v1786
  %v1788 = vrot.slane %v1787, 4
  %v1789 = vadd.f32 %v1787, %v1788
  %v1790 = vrot.slane %v1789, 2
  %v1791 = vadd.f32 %v1789, %v1790
  %v1792 = vrot.slane %v1791, 1
  %v1793 = vadd.f32 %v1791, %v1792
  %v1794 = vmul.f32 %v653, %v663
  %v1795 = vmul.f32 %v658, %v668
  %v1796 = vsel %vm885, %v1794, 0.0
  %v1797 = vsel %vm885, %v1795, 0.0
  %v1798 = vadd.f32 %v1796, %v1797
  %v1799 = vrot.slane %v1798, 4
  %v1800 = vadd.f32 %v1798, %v1799
  %v1801 = vrot.slane %v1800, 2
  %v1802 = vadd.f32 %v1800, %v1801
  %v1803 = vrot.slane %v1802, 1
  %v1804 = vadd.f32 %v1802, %v1803
  %v1805 = vmul.f32 %v653, %v764
  %v1806 = vmul.f32 %v658, %v769
  %v1807 = vsel %vm885, %v1805, 0.0
  %v1808 = vsel %vm885, %v1806, 0.0
  %v1809 = vadd.f32 %v1807, %v1808
  %v1810 = vrot.slane %v1809, 4
  %v1811 = vadd.f32 %v1809, %v1810
  %v1812 = vrot.slane %v1811, 2
  %v1813 = vadd.f32 %v1811, %v1812
  %v1814 = vrot.slane %v1813, 1
  %v1815 = vadd.f32 %v1813, %v1814
  %v1816 = vmul.f32 %v653, %v865
  %v1817 = vmul.f32 %v658, %v870
  %v1818 = vsel %vm885, %v1816, 0.0
  %v1819 = vsel %vm885, %v1817, 0.0
  %v1820 = vadd.f32 %v1818, %v1819
  %v1821 = vrot.slane %v1820, 4
  %v1822 = vadd.f32 %v1820, %v1821
  %v1823 = vrot.slane %v1822, 2
  %v1824 = vadd.f32 %v1822, %v1823
  %v1825 = vrot.slane %v1824, 1
  %v1826 = vadd.f32 %v1824, %v1825
  %v1827 = vmax.f32 %v1749, %v1760
  %v1828 = vmax.f32 %v1827, %v1771
  %v1829 = vmax.f32 %v1828, %v1782
  %v1830 = vmax.f32 %v1829, %v1793
  %v1831 = vmax.f32 %v1830, %v1804
  %v1832 = vmax.f32 %v1831, %v1815
  %v1833 = vmax.f32 %v1832, %v1826
  %v1834 = vsub.f32 %v1749, %v1833
  %v1835 = vmul.f32 %v1834, 1.442695
  %v1836 = vpow.pop %v1835
  %v1837 = vsub.f32 %v1760, %v1833
  %v1838 = vmul.f32 %v1837, 1.442695
  %v1839 = vpow.pop %v1838
  %v1840 = vsub.f32 %v1771, %v1833
  %v1841 = vmul.f32 %v1840, 1.442695
  %v1842 = vpow.pop %v1841
  %v1843 = vsub.f32 %v1782, %v1833
  %v1844 = vmul.f32 %v1843, 1.442695
  %v1845 = vpow.pop %v1844
  %v1846 = vsub.f32 %v1793, %v1833
  %v1847 = vmul.f32 %v1846, 1.442695
  %v1848 = vpow.pop %v1847
  %v1849 = vsub.f32 %v1804, %v1833
  %v1850 = vmul.f32 %v1849, 1.442695
  %v1851 = vpow.pop %v1850
  %v1852 = vsub.f32 %v1815, %v1833
  %v1853 = vmul.f32 %v1852, 1.442695
  %v1854 = vpow.pop %v1853
  %v1855 = vsub.f32 %v1826, %v1833
  %v1856 = vmul.f32 %v1855, 1.442695
  %v1857 = vpow.pop %v1856
  %v1858 = vadd.f32 %v1836, %v1839
  %v1859 = vadd.f32 %v1858, %v1842
  %v1860 = vadd.f32 %v1859, %v1845
  %v1861 = vadd.f32 %v1860, %v1848
  %v1862 = vadd.f32 %v1861, %v1851
  %v1863 = vadd.f32 %v1862, %v1854
  %v1864 = vadd.f32 %v1863, %v1857
  %v1865 = vrcp.pop %v1864
  %v1866 = vmul.f32 %v1864, %v1865
  %v1867 = vsub.f32 2.0, %v1866
  %v1868 = vmul.f32 %v1865, %v1867
  %v1869 = vmul.f32 %v1836, %v1868
  %v1870 = vmul.f32 %v1869, %v168
  %v1871 = vmul.f32 %v1869, %v173
  %v1872 = vmul.f32 %v1839, %v1868
  %v1873 = vmul.f32 %v1872, %v269
  %v1874 = vmul.f32 %v1872, %v274
  %v1875 = vadd.f32 %v1870, %v1873
  %v1876 = vadd.f32 %v1871, %v1874
  %v1877 = vmul.f32 %v1842, %v1868
  %v1878 = vmul.f32 %v1877, %v370
  %v1879 = vmul.f32 %v1877, %v375
  %v1880 = vadd.f32 %v1875, %v1878
  %v1881 = vadd.f32 %v1876, %v1879
  %v1882 = vmul.f32 %v1845, %v1868
  %v1883 = vmul.f32 %v1882, %v471
  %v1884 = vmul.f32 %v1882, %v476
  %v1885 = vadd.f32 %v1880, %v1883
  %v1886 = vadd.f32 %v1881, %v1884
  %v1887 = vmul.f32 %v1848, %v1868
  %v1888 = vmul.f32 %v1887, %v572
  %v1889 = vmul.f32 %v1887, %v577
  %v1890 = vadd.f32 %v1885, %v1888
  %v1891 = vadd.f32 %v1886, %v1889
  %v1892 = vmul.f32 %v1851, %v1868
  %v1893 = vmul.f32 %v1892, %v673
  %v1894 = vmul.f32 %v1892, %v678
  %v1895 = vadd.f32 %v1890, %v1893
  %v1896 = vadd.f32 %v1891, %v1894
  %v1897 = vmul.f32 %v1854, %v1868
  %v1898 = vmul.f32 %v1897, %v774
  %v1899 = vmul.f32 %v1897, %v779
  %v1900 = vadd.f32 %v1895, %v1898
  %v1901 = vadd.f32 %v1896, %v1899
  %v1902 = vmul.f32 %v1857, %v1868
  %v1903 = vmul.f32 %v1902, %v875
  %v1904 = vmul.f32 %v1902, %v880
  %v1905 = vadd.f32 %v1900, %v1903
  %v1906 = vadd.f32 %v1901, %v1904
  %s1907 = scalar_lea.vmem %s3, 80
  %1908 = vst.msk [vmem:[%s1907] sm:$0xff] %vm885, %v1905
  %1909 = vst.msk [vmem:[%s1907 + $0x8] sm:$0x1] %vm1053, %v1906
  %v1910 = vmul.f32 %v754, %v158
  %v1911 = vmul.f32 %v759, %v163
  %v1912 = vsel %vm885, %v1910, 0.0
  %v1913 = vsel %vm885, %v1911, 0.0
  %v1914 = vadd.f32 %v1912, %v1913
  %v1915 = vrot.slane %v1914, 4
  %v1916 = vadd.f32 %v1914, %v1915
  %v1917 = vrot.slane %v1916, 2
  %v1918 = vadd.f32 %v1916, %v1917
  %v1919 = vrot.slane %v1918, 1
  %v1920 = vadd.f32 %v1918, %v1919
  %v1921 = vmul.f32 %v754, %v259
  %v1922 = vmul.f32 %v759, %v264
  %v1923 = vsel %vm885, %v1921, 0.0
  %v1924 = vsel %vm885, %v1922, 0.0
  %v1925 = vadd.f32 %v1923, %v1924
  %v1926 = vrot.slane %v1925, 4
  %v1927 = vadd.f32 %v1925, %v1926
  %v1928 = vrot.slane %v1927, 2
  %v1929 = vadd.f32 %v1927, %v1928
  %v1930 = vrot.slane %v1929, 1
  %v1931 = vadd.f32 %v1929, %v1930
  %v1932 = vmul.f32 %v754, %v360
  %v1933 = vmul.f32 %v759, %v365
  %v1934 = vsel %vm885, %v1932, 0.0
  %v1935 = vsel %vm885, %v1933, 0.0
  %v1936 = vadd.f32 %v1934, %v1935
  %v1937 = vrot.slane %v1936, 4
  %v1938 = vadd.f32 %v1936, %v1937
  %v1939 = vrot.slane %v1938, 2
  %v1940 = vadd.f32 %v1938, %v1939
  %v1941 = vrot.slane %v1940, 1
  %v1942 = vadd.f32 %v1940, %v1941
  %v1943 = vmul.f32 %v754, %v461
  %v1944 = vmul.f32 %v759, %v466
  %v1945 = vsel %vm885, %v1943, 0.0
  %v1946 = vsel %vm885, %v1944, 0.0
  %v1947 = vadd.f32 %v1945, %v1946
  %v1948 = vrot.slane %v1947, 4
  %v1949 = vadd.f32 %v1947, %v1948
  %v1950 = vrot.slane %v1949, 2
  %v1951 = vadd.f32 %v1949, %v1950
  %v1952 = vrot.slane %v1951, 1
  %v1953 = vadd.f32 %v1951, %v1952
  %v1954 = vmul.f32 %v754, %v562
  %v1955 = vmul.f32 %v759, %v567
  %v1956 = vsel %vm885, %v1954, 0.0
  %v1957 = vsel %vm885, %v1955, 0.0
  %v1958 = vadd.f32 %v1956, %v1957
  %v1959 = vrot.slane %v1958, 4
  %v1960 = vadd.f32 %v1958, %v1959
  %v1961 = vrot.slane %v1960, 2
  %v1962 = vadd.f32 %v1960, %v1961
  %v1963 = vrot.slane %v1962, 1
  %v1964 = vadd.f32 %v1962, %v1963
  %v1965 = vmul.f32 %v754, %v663
  %v1966 = vmul.f32 %v759, %v668
  %v1967 = vsel %vm885, %v1965, 0.0
  %v1968 = vsel %vm885, %v1966, 0.0
  %v1969 = vadd.f32 %v1967, %v1968
  %v1970 = vrot.slane %v1969, 4
  %v1971 = vadd.f32 %v1969, %v1970
  %v1972 = vrot.slane %v1971, 2
  %v1973 = vadd.f32 %v1971, %v1972
  %v1974 = vrot.slane %v1973, 1
  %v1975 = vadd.f32 %v1973, %v1974
  %v1976 = vmul.f32 %v754, %v764
  %v1977 = vmul.f32 %v759, %v769
  %v1978 = vsel %vm885, %v1976, 0.0
  %v1979 = vsel %vm885, %v1977, 0.0
  %v1980 = vadd.f32 %v1978, %v1979
  %v1981 = vrot.slane %v1980, 4
  %v1982 = vadd.f32 %v1980, %v1981
  %v1983 = vrot.slane %v1982, 2
  %v1984 = vadd.f32 %v1982, %v1983
  %v1985 = vrot.slane %v1984, 1
  %v1986 = vadd.f32 %v1984, %v1985
  %v1987 = vmul.f32 %v754, %v865
  %v1988 = vmul.f32 %v759, %v870
  %v1989 = vsel %vm885, %v1987, 0.0
  %v1990 = vsel %vm885, %v1988, 0.0
  %v1991 = vadd.f32 %v1989, %v1990
  %v1992 = vrot.slane %v1991, 4
  %v1993 = vadd.f32 %v1991, %v1992
  %v1994 = vrot.slane %v1993, 2
  %v1995 = vadd.f32 %v1993, %v1994
  %v1996 = vrot.slane %v1995, 1
  %v1997 = vadd.f32 %v1995, %v1996
  %v1998 = vmax.f32 %v1920, %v1931
  %v1999 = vmax.f32 %v1998, %v1942
  %v2000 = vmax.f32 %v1999, %v1953
  %v2001 = vmax.f32 %v2000, %v1964
  %v2002 = vmax.f32 %v2001, %v1975
  %v2003 = vmax.f32 %v2002, %v1986
  %v2004 = vmax.f32 %v2003, %v1997
  %v2005 = vsub.f32 %v1920, %v2004
  %v2006 = vmul.f32 %v2005, 1.442695
  %v2007 = vpow.pop %v2006
  %v2008 = vsub.f32 %v1931, %v2004
  %v2009 = vmul.f32 %v2008, 1.442695
  %v2010 = vpow.pop %v2009
  %v2011 = vsub.f32 %v1942, %v2004
  %v2012 = vmul.f32 %v2011, 1.442695
  %v2013 = vpow.pop %v2012
  %v2014 = vsub.f32 %v1953, %v2004
  %v2015 = vmul.f32 %v2014, 1.442695
  %v2016 = vpow.pop %v2015
  %v2017 = vsub.f32 %v1964, %v2004
  %v2018 = vmul.f32 %v2017, 1.442695
  %v2019 = vpow.pop %v2018
  %v2020 = vsub.f32 %v1975, %v2004
  %v2021 = vmul.f32 %v2020, 1.442695
  %v2022 = vpow.pop %v2021
  %v2023 = vsub.f32 %v1986, %v2004
  %v2024 = vmul.f32 %v2023, 1.442695
  %v2025 = vpow.pop %v2024
  %v2026 = vsub.f32 %v1997, %v2004
  %v2027 = vmul.f32 %v2026, 1.442695
  %v2028 = vpow.pop %v2027
  %v2029 = vadd.f32 %v2007, %v2010
  %v2030 = vadd.f32 %v2029, %v2013
  %v2031 = vadd.f32 %v2030, %v2016
  %v2032 = vadd.f32 %v2031, %v2019
  %v2033 = vadd.f32 %v2032, %v2022
  %v2034 = vadd.f32 %v2033, %v2025
  %v2035 = vadd.f32 %v2034, %v2028
  %v2036 = vrcp.pop %v2035
  %v2037 = vmul.f32 %v2035, %v2036
  %v2038 = vsub.f32 2.0, %v2037
  %v2039 = vmul.f32 %v2036, %v2038
  %v2040 = vmul.f32 %v2007, %v2039
  %v2041 = vmul.f32 %v2040, %v168
  %v2042 = vmul.f32 %v2040, %v173
  %v2043 = vmul.f32 %v2010, %v2039
  %v2044 = vmul.f32 %v2043, %v269
  %v2045 = vmul.f32 %v2043, %v274
  %v2046 = vadd.f32 %v2041, %v2044
  %v2047 = vadd.f32 %v2042, %v2045
  %v2048 = vmul.f32 %v2013, %v2039
  %v2049 = vmul.f32 %v2048, %v370
  %v2050 = vmul.f32 %v2048, %v375
  %v2051 = vadd.f32 %v2046, %v2049
  %v2052 = vadd.f32 %v2047, %v2050
  %v2053 = vmul.f32 %v2016, %v2039
  %v2054 = vmul.f32 %v2053, %v471
  %v2055 = vmul.f32 %v2053, %v476
  %v2056 = vadd.f32 %v2051, %v2054
  %v2057 = vadd.f32 %v2052, %v2055
  %v2058 = vmul.f32 %v2019, %v2039
  %v2059 = vmul.f32 %v2058, %v572
  %v2060 = vmul.f32 %v2058, %v577
  %v2061 = vadd.f32 %v2056, %v2059
  %v2062 = vadd.f32 %v2057, %v2060
  %v2063 = vmul.f32 %v2022, %v2039
  %v2064 = vmul.f32 %v2063, %v673
  %v2065 = vmul.f32 %v2063, %v678
  %v2066 = vadd.f32 %v2061, %v2064
  %v2067 = vadd.f32 %v2062, %v2065
  %v2068 = vmul.f32 %v2025, %v2039
  %v2069 = vmul.f32 %v2068, %v774
  %v2070 = vmul.f32 %v2068, %v779
  %v2071 = vadd.f32 %v2066, %v2069
  %v2072 = vadd.f32 %v2067, %v2070
  %v2073 = vmul.f32 %v2028, %v2039
  %v2074 = vmul.f32 %v2073, %v875
  %v2075 = vmul.f32 %v2073, %v880
  %v2076 = vadd.f32 %v2071, %v2074
  %v2077 = vadd.f32 %v2072, %v2075
  %s2078 = scalar_lea.vmem %s3, 96
  %2079 = vst.msk [vmem:[%s2078] sm:$0xff] %vm885, %v2076
  %2080 = vst.msk [vmem:[%s2078 + $0x8] sm:$0x1] %vm1053, %v2077
  %v2081 = vmul.f32 %v855, %v158
  %v2082 = vmul.f32 %v860, %v163
  %v2083 = vsel %vm885, %v2081, 0.0
  %v2084 = vsel %vm885, %v2082, 0.0
  %v2085 = vadd.f32 %v2083, %v2084
  %v2086 = vrot.slane %v2085, 4
  %v2087 = vadd.f32 %v2085, %v2086
  %v2088 = vrot.slane %v2087, 2
  %v2089 = vadd.f32 %v2087, %v2088
  %v2090 = vrot.slane %v2089, 1
  %v2091 = vadd.f32 %v2089, %v2090
  %v2092 = vmul.f32 %v855, %v259
  %v2093 = vmul.f32 %v860, %v264
  %v2094 = vsel %vm885, %v2092, 0.0
  %v2095 = vsel %vm885, %v2093, 0.0
  %v2096 = vadd.f32 %v2094, %v2095
  %v2097 = vrot.slane %v2096, 4
  %v2098 = vadd.f32 %v2096, %v2097
  %v2099 = vrot.slane %v2098, 2
  %v2100 = vadd.f32 %v2098, %v2099
  %v2101 = vrot.slane %v2100, 1
  %v2102 = vadd.f32 %v2100, %v2101
  %v2103 = vmul.f32 %v855, %v360
  %v2104 = vmul.f32 %v860, %v365
  %v2105 = vsel %vm885, %v2103, 0.0
  %v2106 = vsel %vm885, %v2104, 0.0
  %v2107 = vadd.f32 %v2105, %v2106
  %v2108 = vrot.slane %v2107, 4
  %v2109 = vadd.f32 %v2107, %v2108
  %v2110 = vrot.slane %v2109, 2
  %v2111 = vadd.f32 %v2109, %v2110
  %v2112 = vrot.slane %v2111, 1
  %v2113 = vadd.f32 %v2111, %v2112
  %v2114 = vmul.f32 %v855, %v461
  %v2115 = vmul.f32 %v860, %v466
  %v2116 = vsel %vm885, %v2114, 0.0
  %v2117 = vsel %vm885, %v2115, 0.0
  %v2118 = vadd.f32 %v2116, %v2117
  %v2119 = vrot.slane %v2118, 4
  %v2120 = vadd.f32 %v2118, %v2119
  %v2121 = vrot.slane %v2120, 2
  %v2122 = vadd.f32 %v2120, %v2121
  %v2123 = vrot.slane %v2122, 1
  %v2124 = vadd.f32 %v2122, %v2123
  %v2125 = vmul.f32 %v855, %v562
  %v2126 = vmul.f32 %v860, %v567
  %v2127 = vsel %vm885, %v2125, 0.0
  %v2128 = vsel %vm885, %v2126, 0.0
  %v2129 = vadd.f32 %v2127, %v2128
  %v2130 = vrot.slane %v2129, 4
  %v2131 = vadd.f32 %v2129, %v2130
  %v2132 = vrot.slane %v2131, 2
  %v2133 = vadd.f32 %v2131, %v2132
  %v2134 = vrot.slane %v2133, 1
  %v2135 = vadd.f32 %v2133, %v2134
  %v2136 = vmul.f32 %v855, %v663
  %v2137 = vmul.f32 %v860, %v668
  %v2138 = vsel %vm885, %v2136, 0.0
  %v2139 = vsel %vm885, %v2137, 0.0
  %v2140 = vadd.f32 %v2138, %v2139
  %v2141 = vrot.slane %v2140, 4
  %v2142 = vadd.f32 %v2140, %v2141
  %v2143 = vrot.slane %v2142, 2
  %v2144 = vadd.f32 %v2142, %v2143
  %v2145 = vrot.slane %v2144, 1
  %v2146 = vadd.f32 %v2144, %v2145
  %v2147 = vmul.f32 %v855, %v764
  %v2148 = vmul.f32 %v860, %v769
  %v2149 = vsel %vm885, %v2147, 0.0
  %v2150 = vsel %vm885, %v2148, 0.0
  %v2151 = vadd.f32 %v2149, %v2150
  %v2152 = vrot.slane %v2151, 4
  %v2153 = vadd.f32 %v2151, %v2152
  %v2154 = vrot.slane %v2153, 2
  %v2155 = vadd.f32 %v2153, %v2154
  %v2156 = vrot.slane %v2155, 1
  %v2157 = vadd.f32 %v2155, %v2156
  %v2158 = vmul.f32 %v855, %v865
  %v2159 = vmul.f32 %v860, %v870
  %v2160 = vsel %vm885, %v2158, 0.0
  %v2161 = vsel %vm885, %v2159, 0.0
  %v2162 = vadd.f32 %v2160, %v2161
  %v2163 = vrot.slane %v2162, 4
  %v2164 = vadd.f32 %v2162, %v2163
  %v2165 = vrot.slane %v2164, 2
  %v2166 = vadd.f32 %v2164, %v2165
  %v2167 = vrot.slane %v2166, 1
  %v2168 = vadd.f32 %v2166, %v2167
  %v2169 = vmax.f32 %v2091, %v2102
  %v2170 = vmax.f32 %v2169, %v2113
  %v2171 = vmax.f32 %v2170, %v2124
  %v2172 = vmax.f32 %v2171, %v2135
  %v2173 = vmax.f32 %v2172, %v2146
  %v2174 = vmax.f32 %v2173, %v2157
  %v2175 = vmax.f32 %v2174, %v2168
  %v2176 = vsub.f32 %v2091, %v2175
  %v2177 = vmul.f32 %v2176, 1.442695
  %v2178 = vpow.pop %v2177
  %v2179 = vsub.f32 %v2102, %v2175
  %v2180 = vmul.f32 %v2179, 1.442695
  %v2181 = vpow.pop %v2180
  %v2182 = vsub.f32 %v2113, %v2175
  %v2183 = vmul.f32 %v2182, 1.442695
  %v2184 = vpow.pop %v2183
  %v2185 = vsub.f32 %v2124, %v2175
  %v2186 = vmul.f32 %v2185, 1.442695
  %v2187 = vpow.pop %v2186
  %v2188 = vsub.f32 %v2135, %v2175
  %v2189 = vmul.f32 %v2188, 1.442695
  %v2190 = vpow.pop %v2189
  %v2191 = vsub.f32 %v2146, %v2175
  %v2192 = vmul.f32 %v2191, 1.442695
  %v2193 = vpow.pop %v2192
  %v2194 = vsub.f32 %v2157, %v2175
  %v2195 = vmul.f32 %v2194, 1.442695
  %v2196 = vpow.pop %v2195
  %v2197 = vsub.f32 %v2168, %v2175
  %v2198 = vmul.f32 %v2197, 1.442695
  %v2199 = vpow.pop %v2198
  %v2200 = vadd.f32 %v2178, %v2181
  %v2201 = vadd.f32 %v2200, %v2184
  %v2202 = vadd.f32 %v2201, %v2187
  %v2203 = vadd.f32 %v2202, %v2190
  %v2204 = vadd.f32 %v2203, %v2193
  %v2205 = vadd.f32 %v2204, %v2196
  %v2206 = vadd.f32 %v2205, %v2199
  %v2207 = vrcp.pop %v2206
  %v2208 = vmul.f32 %v2206, %v2207
  %v2209 = vsub.f32 2.0, %v2208
  %v2210 = vmul.f32 %v2207, %v2209
  %v2211 = vmul.f32 %v2178, %v2210
  %v2212 = vmul.f32 %v2211, %v168
  %v2213 = vmul.f32 %v2211, %v173
  %v2214 = vmul.f32 %v2181, %v2210
  %v2215 = vmul.f32 %v2214, %v269
  %v2216 = vmul.f32 %v2214, %v274
  %v2217 = vadd.f32 %v2212, %v2215
  %v2218 = vadd.f32 %v2213, %v2216
  %v2219 = vmul.f32 %v2184, %v2210
  %v2220 = vmul.f32 %v2219, %v370
  %v2221 = vmul.f32 %v2219, %v375
  %v2222 = vadd.f32 %v2217, %v2220
  %v2223 = vadd.f32 %v2218, %v2221
  %v2224 = vmul.f32 %v2187, %v2210
  %v2225 = vmul.f32 %v2224, %v471
  %v2226 = vmul.f32 %v2224, %v476
  %v2227 = vadd.f32 %v2222, %v2225
  %v2228 = vadd.f32 %v2223, %v2226
  %v2229 = vmul.f32 %v2190, %v2210
  %v2230 = vmul.f32 %v2229, %v572
  %v2231 = vmul.f32 %v2229, %v577
  %v2232 = vadd.f32 %v2227, %v2230
  %v2233 = vadd.f32 %v2228, %v2231
  %v2234 = vmul.f32 %v2193, %v2210
  %v2235 = vmul.f32 %v2234, %v673
  %v2236 = vmul.f32 %v2234, %v678
  %v2237 = vadd.f32 %v2232, %v2235
  %v2238 = vadd.f32 %v2233, %v2236
  %v2239 = vmul.f32 %v2196, %v2210
  %v2240 = vmul.f32 %v2239, %v774
  %v2241 = vmul.f32 %v2239, %v779
  %v2242 = vadd.f32 %v2237, %v2240
  %v2243 = vadd.f32 %v2238, %v2241
  %v2244 = vmul.f32 %v2199, %v2210
  %v2245 = vmul.f32 %v2244, %v875
  %v2246 = vmul.f32 %v2244, %v880
  %v2247 = vadd.f32 %v2242, %v2245
  %v2248 = vadd.f32 %v2243, %v2246
  %s2249 = scalar_lea.vmem %s3, 112
  %2250 = vst.msk [vmem:[%s2249] sm:$0xff] %vm885, %v2247
  %2251 = vst.msk [vmem:[%s2249 + $0x8] sm:$0x1] %vm1053, %v2248
  // Predicated region
  $region14: #{magic_forward.1} parent=0 // pred_check
    _
  $region15: #{magic_forward.1} parent=0 // pred_check_branch
    %2253 = sbr.rel (0) target = $region17
  $region16: #{magic_forward.1} parent=0 // pred_region
    _
  $region17: #{magic_forward.1} parent=0 // pred_fallthru
    _
  // Predicated region
  $region18: #{magic_forward.1} parent=0 // pred_check
    _
  $region19: #{magic_forward.1} parent=0 // pred_check_branch
    %2255 = sbr.rel (0) target = $region21
  $region20: #{magic_forward.1} parent=0 // pred_region
    _
  $region21: #{magic_forward.1} parent=0 // pred_fallthru
    _

</llo_original>
